<compile_context>
chip_gen: v6e
topology: v6e:2x2x1
jax: 0.10.0
libtpu: 0.0.40
codegen_flags: <defaults>
</compile_context>

<pallas_src>
import functools
import numpy as np
import jax
import jax.numpy as jnp
from jax.experimental import pallas as pl
from jax.experimental.pallas import tpu as pltpu

EPS = 1e-5          # BatchNorm eps (PyTorch default)
CHANNELS = (1, 8, 16, 32)


def _round_up(x, m):
    return ((x + m - 1) // m) * m


# --------------------------------------------------------------------------
# The fused Pallas kernel
# --------------------------------------------------------------------------
def trunk_kernel(cfg, x_ref, inbn_ref, betas_ref,
                 selin_ref, sel1_ref, sel2_ref, sel3_ref,
                 wb1_ref, sc1_ref, sh1_ref,
                 wb2_ref, sc2_ref, sh2_ref,
                 wb3_ref, sc3_ref, sh3_ref,
                 w1p_ref, b1_ref, w2_ref, b2_ref,
                 o_ref,
                 pad1_ref, pad2_ref, pad3_ref):
    """Whole TrunkNet forward (both branches + MLP head), single invocation.

      x_ref:     (2, B*H0, W0)  stacked [x_r; x_z], rows grouped per sample
      inbn_ref:  SMEM (2, 2)    per-branch input-BN (scale, shift)
      betas_ref: SMEM (7,)      swish betas: r-blocks 0..2, z-blocks 0..2, head
      selin_ref: (B*(H0+2), B*H0)  0/1 placement of BN'd input into pad1
      selK_ref:  stacked 0/1 [even-row pick ; odd-row pick] pool+place matrices
      wbK_ref:   (2, 3, (Wk+2)*Cin, Wk*Cout)  per-ky banded conv weights;
                 activation columns ordered [interior pixels | pad pixels],
                 output columns ordered [even output pixels | odd output pixels]
      scK/shK:   (2, 1, Wk*Cout) folded BN scale / (BN shift + conv bias)
      w1p_ref:   (2, H3, W3*C3, 128) head Linear-1 weights grouped per (g, h)
      padK_ref:  VMEM scratch, zero-padded activations as 2-D slabs
                 (B*(Hk+2), (Wk+2)*Cin), lanes ordered (w, c), interior first
    """
    B, H0, W0 = cfg["B"], cfg["H"], cfg["W"]
    G = x_ref.shape[0]
    H3 = H0 // 8
    d1 = w1p_ref.shape[-1]

    # Pad rows / pad columns stay zero for the whole kernel ('same' zero
    # padding); interiors are fully rewritten before every use.  Buffers are
    # tiny, so a one-time full memset is cheaper than border-only stores.
    pad1_ref[...] = jnp.zeros_like(pad1_ref)
    pad2_ref[...] = jnp.zeros_like(pad2_ref)
    pad3_ref[...] = jnp.zeros_like(pad3_ref)

    blocks = ((pad1_ref, wb1_ref, sc1_ref, sh1_ref, sel1_ref, pad2_ref),
              (pad2_ref, wb2_ref, sc2_ref, sh2_ref, sel2_ref, pad3_ref),
              (pad3_ref, wb3_ref, sc3_ref, sh3_ref, sel3_ref, None))

    h1 = jnp.zeros((B, d1), jnp.float32)    # head Linear-1 pre-activation acc

    for g in range(G):
        # ---- input BatchNorm2d (eval) + zero-pad placement: one matmul ----
        s0 = inbn_ref[g, 0]
        t0 = inbn_ref[g, 1]
        xg = x_ref[g] * s0 + t0                                   # (B*H0, W0)
        pad1_ref[:, 0:W0] = jnp.dot(selin_ref[...], xg,
                                    preferred_element_type=jnp.float32)

        for k, (pin, wb, sc, sh, sel, pout) in enumerate(blocks):
            cout = CHANNELS[k + 1]
            Hk, Wk = H0 >> k, W0 >> k
            Hh = Hk // 2
            R = B * (Hk + 2)
            Rm = R - 2
            WhC = (Wk // 2) * cout
            beta = betas_ref[g * 3 + k]

            # 3x3 'same' conv: 3 banded MXU matmuls over row-shifted views of
            # the whole batch slab (M = B*(Hk+2)-2), no per-sample loop.
            acc = jnp.dot(pin[0:Rm, :], wb[g, 0],
                          preferred_element_type=jnp.float32)
            acc = acc + jnp.dot(pin[1:Rm + 1, :], wb[g, 1],
                                preferred_element_type=jnp.float32)
            acc = acc + jnp.dot(pin[2:Rm + 2, :], wb[g, 2],
                                preferred_element_type=jnp.float32)
            # conv bias + BatchNorm (eval) + trainable swish, all f32 VPU/EUP
            y = acc * sc[g] + sh[g]
            y = y * jax.nn.sigmoid(beta * y)
            # MaxPool2d(2) column pairs: even/odd output pixels live in the
            # two lane halves of the banded-matmul output.
            yc = jnp.maximum(y[:, :WhC], y[:, WhC:])              # (Rm, WhC)

            # MaxPool2d(2) row pairs + placement into the next zero-padded
            # activation: one stacked 0/1 selection matmul (even picks in the
            # first 8-aligned section, odd picks in the second) + one max.
            ps = jnp.dot(sel[...], yc, preferred_element_type=jnp.float32)
            if pout is not None:
                P = B * (Hh + 2)
                Pp = _round_up(P, 8)
                pooled = jnp.maximum(ps[0:P, :], ps[Pp:Pp + P, :])
                # lane-0, full-interior block store (pad rows get 0 from sel)
                pout[:, 0:WhC] = pooled
            else:
                # last block: rows are 8-aligned groups of B samples per pool
                # row h; feed the head Linear-1 partial matmuls directly.
                GP = _round_up(B, 8)
                half = H3 * GP
                pooled = jnp.maximum(ps[0:half, :], ps[half:2 * half, :])
                for i in range(H3):
                    h1 = h1 + jnp.dot(pooled[i * GP:i * GP + B, :],
                                      w1p_ref[g, i],
                                      preferred_element_type=jnp.float32)

    # ---- Flatten -> Linear(feat->128) -> swish -> Linear(128->hidden) ----
    h1 = h1 + b1_ref[...]
    bh = betas_ref[3 * G]
    h1 = h1 * jax.nn.sigmoid(bh * h1)
    o_ref[...] = jnp.dot(h1, w2_ref[...],
                         preferred_element_type=jnp.float32) + b2_ref[...]


# --------------------------------------------------------------------------
# Parameter-side helpers (tiny, parameter-only glue)
# --------------------------------------------------------------------------
def _fold_bn(gamma, beta, mean, var):
    scale = gamma / jnp.sqrt(var + EPS)
    return scale, beta - mean * scale


def _banded_weights(w, W):
    """w: (3, 3, cin, cout) HWIO -> (3, (W+2)*cin, W*cout) per-ky band matrices.

    Row index    = pixel * cin + ci, with pixels ordered
                   [interior 0..W-1 | left pad | right pad]  (lane-0 interiors).
    Column index = dj*(W//2)*cout + j*cout + co  for output pixel 2j + dj,
                   i.e. even output pixels fill the first lane half and odd the
                   second, so MaxPool's column pair is one lane-half maximum."""
    cin, cout = w.shape[2], w.shape[3]
    W2 = W // 2
    # padded position read by output pixel q = 2j+dj, tap kx:  q + kx
    pos = (np.arange(3)[:, None, None] + np.arange(2)[None, :, None]
           + 2 * np.arange(W2)[None, None, :])                    # (kx, dj, j)
    # remap padded position -> [interior | pads] pixel index
    newpix = np.where(pos == 0, W, np.where(pos == W + 1, W + 1, pos - 1))
    p = np.arange(W + 2)
    mask = (p[:, None, None, None] == newpix[None]).astype(np.float32)  # (p,kx,dj,j)
    band = jnp.einsum("pxdj,yxio->ypidjo", mask, w,
                      precision=jax.lax.Precision.HIGHEST)  # (ky,p,ci,dj,j,co)
    return band.reshape(3, (W + 2) * cin, W * cout)


def _input_place_matrix(B, H):
    """Places BN'd input rows into pad1's (pad, interior, pad) row structure."""
    S = np.zeros((B * (H + 2), B * H), np.float32)
    for n in range(B):
        for h in range(H):
            S[n * (H + 2) + 1 + h, n * H + h] = 1.0
    return jnp.asarray(S)


def _pool_place_matrix(B, H):
    """Fused row-pair-pool pick + padded-row placement for blocks 1 and 2.

    Output rows: [even-row picks placed into the next padded buffer | 8-aligned
    gap | odd-row picks]; the kernel max-reduces the two sections."""
    Hh = H // 2
    Rm = B * (H + 2) - 2
    P = B * (Hh + 2)
    Pp = _round_up(P, 8)
    S = np.zeros((Pp + P, Rm), np.float32)
    for n in range(B):
        for i in range(Hh):
            src = n * (H + 2) + 2 * i
            dst = n * (Hh + 2) + 1 + i
            S[dst, src] = 1.0
            S[Pp + dst, src + 1] = 1.0
    return jnp.asarray(S)


def _pool_feature_matrix(B, H):
    """Last block: row-pair-pool picks grouped as 8-aligned (pool-row, sample)
    blocks so the head's per-(g, h) partial dots use aligned sublane slices."""
    Hh = H // 2
    Rm = B * (H + 2) - 2
    GP = _round_up(B, 8)
    S = np.zeros((2 * Hh * GP, Rm), np.float32)
    for n in range(B):
        for i in range(Hh):
            src = n * (H + 2) + 2 * i
            S[i * GP + n, src] = 1.0
            S[Hh * GP + i * GP + n, src + 1] = 1.0
    return jnp.asarray(S)


def trunk_net_forward(x_r, x_z, params):
    """x_r, x_z: (B, nr, nz) float32 -> (B, hidden_dim) float32."""
    B, H0, W0 = x_r.shape
    assert H0 % 8 == 0 and W0 % 8 == 0
    assert B <= 8, "head feature grouping assumes B <= 8 (add a batch grid axis otherwise)"
    head = params["head"]
    d1 = head["w1"].shape[1]
    hidden = head["w2"].shape[1]
    C3 = CHANNELS[-1]
    H3, W3 = H0 // 8, W0 // 8

    def prep_branch(prm):
        s0, t0 = _fold_bn(prm["in_gamma"], prm["in_beta"],
                          prm["in_mean"], prm["in_var"])
        inbn = jnp.concatenate([s0, t0]).astype(jnp.float32)            # (2,)
        bands, scales, shifts, betas = [], [], [], []
        W = W0
        for i, blk in enumerate(prm["blocks"]):
            cout = CHANNELS[i + 1]
            s, t = _fold_bn(blk["gamma"], blk["beta"], blk["mean"], blk["var"])
            shift = t + s * blk["b"]                    # fold conv bias into BN shift
            bands.append(_banded_weights(blk["w"], W))  # (3, (W+2)*cin, W*cout)
            scales.append(jnp.tile(s, W).reshape(1, W * cout))
            shifts.append(jnp.tile(shift, W).reshape(1, W * cout))
            betas.append(jnp.asarray(blk["swish_beta"], jnp.float32))
            W //= 2
        return inbn, bands, scales, shifts, betas

    inbn_r, bands_r, sc_r, sh_r, bet_r = prep_branch(params["r"])
    inbn_z, bands_z, sc_z, sh_z, bet_z = prep_branch(params["z"])

    inbn = jnp.stack([inbn_r, inbn_z])                                   # (2, 2)
    betas = jnp.stack(bet_r + bet_z +
                      [jnp.asarray(head["swish_beta"], jnp.float32)])    # (7,)

    wb = [jnp.stack([bands_r[k], bands_z[k]]) for k in range(3)]         # (2,3,K,N)
    sc = [jnp.stack([sc_r[k], sc_z[k]]) for k in range(3)]               # (2,1,N)
    sh = [jnp.stack([sh_r[k], sh_z[k]]) for k in range(3)]

    # permute Linear-1 rows from torch's (g, c, h, w) flatten order to the
    # kernel's (g, h, w, c) feature order, grouped per (g, pooled row h)
    w1p = head["w1"].reshape(2, C3, H3, W3, d1).transpose(0, 2, 3, 1, 4)
    w1p = w1p.reshape(2, H3, W3 * C3, d1)
    b1 = head["b1"].reshape(1, d1)
    w2 = head["w2"]
    b2 = head["b2"].reshape(1, hidden)

    # constant 0/1 placement / pool-selection matrices (host-built, tiny)
    selin = _input_place_matrix(B, H0)
    sel1 = _pool_place_matrix(B, H0)
    sel2 = _pool_place_matrix(B, H0 // 2)
    sel3 = _pool_feature_matrix(B, H0 // 4)

    x = jnp.stack([x_r, x_z]).astype(jnp.float32).reshape(2, B * H0, W0)

    H1, W1 = H0 // 2, W0 // 2
    H2, W2 = H0 // 4, W0 // 4
    VM = pl.BlockSpec(memory_space=pltpu.MemorySpace.VMEM)
    SM = pl.BlockSpec(memory_space=pltpu.MemorySpace.SMEM)
    cfg = dict(B=B, H=H0, W=W0)

    return pl.pallas_call(
        functools.partial(trunk_kernel, cfg),
        out_shape=jax.ShapeDtypeStruct((B, hidden), jnp.float32),
        in_specs=[VM, SM, SM] + [VM] * 17,
        out_specs=VM,
        scratch_shapes=[
            pltpu.VMEM((B * (H0 + 2), (W0 + 2) * CHANNELS[0]), jnp.float32),
            pltpu.VMEM((B * (H1 + 2), (W1 + 2) * CHANNELS[1]), jnp.float32),
            pltpu.VMEM((B * (H2 + 2), (W2 + 2) * CHANNELS[2]), jnp.float32),
        ],
    )(x, inbn, betas, selin, sel1, sel2, sel3,
      wb[0], sc[0], sh[0],
      wb[1], sc[1], sh[1],
      wb[2], sc[2], sh[2],
      w1p, b1, w2, b2)


# --------------------------------------------------------------------------
# Deterministic synthetic parameters (shapes follow TrunkNet.__init__)
# --------------------------------------------------------------------------
def init_params(key, hidden_dim, nr, nz):
    ks = iter(jax.random.split(key, 96))

    def bn(c):
        return dict(
            gamma=1.0 + 0.1 * jax.random.normal(next(ks), (c,), jnp.float32),
            beta=0.1 * jax.random.normal(next(ks), (c,), jnp.float32),
            mean=0.1 * jax.random.normal(next(ks), (c,), jnp.float32),
            var=jax.random.uniform(next(ks), (c,), jnp.float32, 0.5, 1.5),
        )

    def branch_params():
        in_bn = bn(1)
        blocks = []
        for i in range(3):
            cin, cout = CHANNELS[i], CHANNELS[i + 1]
            blocks.append(dict(
                w=jax.random.normal(next(ks), (3, 3, cin, cout), jnp.float32)
                  / np.sqrt(9 * cin),
                b=0.1 * jax.random.normal(next(ks), (cout,), jnp.float32),
                swish_beta=jnp.float32(1.0),          # TrainableSwish init beta
                **bn(cout),
            ))
        return dict(in_gamma=in_bn["gamma"], in_beta=in_bn["beta"],
                    in_mean=in_bn["mean"], in_var=in_bn["var"], blocks=blocks)

    feat_dim = 2 * CHANNELS[-1] * (nr // 8) * (nz // 8)
    head = dict(
        w1=jax.random.normal(next(ks), (feat_dim, 128), jnp.float32) / np.sqrt(feat_dim),
        b1=0.1 * jax.random.normal(next(ks), (128,), jnp.float32),
        swish_beta=jnp.float32(1.0),
        w2=jax.random.normal(next(ks), (128, hidden_dim), jnp.float32) / np.sqrt(128),
        b2=0.1 * jax.random.normal(next(ks), (hidden_dim,), jnp.float32),
    )
    return dict(r=branch_params(), z=branch_params(), head=head)


# --------------------------------------------------------------------------
# Pure-JAX reference (mirrors the PyTorch forward, eval-mode BN)
# --------------------------------------------------------------------------
def reference_forward(x_r, x_z, params):
    def bn_eval(y, gamma, beta, mean, var):
        return (y - mean) / jnp.sqrt(var + EPS) * gamma + beta

    def branch(x, prm):
        x = bn_eval(x[..., None], prm["in_gamma"], prm["in_beta"],
                    prm["in_mean"], prm["in_var"])
        for blk in prm["blocks"]:
            y = jax.lax.conv_general_dilated(
                x, blk["w"], (1, 1), "SAME",
                dimension_numbers=("NHWC", "HWIO", "NHWC"),
                precision=jax.lax.Precision.HIGHEST) + blk["b"]
            y = bn_eval(y, blk["gamma"], blk["beta"], blk["mean"], blk["var"])
            y = y * jax.nn.sigmoid(blk["swish_beta"] * y)
            B, H, W, C = y.shape
            x = y.reshape(B, H // 2, 2, W // 2, 2, C).max(axis=(2, 4))
        return x

    yr, yz = branch(x_r, params["r"]), branch(x_z, params["z"])
    B = x_r.shape[0]
    feat = jnp.concatenate([jnp.transpose(yr, (0, 3, 1, 2)),
                            jnp.transpose(yz, (0, 3, 1, 2))], axis=1).reshape(B, -1)
    head = params["head"]
    h = feat @ head["w1"] + head["b1"]
    h = h * jax.nn.sigmoid(head["swish_beta"] * h)
    return h @ head["w2"] + head["b2"]


# --------------------------------------------------------------------------
if __name__ == "__main__":
    B, NR, NZ, HIDDEN = 2, 16, 16, 32            # small shapes; nr, nz divisible by 8
    key = jax.random.PRNGKey(0)
    k_p, k_r, k_z = jax.random.split(key, 3)

    params = init_params(k_p, HIDDEN, NR, NZ)
    x_r = jax.random.normal(k_r, (B, NR, NZ), jnp.float32)
    x_z = jax.random.normal(k_z, (B, NR, NZ), jnp.float32)

    out = jax.jit(trunk_net_forward)(x_r, x_z, params)
    out = jax.block_until_ready(out)
    assert out.shape == (B, HIDDEN) and out.dtype == jnp.float32

    ref = reference_forward(x_r, x_z, params)
    # In-kernel dots run at default MXU matmul precision vs. the reference's
    # Precision.HIGHEST conv/matmuls; tolerance accounts for bf16 input passes
    # accumulated across ~5 serial matmul stages.
    np.testing.assert_allclose(np.asarray(out), np.asarray(ref),
                               atol=1e-2, rtol=1e-2)

    print("KERNEL_OK")
</pallas_src>

<mosaic_0001>
module attributes {stable_mosaic.version = 11 : i64} {
  func.func @trunk_kernel(%arg0: memref<2x32x16xf32, #tpu.memory_space<vmem>>, %arg1: memref<2x2xf32, #tpu.memory_space<smem>>, %arg2: memref<7xf32, #tpu.memory_space<smem>>, %arg3: memref<36x32xf32, #tpu.memory_space<vmem>>, %arg4: memref<44x34xf32, #tpu.memory_space<vmem>>, %arg5: memref<28x18xf32, #tpu.memory_space<vmem>>, %arg6: memref<32x10xf32, #tpu.memory_space<vmem>>, %arg7: memref<2x3x18x128xf32, #tpu.memory_space<vmem>>, %arg8: memref<2x1x128xf32, #tpu.memory_space<vmem>>, %arg9: memref<2x1x128xf32, #tpu.memory_space<vmem>>, %arg10: memref<2x3x80x128xf32, #tpu.memory_space<vmem>>, %arg11: memref<2x1x128xf32, #tpu.memory_space<vmem>>, %arg12: memref<2x1x128xf32, #tpu.memory_space<vmem>>, %arg13: memref<2x3x96x128xf32, #tpu.memory_space<vmem>>, %arg14: memref<2x1x128xf32, #tpu.memory_space<vmem>>, %arg15: memref<2x1x128xf32, #tpu.memory_space<vmem>>, %arg16: memref<2x2x64x128xf32, #tpu.memory_space<vmem>>, %arg17: memref<1x128xf32, #tpu.memory_space<vmem>>, %arg18: memref<128x32xf32, #tpu.memory_space<vmem>>, %arg19: memref<1x32xf32, #tpu.memory_space<vmem>>, %arg20: memref<2x32xf32, #tpu.memory_space<vmem>>, %arg21: memref<36x18xf32, #tpu.memory_space<vmem>>, %arg22: memref<20x80xf32, #tpu.memory_space<vmem>>, %arg23: memref<12x96xf32, #tpu.memory_space<vmem>>) attributes {dimension_semantics = [], scalar_prefetch = 0 : i64, scratch_operands = 3 : i64, tpu.core_type = #tpu.core_type<tc>} {
    %cst = arith.constant 0.000000e+00 : f32
    %0 = vector.broadcast %cst : f32 to vector<36x18xf32>
    %c0 = arith.constant 0 : index
    %c0_0 = arith.constant 0 : index
    %1 = vector.load %arg21[%c0, %c0_0] : memref<36x18xf32, #tpu.memory_space<vmem>>, vector<36x18xf32>
    tpu.vector_store %arg21[%c0, %c0_0], %0 {strides = array<i32>} : memref<36x18xf32, #tpu.memory_space<vmem>>, vector<36x18xf32>,
    %cst_1 = arith.constant 0.000000e+00 : f32
    %2 = vector.broadcast %cst_1 : f32 to vector<20x80xf32>
    %c0_2 = arith.constant 0 : index
    %c0_3 = arith.constant 0 : index
    %3 = vector.load %arg22[%c0_2, %c0_3] : memref<20x80xf32, #tpu.memory_space<vmem>>, vector<20x80xf32>
    tpu.vector_store %arg22[%c0_2, %c0_3], %2 {strides = array<i32>} : memref<20x80xf32, #tpu.memory_space<vmem>>, vector<20x80xf32>,
    %cst_4 = arith.constant 0.000000e+00 : f32
    %4 = vector.broadcast %cst_4 : f32 to vector<12x96xf32>
    %c0_5 = arith.constant 0 : index
    %c0_6 = arith.constant 0 : index
    %5 = vector.load %arg23[%c0_5, %c0_6] : memref<12x96xf32, #tpu.memory_space<vmem>>, vector<12x96xf32>
    tpu.vector_store %arg23[%c0_5, %c0_6], %4 {strides = array<i32>} : memref<12x96xf32, #tpu.memory_space<vmem>>, vector<12x96xf32>,
    %cst_7 = arith.constant 0.000000e+00 : f32
    %6 = vector.broadcast %cst_7 : f32 to vector<2x128xf32>
    %c0_8 = arith.constant 0 : index
    %c0_9 = arith.constant 0 : index
    %7 = memref.load %arg1[%c0_8, %c0_9] : memref<2x2xf32, #tpu.memory_space<smem>>
    %c0_10 = arith.constant 0 : index
    %c1 = arith.constant 1 : index
    %8 = memref.load %arg1[%c0_10, %c1] : memref<2x2xf32, #tpu.memory_space<smem>>
    %c0_11 = arith.constant 0 : index
    %c0_12 = arith.constant 0 : index
    %c0_13 = arith.constant 0 : index
    %9 = vector.load %arg0[%c0_11, %c0_12, %c0_13] : memref<2x32x16xf32, #tpu.memory_space<vmem>>, vector<1x32x16xf32>
    %10 = vector.shape_cast %9 : vector<1x32x16xf32> to vector<32x16xf32>
    %11 = vector.broadcast %7 : f32 to vector<32x16xf32>
    %12 = arith.mulf %10, %11 : vector<32x16xf32>
    %13 = vector.broadcast %8 : f32 to vector<32x16xf32>
    %14 = arith.addf %12, %13 : vector<32x16xf32>
    %c0_14 = arith.constant 0 : index
    %c0_15 = arith.constant 0 : index
    %15 = vector.load %arg3[%c0_14, %c0_15] : memref<36x32xf32, #tpu.memory_space<vmem>>, vector<36x32xf32>
    %cst_16 = arith.constant dense<0.000000e+00> : vector<36x16xf32>
    %16 = tpu.matmul %15, %14, %cst_16 {dimension_numbers = #tpu.dot_dimension_numbers<[1], [0], [0], [1], [0, 0, 1, 1], [], []>} : vector<36x32xf32>, vector<32x16xf32>, vector<36x16xf32> -> vector<36x16xf32>
    %c0_17 = arith.constant 0 : index
    %c0_18 = arith.constant 0 : index
    %17 = vector.load %arg21[%c0_17, %c0_18] : memref<36x18xf32, #tpu.memory_space<vmem>>, vector<36x16xf32>
    tpu.vector_store %arg21[%c0_17, %c0_18], %16 {strides = array<i32>} : memref<36x18xf32, #tpu.memory_space<vmem>>, vector<36x16xf32>,
    %c0_19 = arith.constant 0 : index
    %18 = memref.load %arg2[%c0_19] : memref<7xf32, #tpu.memory_space<smem>>
    %c0_20 = arith.constant 0 : index
    %c0_21 = arith.constant 0 : index
    %19 = vector.load %arg21[%c0_20, %c0_21] : memref<36x18xf32, #tpu.memory_space<vmem>>, vector<34x18xf32>
    %c0_22 = arith.constant 0 : index
    %c0_23 = arith.constant 0 : index
    %c0_24 = arith.constant 0 : index
    %c0_25 = arith.constant 0 : index
    %20 = vector.load %arg7[%c0_22, %c0_23, %c0_24, %c0_25] : memref<2x3x18x128xf32, #tpu.memory_space<vmem>>, vector<1x1x18x128xf32>
    %21 = vector.shape_cast %20 : vector<1x1x18x128xf32> to vector<18x128xf32>
    %cst_26 = arith.constant dense<0.000000e+00> : vector<34x128xf32>
    %22 = tpu.matmul %19, %21, %cst_26 {dimension_numbers = #tpu.dot_dimension_numbers<[1], [0], [0], [1], [0, 0, 1, 1], [], []>} : vector<34x18xf32>, vector<18x128xf32>, vector<34x128xf32> -> vector<34x128xf32>
    %c1_27 = arith.constant 1 : index
    %c0_28 = arith.constant 0 : index
    %23 = vector.load %arg21[%c1_27, %c0_28] : memref<36x18xf32, #tpu.memory_space<vmem>>, vector<34x18xf32>
    %c0_29 = arith.constant 0 : index
    %c1_30 = arith.constant 1 : index
    %c0_31 = arith.constant 0 : index
    %c0_32 = arith.constant 0 : index
    %24 = vector.load %arg7[%c0_29, %c1_30, %c0_31, %c0_32] : memref<2x3x18x128xf32, #tpu.memory_space<vmem>>, vector<1x1x18x128xf32>
    %25 = vector.shape_cast %24 : vector<1x1x18x128xf32> to vector<18x128xf32>
    %cst_33 = arith.constant dense<0.000000e+00> : vector<34x128xf32>
    %26 = tpu.matmul %23, %25, %cst_33 {dimension_numbers = #tpu.dot_dimension_numbers<[1], [0], [0], [1], [0, 0, 1, 1], [], []>} : vector<34x18xf32>, vector<18x128xf32>, vector<34x128xf32> -> vector<34x128xf32>
    %27 = arith.addf %22, %26 : vector<34x128xf32>
    %c2 = arith.constant 2 : index
    %c0_34 = arith.constant 0 : index
    %28 = vector.load %arg21[%c2, %c0_34] : memref<36x18xf32, #tpu.memory_space<vmem>>, vector<34x18xf32>
    %c0_35 = arith.constant 0 : index
    %c2_36 = arith.constant 2 : index
    %c0_37 = arith.constant 0 : index
    %c0_38 = arith.constant 0 : index
    %29 = vector.load %arg7[%c0_35, %c2_36, %c0_37, %c0_38] : memref<2x3x18x128xf32, #tpu.memory_space<vmem>>, vector<1x1x18x128xf32>
    %30 = vector.shape_cast %29 : vector<1x1x18x128xf32> to vector<18x128xf32>
    %cst_39 = arith.constant dense<0.000000e+00> : vector<34x128xf32>
    %31 = tpu.matmul %28, %30, %cst_39 {dimension_numbers = #tpu.dot_dimension_numbers<[1], [0], [0], [1], [0, 0, 1, 1], [], []>} : vector<34x18xf32>, vector<18x128xf32>, vector<34x128xf32> -> vector<34x128xf32>
    %32 = arith.addf %27, %31 : vector<34x128xf32>
    %c0_40 = arith.constant 0 : index
    %c0_41 = arith.constant 0 : index
    %c0_42 = arith.constant 0 : index
    %33 = vector.load %arg8[%c0_40, %c0_41, %c0_42] : memref<2x1x128xf32, #tpu.memory_space<vmem>>, vector<1x1x128xf32>
    %34 = vector.shape_cast %33 : vector<1x1x128xf32> to vector<1x128xf32>
    %35 = vector.broadcast %34 : vector<1x128xf32> to vector<34x128xf32>
    %36 = arith.mulf %32, %35 : vector<34x128xf32>
    %c0_43 = arith.constant 0 : index
    %c0_44 = arith.constant 0 : index
    %c0_45 = arith.constant 0 : index
    %37 = vector.load %arg9[%c0_43, %c0_44, %c0_45] : memref<2x1x128xf32, #tpu.memory_space<vmem>>, vector<1x1x128xf32>
    %38 = vector.shape_cast %37 : vector<1x1x128xf32> to vector<1x128xf32>
    %39 = vector.broadcast %38 : vector<1x128xf32> to vector<34x128xf32>
    %40 = arith.addf %36, %39 : vector<34x128xf32>
    %41 = vector.broadcast %18 : f32 to vector<34x128xf32>
    %42 = arith.mulf %41, %40 : vector<34x128xf32>
    %43 = arith.negf %42 : vector<34x128xf32>
    %44 = math.exp %43 : vector<34x128xf32>
    %cst_46 = arith.constant 1.000000e+00 : f32
    %45 = vector.broadcast %cst_46 : f32 to vector<34x128xf32>
    %46 = arith.addf %45, %44 : vector<34x128xf32>
    %47 = arith.divf %45, %46 : vector<34x128xf32>
    %48 = arith.mulf %40, %47 : vector<34x128xf32>
    %49 = vector.extract_strided_slice %48 {offsets = [0, 0], sizes = [34, 64], strides = [1, 1]} : vector<34x128xf32> to vector<34x64xf32>
    %50 = vector.extract_strided_slice %48 {offsets = [0, 64], sizes = [34, 64], strides = [1, 1]} : vector<34x128xf32> to vector<34x64xf32>
    %51 = arith.maximumf %49, %50 : vector<34x64xf32>
    %c0_47 = arith.constant 0 : index
    %c0_48 = arith.constant 0 : index
    %52 = vector.load %arg4[%c0_47, %c0_48] : memref<44x34xf32, #tpu.memory_space<vmem>>, vector<44x34xf32>
    %cst_49 = arith.constant dense<0.000000e+00> : vector<44x64xf32>
    %53 = tpu.matmul %52, %51, %cst_49 {dimension_numbers = #tpu.dot_dimension_numbers<[1], [0], [0], [1], [0, 0, 1, 1], [], []>} : vector<44x34xf32>, vector<34x64xf32>, vector<44x64xf32> -> vector<44x64xf32>
    %54 = vector.extract_strided_slice %53 {offsets = [0, 0], sizes = [20, 64], strides = [1, 1]} : vector<44x64xf32> to vector<20x64xf32>
    %55 = vector.extract_strided_slice %53 {offsets = [24, 0], sizes = [20, 64], strides = [1, 1]} : vector<44x64xf32> to vector<20x64xf32>
    %56 = arith.maximumf %54, %55 : vector<20x64xf32>
    %c0_50 = arith.constant 0 : index
    %c0_51 = arith.constant 0 : index
    %57 = vector.load %arg22[%c0_50, %c0_51] : memref<20x80xf32, #tpu.memory_space<vmem>>, vector<20x64xf32>
    tpu.vector_store %arg22[%c0_50, %c0_51], %56 {strides = array<i32>} : memref<20x80xf32, #tpu.memory_space<vmem>>, vector<20x64xf32>,
    %c1_52 = arith.constant 1 : index
    %58 = memref.load %arg2[%c1_52] : memref<7xf32, #tpu.memory_space<smem>>
    %c0_53 = arith.constant 0 : index
    %c0_54 = arith.constant 0 : index
    %59 = vector.load %arg22[%c0_53, %c0_54] : memref<20x80xf32, #tpu.memory_space<vmem>>, vector<18x80xf32>
    %c0_55 = arith.constant 0 : index
    %c0_56 = arith.constant 0 : index
    %c0_57 = arith.constant 0 : index
    %c0_58 = arith.constant 0 : index
    %60 = vector.load %arg10[%c0_55, %c0_56, %c0_57, %c0_58] : memref<2x3x80x128xf32, #tpu.memory_space<vmem>>, vector<1x1x80x128xf32>
    %61 = vector.shape_cast %60 : vector<1x1x80x128xf32> to vector<80x128xf32>
    %cst_59 = arith.constant dense<0.000000e+00> : vector<18x128xf32>
    %62 = tpu.matmul %59, %61, %cst_59 {dimension_numbers = #tpu.dot_dimension_numbers<[1], [0], [0], [1], [0, 0, 1, 1], [], []>} : vector<18x80xf32>, vector<80x128xf32>, vector<18x128xf32> -> vector<18x128xf32>
    %c1_60 = arith.constant 1 : index
    %c0_61 = arith.constant 0 : index
    %63 = vector.load %arg22[%c1_60, %c0_61] : memref<20x80xf32, #tpu.memory_space<vmem>>, vector<18x80xf32>
    %c0_62 = arith.constant 0 : index
    %c1_63 = arith.constant 1 : index
    %c0_64 = arith.constant 0 : index
    %c0_65 = arith.constant 0 : index
    %64 = vector.load %arg10[%c0_62, %c1_63, %c0_64, %c0_65] : memref<2x3x80x128xf32, #tpu.memory_space<vmem>>, vector<1x1x80x128xf32>
    %65 = vector.shape_cast %64 : vector<1x1x80x128xf32> to vector<80x128xf32>
    %cst_66 = arith.constant dense<0.000000e+00> : vector<18x128xf32>
    %66 = tpu.matmul %63, %65, %cst_66 {dimension_numbers = #tpu.dot_dimension_numbers<[1], [0], [0], [1], [0, 0, 1, 1], [], []>} : vector<18x80xf32>, vector<80x128xf32>, vector<18x128xf32> -> vector<18x128xf32>
    %67 = arith.addf %62, %66 : vector<18x128xf32>
    %c2_67 = arith.constant 2 : index
    %c0_68 = arith.constant 0 : index
    %68 = vector.load %arg22[%c2_67, %c0_68] : memref<20x80xf32, #tpu.memory_space<vmem>>, vector<18x80xf32>
    %c0_69 = arith.constant 0 : index
    %c2_70 = arith.constant 2 : index
    %c0_71 = arith.constant 0 : index
    %c0_72 = arith.constant 0 : index
    %69 = vector.load %arg10[%c0_69, %c2_70, %c0_71, %c0_72] : memref<2x3x80x128xf32, #tpu.memory_space<vmem>>, vector<1x1x80x128xf32>
    %70 = vector.shape_cast %69 : vector<1x1x80x128xf32> to vector<80x128xf32>
    %cst_73 = arith.constant dense<0.000000e+00> : vector<18x128xf32>
    %71 = tpu.matmul %68, %70, %cst_73 {dimension_numbers = #tpu.dot_dimension_numbers<[1], [0], [0], [1], [0, 0, 1, 1], [], []>} : vector<18x80xf32>, vector<80x128xf32>, vector<18x128xf32> -> vector<18x128xf32>
    %72 = arith.addf %67, %71 : vector<18x128xf32>
    %c0_74 = arith.constant 0 : index
    %c0_75 = arith.constant 0 : index
    %c0_76 = arith.constant 0 : index
    %73 = vector.load %arg11[%c0_74, %c0_75, %c0_76] : memref<2x1x128xf32, #tpu.memory_space<vmem>>, vector<1x1x128xf32>
    %74 = vector.shape_cast %73 : vector<1x1x128xf32> to vector<1x128xf32>
    %75 = vector.broadcast %74 : vector<1x128xf32> to vector<18x128xf32>
    %76 = arith.mulf %72, %75 : vector<18x128xf32>
    %c0_77 = arith.constant 0 : index
    %c0_78 = arith.constant 0 : index
    %c0_79 = arith.constant 0 : index
    %77 = vector.load %arg12[%c0_77, %c0_78, %c0_79] : memref<2x1x128xf32, #tpu.memory_space<vmem>>, vector<1x1x128xf32>
    %78 = vector.shape_cast %77 : vector<1x1x128xf32> to vector<1x128xf32>
    %79 = vector.broadcast %78 : vector<1x128xf32> to vector<18x128xf32>
    %80 = arith.addf %76, %79 : vector<18x128xf32>
    %81 = vector.broadcast %58 : f32 to vector<18x128xf32>
    %82 = arith.mulf %81, %80 : vector<18x128xf32>
    %83 = arith.negf %82 : vector<18x128xf32>
    %84 = math.exp %83 : vector<18x128xf32>
    %cst_80 = arith.constant 1.000000e+00 : f32
    %85 = vector.broadcast %cst_80 : f32 to vector<18x128xf32>
    %86 = arith.addf %85, %84 : vector<18x128xf32>
    %87 = arith.divf %85, %86 : vector<18x128xf32>
    %88 = arith.mulf %80, %87 : vector<18x128xf32>
    %89 = vector.extract_strided_slice %88 {offsets = [0, 0], sizes = [18, 64], strides = [1, 1]} : vector<18x128xf32> to vector<18x64xf32>
    %90 = vector.extract_strided_slice %88 {offsets = [0, 64], sizes = [18, 64], strides = [1, 1]} : vector<18x128xf32> to vector<18x64xf32>
    %91 = arith.maximumf %89, %90 : vector<18x64xf32>
    %c0_81 = arith.constant 0 : index
    %c0_82 = arith.constant 0 : index
    %92 = vector.load %arg5[%c0_81, %c0_82] : memref<28x18xf32, #tpu.memory_space<vmem>>, vector<28x18xf32>
    %cst_83 = arith.constant dense<0.000000e+00> : vector<28x64xf32>
    %93 = tpu.matmul %92, %91, %cst_83 {dimension_numbers = #tpu.dot_dimension_numbers<[1], [0], [0], [1], [0, 0, 1, 1], [], []>} : vector<28x18xf32>, vector<18x64xf32>, vector<28x64xf32> -> vector<28x64xf32>
    %94 = vector.extract_strided_slice %93 {offsets = [0, 0], sizes = [12, 64], strides = [1, 1]} : vector<28x64xf32> to vector<12x64xf32>
    %95 = vector.extract_strided_slice %93 {offsets = [16, 0], sizes = [12, 64], strides = [1, 1]} : vector<28x64xf32> to vector<12x64xf32>
    %96 = arith.maximumf %94, %95 : vector<12x64xf32>
    %c0_84 = arith.constant 0 : index
    %c0_85 = arith.constant 0 : index
    %97 = vector.load %arg23[%c0_84, %c0_85] : memref<12x96xf32, #tpu.memory_space<vmem>>, vector<12x64xf32>
    tpu.vector_store %arg23[%c0_84, %c0_85], %96 {strides = array<i32>} : memref<12x96xf32, #tpu.memory_space<vmem>>, vector<12x64xf32>,
    %c2_86 = arith.constant 2 : index
    %98 = memref.load %arg2[%c2_86] : memref<7xf32, #tpu.memory_space<smem>>
    %c0_87 = arith.constant 0 : index
    %c0_88 = arith.constant 0 : index
    %99 = vector.load %arg23[%c0_87, %c0_88] : memref<12x96xf32, #tpu.memory_space<vmem>>, vector<10x96xf32>
    %c0_89 = arith.constant 0 : index
    %c0_90 = arith.constant 0 : index
    %c0_91 = arith.constant 0 : index
    %c0_92 = arith.constant 0 : index
    %100 = vector.load %arg13[%c0_89, %c0_90, %c0_91, %c0_92] : memref<2x3x96x128xf32, #tpu.memory_space<vmem>>, vector<1x1x96x128xf32>
    %101 = vector.shape_cast %100 : vector<1x1x96x128xf32> to vector<96x128xf32>
    %cst_93 = arith.constant dense<0.000000e+00> : vector<10x128xf32>
    %102 = tpu.matmul %99, %101, %cst_93 {dimension_numbers = #tpu.dot_dimension_numbers<[1], [0], [0], [1], [0, 0, 1, 1], [], []>} : vector<10x96xf32>, vector<96x128xf32>, vector<10x128xf32> -> vector<10x128xf32>
    %c1_94 = arith.constant 1 : index
    %c0_95 = arith.constant 0 : index
    %103 = vector.load %arg23[%c1_94, %c0_95] : memref<12x96xf32, #tpu.memory_space<vmem>>, vector<10x96xf32>
    %c0_96 = arith.constant 0 : index
    %c1_97 = arith.constant 1 : index
    %c0_98 = arith.constant 0 : index
    %c0_99 = arith.constant 0 : index
    %104 = vector.load %arg13[%c0_96, %c1_97, %c0_98, %c0_99] : memref<2x3x96x128xf32, #tpu.memory_space<vmem>>, vector<1x1x96x128xf32>
    %105 = vector.shape_cast %104 : vector<1x1x96x128xf32> to vector<96x128xf32>
    %cst_100 = arith.constant dense<0.000000e+00> : vector<10x128xf32>
    %106 = tpu.matmul %103, %105, %cst_100 {dimension_numbers = #tpu.dot_dimension_numbers<[1], [0], [0], [1], [0, 0, 1, 1], [], []>} : vector<10x96xf32>, vector<96x128xf32>, vector<10x128xf32> -> vector<10x128xf32>
    %107 = arith.addf %102, %106 : vector<10x128xf32>
    %c2_101 = arith.constant 2 : index
    %c0_102 = arith.constant 0 : index
    %108 = vector.load %arg23[%c2_101, %c0_102] : memref<12x96xf32, #tpu.memory_space<vmem>>, vector<10x96xf32>
    %c0_103 = arith.constant 0 : index
    %c2_104 = arith.constant 2 : index
    %c0_105 = arith.constant 0 : index
    %c0_106 = arith.constant 0 : index
    %109 = vector.load %arg13[%c0_103, %c2_104, %c0_105, %c0_106] : memref<2x3x96x128xf32, #tpu.memory_space<vmem>>, vector<1x1x96x128xf32>
    %110 = vector.shape_cast %109 : vector<1x1x96x128xf32> to vector<96x128xf32>
    %cst_107 = arith.constant dense<0.000000e+00> : vector<10x128xf32>
    %111 = tpu.matmul %108, %110, %cst_107 {dimension_numbers = #tpu.dot_dimension_numbers<[1], [0], [0], [1], [0, 0, 1, 1], [], []>} : vector<10x96xf32>, vector<96x128xf32>, vector<10x128xf32> -> vector<10x128xf32>
    %112 = arith.addf %107, %111 : vector<10x128xf32>
    %c0_108 = arith.constant 0 : index
    %c0_109 = arith.constant 0 : index
    %c0_110 = arith.constant 0 : index
    %113 = vector.load %arg14[%c0_108, %c0_109, %c0_110] : memref<2x1x128xf32, #tpu.memory_space<vmem>>, vector<1x1x128xf32>
    %114 = vector.shape_cast %113 : vector<1x1x128xf32> to vector<1x128xf32>
    %115 = vector.broadcast %114 : vector<1x128xf32> to vector<10x128xf32>
    %116 = arith.mulf %112, %115 : vector<10x128xf32>
    %c0_111 = arith.constant 0 : index
    %c0_112 = arith.constant 0 : index
    %c0_113 = arith.constant 0 : index
    %117 = vector.load %arg15[%c0_111, %c0_112, %c0_113] : memref<2x1x128xf32, #tpu.memory_space<vmem>>, vector<1x1x128xf32>
    %118 = vector.shape_cast %117 : vector<1x1x128xf32> to vector<1x128xf32>
    %119 = vector.broadcast %118 : vector<1x128xf32> to vector<10x128xf32>
    %120 = arith.addf %116, %119 : vector<10x128xf32>
    %121 = vector.broadcast %98 : f32 to vector<10x128xf32>
    %122 = arith.mulf %121, %120 : vector<10x128xf32>
    %123 = arith.negf %122 : vector<10x128xf32>
    %124 = math.exp %123 : vector<10x128xf32>
    %cst_114 = arith.constant 1.000000e+00 : f32
    %125 = vector.broadcast %cst_114 : f32 to vector<10x128xf32>
    %126 = arith.addf %125, %124 : vector<10x128xf32>
    %127 = arith.divf %125, %126 : vector<10x128xf32>
    %128 = arith.mulf %120, %127 : vector<10x128xf32>
    %129 = vector.extract_strided_slice %128 {offsets = [0, 0], sizes = [10, 64], strides = [1, 1]} : vector<10x128xf32> to vector<10x64xf32>
    %130 = vector.extract_strided_slice %128 {offsets = [0, 64], sizes = [10, 64], strides = [1, 1]} : vector<10x128xf32> to vector<10x64xf32>
    %131 = arith.maximumf %129, %130 : vector<10x64xf32>
    %c0_115 = arith.constant 0 : index
    %c0_116 = arith.constant 0 : index
    %132 = vector.load %arg6[%c0_115, %c0_116] : memref<32x10xf32, #tpu.memory_space<vmem>>, vector<32x10xf32>
    %cst_117 = arith.constant dense<0.000000e+00> : vector<32x64xf32>
    %133 = tpu.matmul %132, %131, %cst_117 {dimension_numbers = #tpu.dot_dimension_numbers<[1], [0], [0], [1], [0, 0, 1, 1], [], []>} : vector<32x10xf32>, vector<10x64xf32>, vector<32x64xf32> -> vector<32x64xf32>
    %134 = vector.extract_strided_slice %133 {offsets = [0, 0], sizes = [16, 64], strides = [1, 1]} : vector<32x64xf32> to vector<16x64xf32>
    %135 = vector.extract_strided_slice %133 {offsets = [16, 0], sizes = [16, 64], strides = [1, 1]} : vector<32x64xf32> to vector<16x64xf32>
    %136 = arith.maximumf %134, %135 : vector<16x64xf32>
    %137 = vector.extract_strided_slice %136 {offsets = [0, 0], sizes = [2, 64], strides = [1, 1]} : vector<16x64xf32> to vector<2x64xf32>
    %c0_118 = arith.constant 0 : index
    %c0_119 = arith.constant 0 : index
    %c0_120 = arith.constant 0 : index
    %c0_121 = arith.constant 0 : index
    %138 = vector.load %arg16[%c0_118, %c0_119, %c0_120, %c0_121] : memref<2x2x64x128xf32, #tpu.memory_space<vmem>>, vector<1x1x64x128xf32>
    %139 = vector.shape_cast %138 : vector<1x1x64x128xf32> to vector<64x128xf32>
    %cst_122 = arith.constant dense<0.000000e+00> : vector<2x128xf32>
    %140 = tpu.matmul %137, %139, %cst_122 {dimension_numbers = #tpu.dot_dimension_numbers<[1], [0], [0], [1], [0, 0, 1, 1], [], []>} : vector<2x64xf32>, vector<64x128xf32>, vector<2x128xf32> -> vector<2x128xf32>
    %141 = arith.addf %6, %140 : vector<2x128xf32>
    %142 = vector.extract_strided_slice %136 {offsets = [8, 0], sizes = [2, 64], strides = [1, 1]} : vector<16x64xf32> to vector<2x64xf32>
    %c0_123 = arith.constant 0 : index
    %c1_124 = arith.constant 1 : index
    %c0_125 = arith.constant 0 : index
    %c0_126 = arith.constant 0 : index
    %143 = vector.load %arg16[%c0_123, %c1_124, %c0_125, %c0_126] : memref<2x2x64x128xf32, #tpu.memory_space<vmem>>, vector<1x1x64x128xf32>
    %144 = vector.shape_cast %143 : vector<1x1x64x128xf32> to vector<64x128xf32>
    %cst_127 = arith.constant dense<0.000000e+00> : vector<2x128xf32>
    %145 = tpu.matmul %142, %144, %cst_127 {dimension_numbers = #tpu.dot_dimension_numbers<[1], [0], [0], [1], [0, 0, 1, 1], [], []>} : vector<2x64xf32>, vector<64x128xf32>, vector<2x128xf32> -> vector<2x128xf32>
    %146 = arith.addf %141, %145 : vector<2x128xf32>
    %c1_128 = arith.constant 1 : index
    %c0_129 = arith.constant 0 : index
    %147 = memref.load %arg1[%c1_128, %c0_129] : memref<2x2xf32, #tpu.memory_space<smem>>
    %c1_130 = arith.constant 1 : index
    %c1_131 = arith.constant 1 : index
    %148 = memref.load %arg1[%c1_130, %c1_131] : memref<2x2xf32, #tpu.memory_space<smem>>
    %c1_132 = arith.constant 1 : index
    %c0_133 = arith.constant 0 : index
    %c0_134 = arith.constant 0 : index
    %149 = vector.load %arg0[%c1_132, %c0_133, %c0_134] : memref<2x32x16xf32, #tpu.memory_space<vmem>>, vector<1x32x16xf32>
    %150 = vector.shape_cast %149 : vector<1x32x16xf32> to vector<32x16xf32>
    %151 = vector.broadcast %147 : f32 to vector<32x16xf32>
    %152 = arith.mulf %150, %151 : vector<32x16xf32>
    %153 = vector.broadcast %148 : f32 to vector<32x16xf32>
    %154 = arith.addf %152, %153 : vector<32x16xf32>
    %c0_135 = arith.constant 0 : index
    %c0_136 = arith.constant 0 : index
    %155 = vector.load %arg3[%c0_135, %c0_136] : memref<36x32xf32, #tpu.memory_space<vmem>>, vector<36x32xf32>
    %cst_137 = arith.constant dense<0.000000e+00> : vector<36x16xf32>
    %156 = tpu.matmul %155, %154, %cst_137 {dimension_numbers = #tpu.dot_dimension_numbers<[1], [0], [0], [1], [0, 0, 1, 1], [], []>} : vector<36x32xf32>, vector<32x16xf32>, vector<36x16xf32> -> vector<36x16xf32>
    %c0_138 = arith.constant 0 : index
    %c0_139 = arith.constant 0 : index
    %157 = vector.load %arg21[%c0_138, %c0_139] : memref<36x18xf32, #tpu.memory_space<vmem>>, vector<36x16xf32>
    tpu.vector_store %arg21[%c0_138, %c0_139], %156 {strides = array<i32>} : memref<36x18xf32, #tpu.memory_space<vmem>>, vector<36x16xf32>,
    %c3 = arith.constant 3 : index
    %158 = memref.load %arg2[%c3] : memref<7xf32, #tpu.memory_space<smem>>
    %c0_140 = arith.constant 0 : index
    %c0_141 = arith.constant 0 : index
    %159 = vector.load %arg21[%c0_140, %c0_141] : memref<36x18xf32, #tpu.memory_space<vmem>>, vector<34x18xf32>
    %c1_142 = arith.constant 1 : index
    %c0_143 = arith.constant 0 : index
    %c0_144 = arith.constant 0 : index
    %c0_145 = arith.constant 0 : index
    %160 = vector.load %arg7[%c1_142, %c0_143, %c0_144, %c0_145] : memref<2x3x18x128xf32, #tpu.memory_space<vmem>>, vector<1x1x18x128xf32>
    %161 = vector.shape_cast %160 : vector<1x1x18x128xf32> to vector<18x128xf32>
    %cst_146 = arith.constant dense<0.000000e+00> : vector<34x128xf32>
    %162 = tpu.matmul %159, %161, %cst_146 {dimension_numbers = #tpu.dot_dimension_numbers<[1], [0], [0], [1], [0, 0, 1, 1], [], []>} : vector<34x18xf32>, vector<18x128xf32>, vector<34x128xf32> -> vector<34x128xf32>
    %c1_147 = arith.constant 1 : index
    %c0_148 = arith.constant 0 : index
    %163 = vector.load %arg21[%c1_147, %c0_148] : memref<36x18xf32, #tpu.memory_space<vmem>>, vector<34x18xf32>
    %c1_149 = arith.constant 1 : index
    %c1_150 = arith.constant 1 : index
    %c0_151 = arith.constant 0 : index
    %c0_152 = arith.constant 0 : index
    %164 = vector.load %arg7[%c1_149, %c1_150, %c0_151, %c0_152] : memref<2x3x18x128xf32, #tpu.memory_space<vmem>>, vector<1x1x18x128xf32>
    %165 = vector.shape_cast %164 : vector<1x1x18x128xf32> to vector<18x128xf32>
    %cst_153 = arith.constant dense<0.000000e+00> : vector<34x128xf32>
    %166 = tpu.matmul %163, %165, %cst_153 {dimension_numbers = #tpu.dot_dimension_numbers<[1], [0], [0], [1], [0, 0, 1, 1], [], []>} : vector<34x18xf32>, vector<18x128xf32>, vector<34x128xf32> -> vector<34x128xf32>
    %167 = arith.addf %162, %166 : vector<34x128xf32>
    %c2_154 = arith.constant 2 : index
    %c0_155 = arith.constant 0 : index
    %168 = vector.load %arg21[%c2_154, %c0_155] : memref<36x18xf32, #tpu.memory_space<vmem>>, vector<34x18xf32>
    %c1_156 = arith.constant 1 : index
    %c2_157 = arith.constant 2 : index
    %c0_158 = arith.constant 0 : index
    %c0_159 = arith.constant 0 : index
    %169 = vector.load %arg7[%c1_156, %c2_157, %c0_158, %c0_159] : memref<2x3x18x128xf32, #tpu.memory_space<vmem>>, vector<1x1x18x128xf32>
    %170 = vector.shape_cast %169 : vector<1x1x18x128xf32> to vector<18x128xf32>
    %cst_160 = arith.constant dense<0.000000e+00> : vector<34x128xf32>
    %171 = tpu.matmul %168, %170, %cst_160 {dimension_numbers = #tpu.dot_dimension_numbers<[1], [0], [0], [1], [0, 0, 1, 1], [], []>} : vector<34x18xf32>, vector<18x128xf32>, vector<34x128xf32> -> vector<34x128xf32>
    %172 = arith.addf %167, %171 : vector<34x128xf32>
    %c1_161 = arith.constant 1 : index
    %c0_162 = arith.constant 0 : index
    %c0_163 = arith.constant 0 : index
    %173 = vector.load %arg8[%c1_161, %c0_162, %c0_163] : memref<2x1x128xf32, #tpu.memory_space<vmem>>, vector<1x1x128xf32>
    %174 = vector.shape_cast %173 : vector<1x1x128xf32> to vector<1x128xf32>
    %175 = vector.broadcast %174 : vector<1x128xf32> to vector<34x128xf32>
    %176 = arith.mulf %172, %175 : vector<34x128xf32>
    %c1_164 = arith.constant 1 : index
    %c0_165 = arith.constant 0 : index
    %c0_166 = arith.constant 0 : index
    %177 = vector.load %arg9[%c1_164, %c0_165, %c0_166] : memref<2x1x128xf32, #tpu.memory_space<vmem>>, vector<1x1x128xf32>
    %178 = vector.shape_cast %177 : vector<1x1x128xf32> to vector<1x128xf32>
    %179 = vector.broadcast %178 : vector<1x128xf32> to vector<34x128xf32>
    %180 = arith.addf %176, %179 : vector<34x128xf32>
    %181 = vector.broadcast %158 : f32 to vector<34x128xf32>
    %182 = arith.mulf %181, %180 : vector<34x128xf32>
    %183 = arith.negf %182 : vector<34x128xf32>
    %184 = math.exp %183 : vector<34x128xf32>
    %cst_167 = arith.constant 1.000000e+00 : f32
    %185 = vector.broadcast %cst_167 : f32 to vector<34x128xf32>
    %186 = arith.addf %185, %184 : vector<34x128xf32>
    %187 = arith.divf %185, %186 : vector<34x128xf32>
    %188 = arith.mulf %180, %187 : vector<34x128xf32>
    %189 = vector.extract_strided_slice %188 {offsets = [0, 0], sizes = [34, 64], strides = [1, 1]} : vector<34x128xf32> to vector<34x64xf32>
    %190 = vector.extract_strided_slice %188 {offsets = [0, 64], sizes = [34, 64], strides = [1, 1]} : vector<34x128xf32> to vector<34x64xf32>
    %191 = arith.maximumf %189, %190 : vector<34x64xf32>
    %c0_168 = arith.constant 0 : index
    %c0_169 = arith.constant 0 : index
    %192 = vector.load %arg4[%c0_168, %c0_169] : memref<44x34xf32, #tpu.memory_space<vmem>>, vector<44x34xf32>
    %cst_170 = arith.constant dense<0.000000e+00> : vector<44x64xf32>
    %193 = tpu.matmul %192, %191, %cst_170 {dimension_numbers = #tpu.dot_dimension_numbers<[1], [0], [0], [1], [0, 0, 1, 1], [], []>} : vector<44x34xf32>, vector<34x64xf32>, vector<44x64xf32> -> vector<44x64xf32>
    %194 = vector.extract_strided_slice %193 {offsets = [0, 0], sizes = [20, 64], strides = [1, 1]} : vector<44x64xf32> to vector<20x64xf32>
    %195 = vector.extract_strided_slice %193 {offsets = [24, 0], sizes = [20, 64], strides = [1, 1]} : vector<44x64xf32> to vector<20x64xf32>
    %196 = arith.maximumf %194, %195 : vector<20x64xf32>
    %c0_171 = arith.constant 0 : index
    %c0_172 = arith.constant 0 : index
    %197 = vector.load %arg22[%c0_171, %c0_172] : memref<20x80xf32, #tpu.memory_space<vmem>>, vector<20x64xf32>
    tpu.vector_store %arg22[%c0_171, %c0_172], %196 {strides = array<i32>} : memref<20x80xf32, #tpu.memory_space<vmem>>, vector<20x64xf32>,
    %c4 = arith.constant 4 : index
    %198 = memref.load %arg2[%c4] : memref<7xf32, #tpu.memory_space<smem>>
    %c0_173 = arith.constant 0 : index
    %c0_174 = arith.constant 0 : index
    %199 = vector.load %arg22[%c0_173, %c0_174] : memref<20x80xf32, #tpu.memory_space<vmem>>, vector<18x80xf32>
    %c1_175 = arith.constant 1 : index
    %c0_176 = arith.constant 0 : index
    %c0_177 = arith.constant 0 : index
    %c0_178 = arith.constant 0 : index
    %200 = vector.load %arg10[%c1_175, %c0_176, %c0_177, %c0_178] : memref<2x3x80x128xf32, #tpu.memory_space<vmem>>, vector<1x1x80x128xf32>
    %201 = vector.shape_cast %200 : vector<1x1x80x128xf32> to vector<80x128xf32>
    %cst_179 = arith.constant dense<0.000000e+00> : vector<18x128xf32>
    %202 = tpu.matmul %199, %201, %cst_179 {dimension_numbers = #tpu.dot_dimension_numbers<[1], [0], [0], [1], [0, 0, 1, 1], [], []>} : vector<18x80xf32>, vector<80x128xf32>, vector<18x128xf32> -> vector<18x128xf32>
    %c1_180 = arith.constant 1 : index
    %c0_181 = arith.constant 0 : index
    %203 = vector.load %arg22[%c1_180, %c0_181] : memref<20x80xf32, #tpu.memory_space<vmem>>, vector<18x80xf32>
    %c1_182 = arith.constant 1 : index
    %c1_183 = arith.constant 1 : index
    %c0_184 = arith.constant 0 : index
    %c0_185 = arith.constant 0 : index
    %204 = vector.load %arg10[%c1_182, %c1_183, %c0_184, %c0_185] : memref<2x3x80x128xf32, #tpu.memory_space<vmem>>, vector<1x1x80x128xf32>
    %205 = vector.shape_cast %204 : vector<1x1x80x128xf32> to vector<80x128xf32>
    %cst_186 = arith.constant dense<0.000000e+00> : vector<18x128xf32>
    %206 = tpu.matmul %203, %205, %cst_186 {dimension_numbers = #tpu.dot_dimension_numbers<[1], [0], [0], [1], [0, 0, 1, 1], [], []>} : vector<18x80xf32>, vector<80x128xf32>, vector<18x128xf32> -> vector<18x128xf32>
    %207 = arith.addf %202, %206 : vector<18x128xf32>
    %c2_187 = arith.constant 2 : index
    %c0_188 = arith.constant 0 : index
    %208 = vector.load %arg22[%c2_187, %c0_188] : memref<20x80xf32, #tpu.memory_space<vmem>>, vector<18x80xf32>
    %c1_189 = arith.constant 1 : index
    %c2_190 = arith.constant 2 : index
    %c0_191 = arith.constant 0 : index
    %c0_192 = arith.constant 0 : index
    %209 = vector.load %arg10[%c1_189, %c2_190, %c0_191, %c0_192] : memref<2x3x80x128xf32, #tpu.memory_space<vmem>>, vector<1x1x80x128xf32>
    %210 = vector.shape_cast %209 : vector<1x1x80x128xf32> to vector<80x128xf32>
    %cst_193 = arith.constant dense<0.000000e+00> : vector<18x128xf32>
    %211 = tpu.matmul %208, %210, %cst_193 {dimension_numbers = #tpu.dot_dimension_numbers<[1], [0], [0], [1], [0, 0, 1, 1], [], []>} : vector<18x80xf32>, vector<80x128xf32>, vector<18x128xf32> -> vector<18x128xf32>
    %212 = arith.addf %207, %211 : vector<18x128xf32>
    %c1_194 = arith.constant 1 : index
    %c0_195 = arith.constant 0 : index
    %c0_196 = arith.constant 0 : index
    %213 = vector.load %arg11[%c1_194, %c0_195, %c0_196] : memref<2x1x128xf32, #tpu.memory_space<vmem>>, vector<1x1x128xf32>
    %214 = vector.shape_cast %213 : vector<1x1x128xf32> to vector<1x128xf32>
    %215 = vector.broadcast %214 : vector<1x128xf32> to vector<18x128xf32>
    %216 = arith.mulf %212, %215 : vector<18x128xf32>
    %c1_197 = arith.constant 1 : index
    %c0_198 = arith.constant 0 : index
    %c0_199 = arith.constant 0 : index
    %217 = vector.load %arg12[%c1_197, %c0_198, %c0_199] : memref<2x1x128xf32, #tpu.memory_space<vmem>>, vector<1x1x128xf32>
    %218 = vector.shape_cast %217 : vector<1x1x128xf32> to vector<1x128xf32>
    %219 = vector.broadcast %218 : vector<1x128xf32> to vector<18x128xf32>
    %220 = arith.addf %216, %219 : vector<18x128xf32>
    %221 = vector.broadcast %198 : f32 to vector<18x128xf32>
    %222 = arith.mulf %221, %220 : vector<18x128xf32>
    %223 = arith.negf %222 : vector<18x128xf32>
    %224 = math.exp %223 : vector<18x128xf32>
    %cst_200 = arith.constant 1.000000e+00 : f32
    %225 = vector.broadcast %cst_200 : f32 to vector<18x128xf32>
    %226 = arith.addf %225, %224 : vector<18x128xf32>
    %227 = arith.divf %225, %226 : vector<18x128xf32>
    %228 = arith.mulf %220, %227 : vector<18x128xf32>
    %229 = vector.extract_strided_slice %228 {offsets = [0, 0], sizes = [18, 64], strides = [1, 1]} : vector<18x128xf32> to vector<18x64xf32>
    %230 = vector.extract_strided_slice %228 {offsets = [0, 64], sizes = [18, 64], strides = [1, 1]} : vector<18x128xf32> to vector<18x64xf32>
    %231 = arith.maximumf %229, %230 : vector<18x64xf32>
    %c0_201 = arith.constant 0 : index
    %c0_202 = arith.constant 0 : index
    %232 = vector.load %arg5[%c0_201, %c0_202] : memref<28x18xf32, #tpu.memory_space<vmem>>, vector<28x18xf32>
    %cst_203 = arith.constant dense<0.000000e+00> : vector<28x64xf32>
    %233 = tpu.matmul %232, %231, %cst_203 {dimension_numbers = #tpu.dot_dimension_numbers<[1], [0], [0], [1], [0, 0, 1, 1], [], []>} : vector<28x18xf32>, vector<18x64xf32>, vector<28x64xf32> -> vector<28x64xf32>
    %234 = vector.extract_strided_slice %233 {offsets = [0, 0], sizes = [12, 64], strides = [1, 1]} : vector<28x64xf32> to vector<12x64xf32>
    %235 = vector.extract_strided_slice %233 {offsets = [16, 0], sizes = [12, 64], strides = [1, 1]} : vector<28x64xf32> to vector<12x64xf32>
    %236 = arith.maximumf %234, %235 : vector<12x64xf32>
    %c0_204 = arith.constant 0 : index
    %c0_205 = arith.constant 0 : index
    %237 = vector.load %arg23[%c0_204, %c0_205] : memref<12x96xf32, #tpu.memory_space<vmem>>, vector<12x64xf32>
    tpu.vector_store %arg23[%c0_204, %c0_205], %236 {strides = array<i32>} : memref<12x96xf32, #tpu.memory_space<vmem>>, vector<12x64xf32>,
    %c5 = arith.constant 5 : index
    %238 = memref.load %arg2[%c5] : memref<7xf32, #tpu.memory_space<smem>>
    %c0_206 = arith.constant 0 : index
    %c0_207 = arith.constant 0 : index
    %239 = vector.load %arg23[%c0_206, %c0_207] : memref<12x96xf32, #tpu.memory_space<vmem>>, vector<10x96xf32>
    %c1_208 = arith.constant 1 : index
    %c0_209 = arith.constant 0 : index
    %c0_210 = arith.constant 0 : index
    %c0_211 = arith.constant 0 : index
    %240 = vector.load %arg13[%c1_208, %c0_209, %c0_210, %c0_211] : memref<2x3x96x128xf32, #tpu.memory_space<vmem>>, vector<1x1x96x128xf32>
    %241 = vector.shape_cast %240 : vector<1x1x96x128xf32> to vector<96x128xf32>
    %cst_212 = arith.constant dense<0.000000e+00> : vector<10x128xf32>
    %242 = tpu.matmul %239, %241, %cst_212 {dimension_numbers = #tpu.dot_dimension_numbers<[1], [0], [0], [1], [0, 0, 1, 1], [], []>} : vector<10x96xf32>, vector<96x128xf32>, vector<10x128xf32> -> vector<10x128xf32>
    %c1_213 = arith.constant 1 : index
    %c0_214 = arith.constant 0 : index
    %243 = vector.load %arg23[%c1_213, %c0_214] : memref<12x96xf32, #tpu.memory_space<vmem>>, vector<10x96xf32>
    %c1_215 = arith.constant 1 : index
    %c1_216 = arith.constant 1 : index
    %c0_217 = arith.constant 0 : index
    %c0_218 = arith.constant 0 : index
    %244 = vector.load %arg13[%c1_215, %c1_216, %c0_217, %c0_218] : memref<2x3x96x128xf32, #tpu.memory_space<vmem>>, vector<1x1x96x128xf32>
    %245 = vector.shape_cast %244 : vector<1x1x96x128xf32> to vector<96x128xf32>
    %cst_219 = arith.constant dense<0.000000e+00> : vector<10x128xf32>
    %246 = tpu.matmul %243, %245, %cst_219 {dimension_numbers = #tpu.dot_dimension_numbers<[1], [0], [0], [1], [0, 0, 1, 1], [], []>} : vector<10x96xf32>, vector<96x128xf32>, vector<10x128xf32> -> vector<10x128xf32>
    %247 = arith.addf %242, %246 : vector<10x128xf32>
    %c2_220 = arith.constant 2 : index
    %c0_221 = arith.constant 0 : index
    %248 = vector.load %arg23[%c2_220, %c0_221] : memref<12x96xf32, #tpu.memory_space<vmem>>, vector<10x96xf32>
    %c1_222 = arith.constant 1 : index
    %c2_223 = arith.constant 2 : index
    %c0_224 = arith.constant 0 : index
    %c0_225 = arith.constant 0 : index
    %249 = vector.load %arg13[%c1_222, %c2_223, %c0_224, %c0_225] : memref<2x3x96x128xf32, #tpu.memory_space<vmem>>, vector<1x1x96x128xf32>
    %250 = vector.shape_cast %249 : vector<1x1x96x128xf32> to vector<96x128xf32>
    %cst_226 = arith.constant dense<0.000000e+00> : vector<10x128xf32>
    %251 = tpu.matmul %248, %250, %cst_226 {dimension_numbers = #tpu.dot_dimension_numbers<[1], [0], [0], [1], [0, 0, 1, 1], [], []>} : vector<10x96xf32>, vector<96x128xf32>, vector<10x128xf32> -> vector<10x128xf32>
    %252 = arith.addf %247, %251 : vector<10x128xf32>
    %c1_227 = arith.constant 1 : index
    %c0_228 = arith.constant 0 : index
    %c0_229 = arith.constant 0 : index
    %253 = vector.load %arg14[%c1_227, %c0_228, %c0_229] : memref<2x1x128xf32, #tpu.memory_space<vmem>>, vector<1x1x128xf32>
    %254 = vector.shape_cast %253 : vector<1x1x128xf32> to vector<1x128xf32>
    %255 = vector.broadcast %254 : vector<1x128xf32> to vector<10x128xf32>
    %256 = arith.mulf %252, %255 : vector<10x128xf32>
    %c1_230 = arith.constant 1 : index
    %c0_231 = arith.constant 0 : index
    %c0_232 = arith.constant 0 : index
    %257 = vector.load %arg15[%c1_230, %c0_231, %c0_232] : memref<2x1x128xf32, #tpu.memory_space<vmem>>, vector<1x1x128xf32>
    %258 = vector.shape_cast %257 : vector<1x1x128xf32> to vector<1x128xf32>
    %259 = vector.broadcast %258 : vector<1x128xf32> to vector<10x128xf32>
    %260 = arith.addf %256, %259 : vector<10x128xf32>
    %261 = vector.broadcast %238 : f32 to vector<10x128xf32>
    %262 = arith.mulf %261, %260 : vector<10x128xf32>
    %263 = arith.negf %262 : vector<10x128xf32>
    %264 = math.exp %263 : vector<10x128xf32>
    %cst_233 = arith.constant 1.000000e+00 : f32
    %265 = vector.broadcast %cst_233 : f32 to vector<10x128xf32>
    %266 = arith.addf %265, %264 : vector<10x128xf32>
    %267 = arith.divf %265, %266 : vector<10x128xf32>
    %268 = arith.mulf %260, %267 : vector<10x128xf32>
    %269 = vector.extract_strided_slice %268 {offsets = [0, 0], sizes = [10, 64], strides = [1, 1]} : vector<10x128xf32> to vector<10x64xf32>
    %270 = vector.extract_strided_slice %268 {offsets = [0, 64], sizes = [10, 64], strides = [1, 1]} : vector<10x128xf32> to vector<10x64xf32>
    %271 = arith.maximumf %269, %270 : vector<10x64xf32>
    %c0_234 = arith.constant 0 : index
    %c0_235 = arith.constant 0 : index
    %272 = vector.load %arg6[%c0_234, %c0_235] : memref<32x10xf32, #tpu.memory_space<vmem>>, vector<32x10xf32>
    %cst_236 = arith.constant dense<0.000000e+00> : vector<32x64xf32>
    %273 = tpu.matmul %272, %271, %cst_236 {dimension_numbers = #tpu.dot_dimension_numbers<[1], [0], [0], [1], [0, 0, 1, 1], [], []>} : vector<32x10xf32>, vector<10x64xf32>, vector<32x64xf32> -> vector<32x64xf32>
    %274 = vector.extract_strided_slice %273 {offsets = [0, 0], sizes = [16, 64], strides = [1, 1]} : vector<32x64xf32> to vector<16x64xf32>
    %275 = vector.extract_strided_slice %273 {offsets = [16, 0], sizes = [16, 64], strides = [1, 1]} : vector<32x64xf32> to vector<16x64xf32>
    %276 = arith.maximumf %274, %275 : vector<16x64xf32>
    %277 = vector.extract_strided_slice %276 {offsets = [0, 0], sizes = [2, 64], strides = [1, 1]} : vector<16x64xf32> to vector<2x64xf32>
    %c1_237 = arith.constant 1 : index
    %c0_238 = arith.constant 0 : index
    %c0_239 = arith.constant 0 : index
    %c0_240 = arith.constant 0 : index
    %278 = vector.load %arg16[%c1_237, %c0_238, %c0_239, %c0_240] : memref<2x2x64x128xf32, #tpu.memory_space<vmem>>, vector<1x1x64x128xf32>
    %279 = vector.shape_cast %278 : vector<1x1x64x128xf32> to vector<64x128xf32>
    %cst_241 = arith.constant dense<0.000000e+00> : vector<2x128xf32>
    %280 = tpu.matmul %277, %279, %cst_241 {dimension_numbers = #tpu.dot_dimension_numbers<[1], [0], [0], [1], [0, 0, 1, 1], [], []>} : vector<2x64xf32>, vector<64x128xf32>, vector<2x128xf32> -> vector<2x128xf32>
    %281 = arith.addf %146, %280 : vector<2x128xf32>
    %282 = vector.extract_strided_slice %276 {offsets = [8, 0], sizes = [2, 64], strides = [1, 1]} : vector<16x64xf32> to vector<2x64xf32>
    %c1_242 = arith.constant 1 : index
    %c1_243 = arith.constant 1 : index
    %c0_244 = arith.constant 0 : index
    %c0_245 = arith.constant 0 : index
    %283 = vector.load %arg16[%c1_242, %c1_243, %c0_244, %c0_245] : memref<2x2x64x128xf32, #tpu.memory_space<vmem>>, vector<1x1x64x128xf32>
    %284 = vector.shape_cast %283 : vector<1x1x64x128xf32> to vector<64x128xf32>
    %cst_246 = arith.constant dense<0.000000e+00> : vector<2x128xf32>
    %285 = tpu.matmul %282, %284, %cst_246 {dimension_numbers = #tpu.dot_dimension_numbers<[1], [0], [0], [1], [0, 0, 1, 1], [], []>} : vector<2x64xf32>, vector<64x128xf32>, vector<2x128xf32> -> vector<2x128xf32>
    %286 = arith.addf %281, %285 : vector<2x128xf32>
    %c0_247 = arith.constant 0 : index
    %c0_248 = arith.constant 0 : index
    %287 = vector.load %arg17[%c0_247, %c0_248] : memref<1x128xf32, #tpu.memory_space<vmem>>, vector<1x128xf32>
    %288 = vector.broadcast %287 : vector<1x128xf32> to vector<2x128xf32>
    %289 = arith.addf %286, %288 : vector<2x128xf32>
    %c6 = arith.constant 6 : index
    %290 = memref.load %arg2[%c6] : memref<7xf32, #tpu.memory_space<smem>>
    %291 = vector.broadcast %290 : f32 to vector<2x128xf32>
    %292 = arith.mulf %291, %289 : vector<2x128xf32>
    %293 = arith.negf %292 : vector<2x128xf32>
    %294 = math.exp %293 : vector<2x128xf32>
    %cst_249 = arith.constant 1.000000e+00 : f32
    %295 = vector.broadcast %cst_249 : f32 to vector<2x128xf32>
    %296 = arith.addf %295, %294 : vector<2x128xf32>
    %297 = arith.divf %295, %296 : vector<2x128xf32>
    %298 = arith.mulf %289, %297 : vector<2x128xf32>
    %c0_250 = arith.constant 0 : index
    %c0_251 = arith.constant 0 : index
    %299 = vector.load %arg18[%c0_250, %c0_251] : memref<128x32xf32, #tpu.memory_space<vmem>>, vector<128x32xf32>
    %cst_252 = arith.constant dense<0.000000e+00> : vector<2x32xf32>
    %300 = tpu.matmul %298, %299, %cst_252 {dimension_numbers = #tpu.dot_dimension_numbers<[1], [0], [0], [1], [0, 0, 1, 1], [], []>} : vector<2x128xf32>, vector<128x32xf32>, vector<2x32xf32> -> vector<2x32xf32>
    %c0_253 = arith.constant 0 : index
    %c0_254 = arith.constant 0 : index
    %301 = vector.load %arg19[%c0_253, %c0_254] : memref<1x32xf32, #tpu.memory_space<vmem>>, vector<1x32xf32>
    %302 = vector.broadcast %301 : vector<1x32xf32> to vector<2x32xf32>
    %303 = arith.addf %300, %302 : vector<2x32xf32>
    %c0_255 = arith.constant 0 : index
    %c0_256 = arith.constant 0 : index
    %304 = vector.load %arg20[%c0_255, %c0_256] : memref<2x32xf32, #tpu.memory_space<vmem>>, vector<2x32xf32>
    tpu.vector_store %arg20[%c0_255, %c0_256], %303 {strides = array<i32>} : memref<2x32xf32, #tpu.memory_space<vmem>>, vector<2x32xf32>,
    return
  }
}

</mosaic_0001>

<llo_original>
// kernel: tile.63
$region0: #{tile.63}
  #allocation0 [shape = 's32[1]{0}', space=sflag, size = 0x4, scoped, tag = 'scoped memory for tile.63']
  %s0 = inlined_call_operand.vmem [shape: f32[8], index: 0, kind: input, shape index: {}]
  %s1 = inlined_call_operand.vmem [shape: f32[16,8], index: 1, kind: output, shape index: {}]
  // Predicated region
  $region2: #{tile.63} parent=0 // pred_check
    _
  $region3: #{tile.63} parent=0 // pred_check_branch
    %3 = sbr.rel (0) target = $region5
  $region4: #{tile.63} parent=0 // pred_region
    _
  $region5: #{tile.63} parent=0 // pred_fallthru
    _
  %v4 = vld [vmem:[%s0] ss:$0 sm:$0xff]
  %5 = vst [vmem:[%s1] sm:$0xff] %v4
  %s6 = scalar_lea.vmem %s1, 8
  %7 = vst [vmem:[%s6] sm:$0xff] %v4

// kernel: tile.108
$region0: #{tile.108}
  %s0 = inlined_call_operand.vmem [shape: f32[16,8], index: 0, kind: input, shape index: {}]
  %s1 = inlined_call_operand.vmem [shape: f32[1,1,128], index: 1, kind: output, shape index: {}]
  $region1: #{tile.108} parent=0
    #allocation0 [shape = 'u8[4096]{0}', space=vmem, size = 0x1000, scoped, tag = 'scoped mem for output reshape']
    %v2 = vld [vmem:[%s0] sm:$0x1]
    %vm3 = vcmask 64512
    %4 = vst.msk [vmem:[#allocation0] sm:$0x1] %vm3, %v2
    %s5 = scalar_lea.vmem %s0, 15
    %v6 = vld [vmem:[%s5] sm:$0x1]
    %7 = vrot.lane.b32.xlu0 %v6, 120
    %v8 = vpop.permute.xlu0 %7
    %vm9 = vcmask 1048512
    %10 = vst.msk [vmem:[#allocation0] sm:$0x1] %vm9, %v8
    %s11 = scalar_lea.vmem %s0, 14
    %v12 = vld [vmem:[%s11] sm:$0x1]
    %13 = vrot.lane.b32.xlu0 %v12, 112
    %v14 = vpop.permute.xlu0 %13
    %vm15 = vcmask 982912
    %16 = vst.msk [vmem:[#allocation0] sm:$0x1] %vm15, %v14
    %s17 = scalar_lea.vmem %s0, 13
    %v18 = vld [vmem:[%s17] sm:$0x1]
    %19 = vrot.lane.b32.xlu0 %v18, 104
    %v20 = vpop.permute.xlu0 %19
    %vm21 = vcmask 917312
    %22 = vst.msk [vmem:[#allocation0] sm:$0x1] %vm21, %v20
    %s23 = scalar_lea.vmem %s0, 12
    %v24 = vld [vmem:[%s23] sm:$0x1]
    %25 = vrot.lane.b32.xlu0 %v24, 96
    %v26 = vpop.permute.xlu0 %25
    %vm27 = vcmask 851712
    %28 = vst.msk [vmem:[#allocation0] sm:$0x1] %vm27, %v26
    %s29 = scalar_lea.vmem %s0, 11
    %v30 = vld [vmem:[%s29] sm:$0x1]
    %31 = vrot.lane.b32.xlu0 %v30, 88
    %v32 = vpop.permute.xlu0 %31
    %vm33 = vcmask 786112
    %34 = vst.msk [vmem:[#allocation0] sm:$0x1] %vm33, %v32
    %s35 = scalar_lea.vmem %s0, 10
    %v36 = vld [vmem:[%s35] sm:$0x1]
    %37 = vrot.lane.b32.xlu0 %v36, 80
    %v38 = vpop.permute.xlu0 %37
    %vm39 = vcmask 720512
    %40 = vst.msk [vmem:[#allocation0] sm:$0x1] %vm39, %v38
    %s41 = scalar_lea.vmem %s0, 9
    %v42 = vld [vmem:[%s41] sm:$0x1]
    %43 = vrot.lane.b32.xlu0 %v42, 72
    %v44 = vpop.permute.xlu0 %43
    %vm45 = vcmask 654912
    %46 = vst.msk [vmem:[#allocation0] sm:$0x1] %vm45, %v44
    %s47 = scalar_lea.vmem %s0, 8
    %v48 = vld [vmem:[%s47] sm:$0x1]
    %49 = vrot.lane.b32.xlu0 %v48, 64
    %v50 = vpop.permute.xlu0 %49
    %vm51 = vcmask 589312
    %52 = vst.msk [vmem:[#allocation0] sm:$0x1] %vm51, %v50
    %s53 = scalar_lea.vmem %s0, 7
    %v54 = vld [vmem:[%s53] sm:$0x1]
    %55 = vrot.lane.b32.xlu0 %v54, 56
    %v56 = vpop.permute.xlu0 %55
    %vm57 = vcmask 523712
    %58 = vst.msk [vmem:[#allocation0] sm:$0x1] %vm57, %v56
    %s59 = scalar_lea.vmem %s0, 6
    %v60 = vld [vmem:[%s59] sm:$0x1]
    %61 = vrot.lane.b32.xlu0 %v60, 48
    %v62 = vpop.permute.xlu0 %61
    %vm63 = vcmask 458112
    %64 = vst.msk [vmem:[#allocation0] sm:$0x1] %vm63, %v62
    %s65 = scalar_lea.vmem %s0, 5
    %v66 = vld [vmem:[%s65] sm:$0x1]
    %67 = vrot.lane.b32.xlu0 %v66, 40
    %v68 = vpop.permute.xlu0 %67
    %vm69 = vcmask 392512
    %70 = vst.msk [vmem:[#allocation0] sm:$0x1] %vm69, %v68
    %s71 = scalar_lea.vmem %s0, 4
    %v72 = vld [vmem:[%s71] sm:$0x1]
    %73 = vrot.lane.b32.xlu0 %v72, 32
    %v74 = vpop.permute.xlu0 %73
    %vm75 = vcmask 326912
    %76 = vst.msk [vmem:[#allocation0] sm:$0x1] %vm75, %v74
    %s77 = scalar_lea.vmem %s0, 3
    %v78 = vld [vmem:[%s77] sm:$0x1]
    %79 = vrot.lane.b32.xlu0 %v78, 24
    %v80 = vpop.permute.xlu0 %79
    %vm81 = vcmask 261312
    %82 = vst.msk [vmem:[#allocation0] sm:$0x1] %vm81, %v80
    %s83 = scalar_lea.vmem %s0, 2
    %v84 = vld [vmem:[%s83] sm:$0x1]
    %85 = vrot.lane.b32.xlu0 %v84, 16
    %v86 = vpop.permute.xlu0 %85
    %vm87 = vcmask 195712
    %88 = vst.msk [vmem:[#allocation0] sm:$0x1] %vm87, %v86
    %s89 = scalar_lea.vmem %s0, 1
    %v90 = vld [vmem:[%s89] sm:$0x1]
    %91 = vrot.lane.b32.xlu0 %v90, 8
    %v92 = vpop.permute.xlu0 %91
    %vm93 = vcmask 130112
    %94 = vst.msk [vmem:[#allocation0] sm:$0x1] %vm93, %v92
    %s96 = sshll.u32 1, 1
    %s97 = ssub.s32 %s96, 1
    %v99 = vld [vmem:[#allocation0] sm:%s97]
    %s100 = sshll.u32 1, 1
    %s101 = ssub.s32 %s100, 1
    %102 = vst [vmem:[%s1] sm:%s101] %v99

// kernel: tile.71
$region0: #{tile.71}
  #allocation0 [shape = 's32[1]{0}', space=sflag, size = 0x4, scoped, tag = 'scoped memory for tile.71']
  %s0 = inlined_call_operand.vmem [shape: f32[16], index: 0, kind: input, shape index: {}]
  %s1 = inlined_call_operand.vmem [shape: f32[8,16], index: 1, kind: output, shape index: {}]
  // Predicated region
  $region2: #{tile.71} parent=0 // pred_check
    _
  $region3: #{tile.71} parent=0 // pred_check_branch
    %3 = sbr.rel (0) target = $region5
  $region4: #{tile.71} parent=0 // pred_region
    _
  $region5: #{tile.71} parent=0 // pred_fallthru
    _
  %v4 = vld [vmem:[%s0] ss:$0 sm:$0xff]
  %5 = vst [vmem:[%s1] sm:$0xff] %v4

// kernel: tile.110
$region0: #{tile.110}
  %s0 = inlined_call_operand.vmem [shape: f32[8,16], index: 0, kind: input, shape index: {}]
  %s1 = inlined_call_operand.vmem [shape: f32[1,1,128], index: 1, kind: output, shape index: {}]
  $region1: #{tile.110} parent=0
    #allocation0 [shape = 'u8[4096]{0}', space=vmem, size = 0x1000, scoped, tag = 'scoped mem for output reshape']
    %v2 = vld [vmem:[%s0] sm:$0x1]
    %vm3 = vcmask 130048
    %4 = vst.msk [vmem:[#allocation0] sm:$0x1] %vm3, %v2
    %s5 = scalar_lea.vmem %s0, 7
    %v6 = vld [vmem:[%s5] sm:$0x1]
    %7 = vrot.lane.b32.xlu0 %v6, 112
    %v8 = vpop.permute.xlu0 %7
    %vm9 = vcmask 1048448
    %10 = vst.msk [vmem:[#allocation0] sm:$0x1] %vm9, %v8
    %s11 = scalar_lea.vmem %s0, 6
    %v12 = vld [vmem:[%s11] sm:$0x1]
    %13 = vrot.lane.b32.xlu0 %v12, 96
    %v14 = vpop.permute.xlu0 %13
    %vm15 = vcmask 917248
    %16 = vst.msk [vmem:[#allocation0] sm:$0x1] %vm15, %v14
    %s17 = scalar_lea.vmem %s0, 5
    %v18 = vld [vmem:[%s17] sm:$0x1]
    %19 = vrot.lane.b32.xlu0 %v18, 80
    %v20 = vpop.permute.xlu0 %19
    %vm21 = vcmask 786048
    %22 = vst.msk [vmem:[#allocation0] sm:$0x1] %vm21, %v20
    %s23 = scalar_lea.vmem %s0, 4
    %v24 = vld [vmem:[%s23] sm:$0x1]
    %25 = vrot.lane.b32.xlu0 %v24, 64
    %v26 = vpop.permute.xlu0 %25
    %vm27 = vcmask 654848
    %28 = vst.msk [vmem:[#allocation0] sm:$0x1] %vm27, %v26
    %s29 = scalar_lea.vmem %s0, 3
    %v30 = vld [vmem:[%s29] sm:$0x1]
    %31 = vrot.lane.b32.xlu0 %v30, 48
    %v32 = vpop.permute.xlu0 %31
    %vm33 = vcmask 523648
    %34 = vst.msk [vmem:[#allocation0] sm:$0x1] %vm33, %v32
    %s35 = scalar_lea.vmem %s0, 2
    %v36 = vld [vmem:[%s35] sm:$0x1]
    %37 = vrot.lane.b32.xlu0 %v36, 32
    %v38 = vpop.permute.xlu0 %37
    %vm39 = vcmask 392448
    %40 = vst.msk [vmem:[#allocation0] sm:$0x1] %vm39, %v38
    %s41 = scalar_lea.vmem %s0, 1
    %v42 = vld [vmem:[%s41] sm:$0x1]
    %43 = vrot.lane.b32.xlu0 %v42, 16
    %v44 = vpop.permute.xlu0 %43
    %vm45 = vcmask 261248
    %46 = vst.msk [vmem:[#allocation0] sm:$0x1] %vm45, %v44
    %s48 = sshll.u32 1, 1
    %s49 = ssub.s32 %s48, 1
    %v51 = vld [vmem:[#allocation0] sm:%s49]
    %s52 = sshll.u32 1, 1
    %s53 = ssub.s32 %s52, 1
    %54 = vst [vmem:[%s1] sm:%s53] %v51

// kernel: tile.79
$region0: #{tile.79}
  #allocation0 [shape = 's32[1]{0}', space=sflag, size = 0x4, scoped, tag = 'scoped memory for tile.79']
  %s0 = inlined_call_operand.vmem [shape: f32[32], index: 0, kind: input, shape index: {}]
  %s1 = inlined_call_operand.vmem [shape: f32[4,32], index: 1, kind: output, shape index: {}]
  // Predicated region
  $region2: #{tile.79} parent=0 // pred_check
    _
  $region3: #{tile.79} parent=0 // pred_check_branch
    %3 = sbr.rel (0) target = $region5
  $region4: #{tile.79} parent=0 // pred_region
    _
  $region5: #{tile.79} parent=0 // pred_fallthru
    _
  %v4 = vld [vmem:[%s0] ss:$0 sm:$0xff]
  %5 = vst [vmem:[%s1] sm:$0xf] %v4

// kernel: tile.112
$region0: #{tile.112}
  %s0 = inlined_call_operand.vmem [shape: f32[4,32], index: 0, kind: input, shape index: {}]
  %s1 = inlined_call_operand.vmem [shape: f32[1,1,128], index: 1, kind: output, shape index: {}]
  $region1: #{tile.112} parent=0
    #allocation0 [shape = 'u8[4096]{0}', space=vmem, size = 0x1000, scoped, tag = 'scoped mem for output reshape']
    #allocation1 [shape = 'u8[4096]{0}', space=vmem, size = 0x1000, scoped, tag = 'scoped mem for input reshape']
    %s3 = sshll.u32 1, 4
    %s4 = ssub.s32 %s3, 1
    %v5 = vld [vmem:[%s0] sm:%s4]
    %6 = vst [vmem:[#allocation1] sm:%s4] %v5
    %v7 = vld [vmem:[#allocation1] sm:$0x1]
    %vm8 = vcmask 261120
    %9 = vst.msk [vmem:[#allocation0] sm:$0x1] %vm8, %v7
    %s10 = scalar_lea.vmem [#allocation1], 3
    %v11 = vld [vmem:[%s10] sm:$0x1]
    %12 = vrot.lane.b32.xlu0 %v11, 96
    %v13 = vpop.permute.xlu0 %12
    %vm14 = vcmask 1048320
    %15 = vst.msk [vmem:[#allocation0] sm:$0x1] %vm14, %v13
    %s16 = scalar_lea.vmem [#allocation1], 2
    %v17 = vld [vmem:[%s16] sm:$0x1]
    %18 = vrot.lane.b32.xlu0 %v17, 64
    %v19 = vpop.permute.xlu0 %18
    %vm20 = vcmask 785920
    %21 = vst.msk [vmem:[#allocation0] sm:$0x1] %vm20, %v19
    %s22 = scalar_lea.vmem [#allocation1], 1
    %v23 = vld [vmem:[%s22] sm:$0x1]
    %24 = vrot.lane.b32.xlu0 %v23, 32
    %v25 = vpop.permute.xlu0 %24
    %vm26 = vcmask 523520
    %27 = vst.msk [vmem:[#allocation0] sm:$0x1] %vm26, %v25
    %s29 = sshll.u32 1, 1
    %s30 = ssub.s32 %s29, 1
    %v32 = vld [vmem:[#allocation0] sm:%s30]
    %s33 = sshll.u32 1, 1
    %s34 = ssub.s32 %s33, 1
    %35 = vst [vmem:[%s1] sm:%s34] %v32

// kernel: trunk_net_forward.1
$region0: #{trunk_net_forward.1}
  #allocation0 [shape = 'u32[]', space=smem, size = 0x4, offset = 0x4, fixed_abs, tag = 'smem constant byte address 0x4 - core index']
  #allocation1 [shape = 'u32[144,128]{1,0:T(1,128)}', space=vmem, size = 0x12000, scoped, tag = 'internal scratch']
  #allocation2 [shape = 'f32[36,18]{1,0:T(8,128)}', space=vmem, size = 0x5000, scoped, tag = 'scratch operand']
  #allocation3 [shape = 'f32[20,80]{1,0:T(8,128)}', space=vmem, size = 0x3000, scoped, tag = 'scratch operand']
  #allocation4 [shape = 'f32[12,96]{1,0:T(8,128)}', space=vmem, size = 0x2000, scoped, tag = 'scratch operand']
  %s0 = inlined_call_operand.vmem [shape: f32[2,32,16], index: 0, kind: input, shape index: {}]
  %s1 = inlined_call_operand.vmem [shape: f32[2,2], index: 1, kind: input, shape index: {}]
  %s2 = inlined_call_operand.vmem [shape: f32[7], index: 2, kind: input, shape index: {}]
  %s3 = inlined_call_operand.vmem [shape: f32[36,32], index: 3, kind: input, shape index: {}]
  %s4 = inlined_call_operand.vmem [shape: f32[44,34], index: 4, kind: input, shape index: {}]
  %s5 = inlined_call_operand.vmem [shape: f32[28,18], index: 5, kind: input, shape index: {}]
  %s6 = inlined_call_operand.vmem [shape: f32[32,10], index: 6, kind: input, shape index: {}]
  %s7 = inlined_call_operand.vmem [shape: f32[2,3,18,128], index: 7, kind: input, shape index: {}]
  %s8 = inlined_call_operand.vmem [shape: f32[2,1,128], index: 8, kind: input, shape index: {}]
  %s9 = inlined_call_operand.vmem [shape: f32[2,1,128], index: 9, kind: input, shape index: {}]
  %s10 = inlined_call_operand.vmem [shape: f32[2,3,80,128], index: 10, kind: input, shape index: {}]
  %s11 = inlined_call_operand.vmem [shape: f32[2,1,128], index: 11, kind: input, shape index: {}]
  %s12 = inlined_call_operand.vmem [shape: f32[2,1,128], index: 12, kind: input, shape index: {}]
  %s13 = inlined_call_operand.vmem [shape: f32[2,3,96,128], index: 13, kind: input, shape index: {}]
  %s14 = inlined_call_operand.vmem [shape: f32[2,1,128], index: 14, kind: input, shape index: {}]
  %s15 = inlined_call_operand.vmem [shape: f32[2,1,128], index: 15, kind: input, shape index: {}]
  %s16 = inlined_call_operand.vmem [shape: f32[2,2,64,128], index: 16, kind: input, shape index: {}]
  %s17 = inlined_call_operand.vmem [shape: f32[1,128], index: 17, kind: input, shape index: {}]
  %s18 = inlined_call_operand.vmem [shape: f32[128,32], index: 18, kind: input, shape index: {}]
  %s19 = inlined_call_operand.vmem [shape: f32[1,32], index: 19, kind: input, shape index: {}]
  %s20 = inlined_call_operand.hbm [shape: f32[2,32], index: 20, kind: output, shape index: {}]
  %s21 = sld [smem:[#allocation0]]
  $region98: #{trunk_net_forward.1} parent=0
    _
  %s23 = ssub.s32 1, %s21
  %s24 = scalar_select 0, %s23, %s21
  $region1: #{trunk_net_forward.1} parent=0
    #allocation5 [shape = 'u8[1024]{0}', space=smem, size = 0x400, scoped, tag = 'input window, operand 1, single buffered']
    #allocation6 [shape = 's32[1]{0}', space=sflag, size = 0x4, scoped, tag = 'scoped memory for trunk_net_forward.1']
    #allocation7 [shape = 's32[1]{0}', space=sflag, size = 0x4, scoped, tag = 'scoped memory for trunk_net_forward.1']
    #allocation8 [shape = 'u8[512]{0}', space=smem, size = 0x200, scoped, tag = 'input window, operand 2, single buffered']
    #allocation9 [shape = 's32[1]{0}', space=sflag, size = 0x4, scoped, tag = 'scoped memory for trunk_net_forward.1']
    #allocation10 [shape = 'u8[1024]{0}', space=vmem, size = 0x400, scoped, tag = 'output window, operand 0, single buffered']
    %25 = vsyncpa [#allocation7], 0
    %26 = vsyncpa [#allocation9], 0
    %27 = vsyncpa [#allocation6], 0
    // Predicated region
    $region2: #{trunk_net_forward.1} parent=1 // pred_check
      _
    $region3: #{trunk_net_forward.1} parent=1 // pred_check_branch
      %29 = sbr.rel (0) target = $region5
    $region4: #{trunk_net_forward.1} parent=1 // pred_region
      _
    $region5: #{trunk_net_forward.1} parent=1 // pred_fallthru
      _
    // Predicated region
    $region6: #{trunk_net_forward.1} parent=1 // pred_check
      _
    $region7: #{trunk_net_forward.1} parent=1 // pred_check_branch
      %31 = sbr.rel (0) target = $region9
    $region8: #{trunk_net_forward.1} parent=1 // pred_region
      %s33 = ssub.s32 32, 32
      %34 = vsyncadd [#allocation7], %s33
      %s36 = sshll.u32 %s1, 4
      %s37 = int_to_ptr.vmem [resolvable:$true] %s36
      %39 = dma.vmem_to_smem %s37, 32, [#allocation5], [#allocation7]
    $region9: #{trunk_net_forward.1} parent=1 // pred_fallthru
      _
    // Predicated region
    $region10: #{trunk_net_forward.1} parent=1 // pred_check
      _
    $region11: #{trunk_net_forward.1} parent=1 // pred_check_branch
      %41 = sbr.rel (0) target = $region13
    $region12: #{trunk_net_forward.1} parent=1 // pred_region
      %s43 = ssub.s32 16, 16
      %44 = vsyncadd [#allocation9], %s43
      %s46 = sshll.u32 %s2, 4
      %s47 = int_to_ptr.vmem [resolvable:$true] %s46
      %49 = dma.vmem_to_smem %s47, 16, [#allocation8], [#allocation9]
    $region13: #{trunk_net_forward.1} parent=1 // pred_fallthru
      _
    // Predicated region
    $region14: #{trunk_net_forward.1} parent=1 // pred_check
      _
    $region15: #{trunk_net_forward.1} parent=1 // pred_check_branch
      %51 = sbr.rel (0) target = $region17
    $region16: #{trunk_net_forward.1} parent=1 // pred_region
      _
    $region17: #{trunk_net_forward.1} parent=1 // pred_fallthru
      _
    // Predicated region
    $region18: #{trunk_net_forward.1} parent=1 // pred_check
      _
    $region19: #{trunk_net_forward.1} parent=1 // pred_check_branch
      %53 = sbr.rel (0) target = $region21
    $region20: #{trunk_net_forward.1} parent=1 // pred_region
      _
    $region21: #{trunk_net_forward.1} parent=1 // pred_fallthru
      _
    // Predicated region
    $region22: #{trunk_net_forward.1} parent=1 // pred_check
      _
    $region23: #{trunk_net_forward.1} parent=1 // pred_check_branch
      %55 = sbr.rel (0) target = $region25
    $region24: #{trunk_net_forward.1} parent=1 // pred_region
      _
    $region25: #{trunk_net_forward.1} parent=1 // pred_fallthru
      _
    // Predicated region
    $region26: #{trunk_net_forward.1} parent=1 // pred_check
      _
    $region27: #{trunk_net_forward.1} parent=1 // pred_check_branch
      %57 = sbr.rel (0) target = $region29
    $region28: #{trunk_net_forward.1} parent=1 // pred_region
      _
    $region29: #{trunk_net_forward.1} parent=1 // pred_fallthru
      _
    // Predicated region
    $region30: #{trunk_net_forward.1} parent=1 // pred_check
      _
    $region31: #{trunk_net_forward.1} parent=1 // pred_check_branch
      %59 = sbr.rel (0) target = $region33
    $region32: #{trunk_net_forward.1} parent=1 // pred_region
      _
    $region33: #{trunk_net_forward.1} parent=1 // pred_fallthru
      _
    // Predicated region
    $region34: #{trunk_net_forward.1} parent=1 // pred_check
      _
    $region35: #{trunk_net_forward.1} parent=1 // pred_check_branch
      %61 = sbr.rel (0) target = $region37
    $region36: #{trunk_net_forward.1} parent=1 // pred_region
      _
    $region37: #{trunk_net_forward.1} parent=1 // pred_fallthru
      _
    // Predicated region
    $region38: #{trunk_net_forward.1} parent=1 // pred_check
      _
    $region39: #{trunk_net_forward.1} parent=1 // pred_check_branch
      %63 = sbr.rel (0) target = $region41
    $region40: #{trunk_net_forward.1} parent=1 // pred_region
      _
    $region41: #{trunk_net_forward.1} parent=1 // pred_fallthru
      _
    // Predicated region
    $region42: #{trunk_net_forward.1} parent=1 // pred_check
      _
    $region43: #{trunk_net_forward.1} parent=1 // pred_check_branch
      %65 = sbr.rel (0) target = $region45
    $region44: #{trunk_net_forward.1} parent=1 // pred_region
      _
    $region45: #{trunk_net_forward.1} parent=1 // pred_fallthru
      _
    // Predicated region
    $region46: #{trunk_net_forward.1} parent=1 // pred_check
      _
    $region47: #{trunk_net_forward.1} parent=1 // pred_check_branch
      %67 = sbr.rel (0) target = $region49
    $region48: #{trunk_net_forward.1} parent=1 // pred_region
      _
    $region49: #{trunk_net_forward.1} parent=1 // pred_fallthru
      _
    // Predicated region
    $region50: #{trunk_net_forward.1} parent=1 // pred_check
      _
    $region51: #{trunk_net_forward.1} parent=1 // pred_check_branch
      %69 = sbr.rel (0) target = $region53
    $region52: #{trunk_net_forward.1} parent=1 // pred_region
      _
    $region53: #{trunk_net_forward.1} parent=1 // pred_fallthru
      _
    // Predicated region
    $region54: #{trunk_net_forward.1} parent=1 // pred_check
      _
    $region55: #{trunk_net_forward.1} parent=1 // pred_check_branch
      %71 = sbr.rel (0) target = $region57
    $region56: #{trunk_net_forward.1} parent=1 // pred_region
      _
    $region57: #{trunk_net_forward.1} parent=1 // pred_fallthru
      _
    // Predicated region
    $region58: #{trunk_net_forward.1} parent=1 // pred_check
      _
    $region59: #{trunk_net_forward.1} parent=1 // pred_check_branch
      %73 = sbr.rel (0) target = $region61
    $region60: #{trunk_net_forward.1} parent=1 // pred_region
      _
    $region61: #{trunk_net_forward.1} parent=1 // pred_fallthru
      _
    // Predicated region
    $region62: #{trunk_net_forward.1} parent=1 // pred_check
      _
    $region63: #{trunk_net_forward.1} parent=1 // pred_check_branch
      %75 = sbr.rel (0) target = $region65
    $region64: #{trunk_net_forward.1} parent=1 // pred_region
      _
    $region65: #{trunk_net_forward.1} parent=1 // pred_fallthru
      _
    // Predicated region
    $region66: #{trunk_net_forward.1} parent=1 // pred_check
      _
    $region67: #{trunk_net_forward.1} parent=1 // pred_check_branch
      %77 = sbr.rel (0) target = $region69
    $region68: #{trunk_net_forward.1} parent=1 // pred_region
      _
    $region69: #{trunk_net_forward.1} parent=1 // pred_fallthru
      _
    // Predicated region
    $region70: #{trunk_net_forward.1} parent=1 // pred_check
      _
    $region71: #{trunk_net_forward.1} parent=1 // pred_check_branch
      %79 = sbr.rel (0) target = $region73
    $region72: #{trunk_net_forward.1} parent=1 // pred_region
      _
    $region73: #{trunk_net_forward.1} parent=1 // pred_fallthru
      _
    // Predicated region
    $region74: #{trunk_net_forward.1} parent=1 // pred_check
      _
    $region75: #{trunk_net_forward.1} parent=1 // pred_check_branch
      %81 = sbr.rel (0) target = $region77
    $region76: #{trunk_net_forward.1} parent=1 // pred_region
      _
    $region77: #{trunk_net_forward.1} parent=1 // pred_fallthru
      _
    // Predicated region
    $region78: #{trunk_net_forward.1} parent=1 // pred_check
      _
    $region79: #{trunk_net_forward.1} parent=1 // pred_check_branch
      %83 = sbr.rel (0) target = $region81
    $region80: #{trunk_net_forward.1} parent=1 // pred_region
      _
    $region81: #{trunk_net_forward.1} parent=1 // pred_fallthru
      _
    // Predicated region
    $region82: #{trunk_net_forward.1} parent=1 // pred_check
      _
    $region83: #{trunk_net_forward.1} parent=1 // pred_check_branch
      %85 = sbr.rel (0) target = $region85
    $region84: #{trunk_net_forward.1} parent=1 // pred_region
      %86 = dma.done [#allocation7], 32
    $region85: #{trunk_net_forward.1} parent=1 // pred_fallthru
      _
    // Predicated region
    $region86: #{trunk_net_forward.1} parent=1 // pred_check
      _
    $region87: #{trunk_net_forward.1} parent=1 // pred_check_branch
      %88 = sbr.rel (0) target = $region89
    $region88: #{trunk_net_forward.1} parent=1 // pred_region
      %89 = dma.done [#allocation9], 16
    $region89: #{trunk_net_forward.1} parent=1 // pred_fallthru
      _
    %90 = sfence
    %vm91 = vcmask 146432
    %92 = vst.msk [vmem:[#allocation2] sm:$0xff] %vm91, 0.0
    %93 = vst.msk [vmem:[#allocation2 + $0x8] sm:$0xff] %vm91, 0.0
    %94 = vst.msk [vmem:[#allocation2 + $0x10] sm:$0xff] %vm91, 0.0
    %95 = vst.msk [vmem:[#allocation2 + $0x18] sm:$0xff] %vm91, 0.0
    %vm96 = vcmask 142336
    %97 = vst.msk [vmem:[#allocation2 + $0x20] sm:$0xf] %vm96, 0.0
    %vm98 = vcmask 654336
    %99 = vst.msk [vmem:[#allocation3] sm:$0xff] %vm98, 0.0
    %100 = vst.msk [vmem:[#allocation3 + $0x8] sm:$0xff] %vm98, 0.0
    %vm101 = vcmask 650240
    %102 = vst.msk [vmem:[#allocation3 + $0x10] sm:$0xf] %vm101, 0.0
    %vm103 = vcmask 785408
    %104 = vst.msk [vmem:[#allocation4] sm:$0xff] %vm103, 0.0
    %vm105 = vcmask 781312
    %106 = vst.msk [vmem:[#allocation4 + $0x8] sm:$0xf] %vm105, 0.0
    %s107 = sld [smem:[#allocation5]]
    %s108 = sld [smem:[#allocation5 + $0x1]]
    %v109 = vld [vmem:[%s0] sm:$0xff]
    %v110 = vld [vmem:[%s0 + $0x8] sm:$0xff]
    %v111 = vld [vmem:[%s0 + $0x10] sm:$0xff]
    %v112 = vld [vmem:[%s0 + $0x18] sm:$0xff]
    %v113 = vstv %s107
    %v114 = vmul.f32 %v109, %v113
    %v115 = vmul.f32 %v110, %v113
    %v116 = vmul.f32 %v111, %v113
    %v117 = vmul.f32 %v112, %v113
    %v118 = vstv %s108
    %v119 = vadd.f32 %v114, %v118
    %v120 = vadd.f32 %v115, %v118
    %v121 = vadd.f32 %v116, %v118
    %v122 = vadd.f32 %v117, %v118
    %v123 = vld [vmem:[%s3] sm:$0xff]
    %v124 = vld [vmem:[%s3 + $0x8] sm:$0xff]
    %v125 = vld [vmem:[%s3 + $0x10] sm:$0xff]
    %v126 = vld [vmem:[%s3 + $0x18] sm:$0xff]
    %v127 = vld [vmem:[%s3 + $0x20] sm:$0xf]
    %vm128 = vcmask 261120
    %v130 = vsel %vm128, %v123, 0
    %v133 = vsel %vm128, %v124, 0
    %v136 = vsel %vm128, %v125, 0
    %v139 = vsel %vm128, %v126, 0
    %v142 = vsel %vm128, %v127, 0
    %144 = vmatprep.subr.mxu0 0.0
    %145 = vmatpush1.msra.mxu0 0.0
    %146 = vmatprep.subr.mxu0 0.0
    %147 = vmatpush1.msra.mxu0 0.0
    %148 = vmatprep.subr.mxu0 0.0
    %149 = vmatpush1.msra.mxu0 0.0
    %150 = vmatprep.subr.mxu0 0.0
    %151 = vmatpush1.msra.mxu0 0.0
    %152 = vmatprep.subr.mxu0 0.0
    %153 = vmatpush1.msra.mxu0 0.0
    %154 = vmatprep.subr.mxu0 0.0
    %155 = vmatpush1.msra.mxu0 0.0
    %156 = vmatprep.subr.mxu0 0.0
    %157 = vmatpush1.msra.mxu0 0.0
    %158 = vmatprep.subr.mxu0 0.0
    %159 = vmatpush1.msra.mxu0 0.0
    %160 = vmatprep.subr.mxu0 0.0
    %161 = vmatpush1.msra.mxu0 0.0
    %162 = vmatprep.subr.mxu0 0.0
    %163 = vmatpush1.msra.mxu0 0.0
    %164 = vmatprep.subr.mxu0 0.0
    %165 = vmatpush1.msra.mxu0 0.0
    %166 = vmatprep.subr.mxu0 0.0
    %167 = vmatpush1.msra.mxu0 0.0
    %168 = vmatprep.subr.mxu0 0.0
    %169 = vmatpush1.msra.mxu0 %v122
    %170 = vmatprep.subr.mxu0 0.0
    %171 = vmatpush1.msra.mxu0 %v121
    %172 = vmatprep.subr.mxu0 0.0
    %173 = vmatpush1.msra.mxu0 %v120
    %174 = vmatprep.subr.mxu0 0.0
    %175 = vmatpush1.msra.mxu0 %v119
    %176 = vmatprep.subr.mxu0 0.0
    %177 = vmatpush2.msra.mxu0 0.0
    %178 = vmatprep.subr.mxu0 0.0
    %179 = vmatpush2.msra.mxu0 0.0
    %180 = vmatprep.subr.mxu0 0.0
    %181 = vmatpush2.msra.mxu0 0.0
    %182 = vmatprep.subr.mxu0 0.0
    %183 = vmatpush2.msra.mxu0 0.0
    %184 = vmatprep.subr.mxu0 0.0
    %185 = vmatpush2.msra.mxu0 0.0
    %186 = vmatprep.subr.mxu0 0.0
    %187 = vmatpush2.msra.mxu0 0.0
    %188 = vmatprep.subr.mxu0 0.0
    %189 = vmatpush2.msra.mxu0 0.0
    %190 = vmatprep.subr.mxu0 0.0
    %191 = vmatpush2.msra.mxu0 0.0
    %192 = vmatprep.subr.mxu0 0.0
    %193 = vmatpush2.msra.mxu0 0.0
    %194 = vmatprep.subr.mxu0 0.0
    %195 = vmatpush2.msra.mxu0 0.0
    %196 = vmatprep.subr.mxu0 0.0
    %197 = vmatpush2.msra.mxu0 0.0
    %198 = vmatprep.subr.mxu0 0.0
    %199 = vmatpush2.msra.mxu0 0.0
    %200 = vmatprep.subr.mxu0 0.0
    %201 = vmatpush2.msra.mxu0 0.0
    %202 = vmatprep.subr.mxu0 0.0
    %203 = vmatpush2.msra.mxu0 0.0
    %204 = vmatprep.subr.mxu0 0.0
    %205 = vmatpush2.msra.mxu0 0.0
    %206 = vmatprep.subr.mxu0 0.0
    %207 = vmatpush2.msra.mxu0 0.0
    %208 = vmatprep.mubr.f32.mxu0 0.0
    %209 = vmatmul.mubr.f32.gmra.mxu0 %v130
    %v210 = vpop.f32.mrf.mxu0
    %v211 = vadd.f32 0.0, %v210
    %v212 = vpop.f32.mrf.mxu0
    %213 = vmatprep.mubr.f32.mxu0 0.0
    %214 = vmatmul.mubr.f32.gmra.mxu0 %v133
    %v215 = vpop.f32.mrf.mxu0
    %v216 = vadd.f32 0.0, %v215
    %v217 = vpop.f32.mrf.mxu0
    %218 = vmatprep.mubr.f32.mxu0 0.0
    %219 = vmatmul.mubr.f32.gmra.mxu0 %v136
    %v220 = vpop.f32.mrf.mxu0
    %v221 = vadd.f32 0.0, %v220
    %v222 = vpop.f32.mrf.mxu0
    %223 = vmatprep.mubr.f32.mxu0 0.0
    %224 = vmatmul.mubr.f32.gmra.mxu0 %v139
    %v225 = vpop.f32.mrf.mxu0
    %v226 = vadd.f32 0.0, %v225
    %v227 = vpop.f32.mrf.mxu0
    %228 = vmatprep.mubr.f32.mxu0 0.0
    %229 = vmatmul.mubr.f32.gmra.mxu0 %v142
    %v230 = vpop.f32.mrf.mxu0
    %v231 = vadd.f32 0.0, %v230
    %v232 = vpop.f32.mrf.mxu0
    %233 = vdwg.mxu0
    %vm234 = vcmask 130048
    %235 = vst.msk [vmem:[#allocation2] sm:$0xff] %vm234, %v211
    %236 = vst.msk [vmem:[#allocation2 + $0x8] sm:$0xff] %vm234, %v216
    %237 = vst.msk [vmem:[#allocation2 + $0x10] sm:$0xff] %vm234, %v221
    %238 = vst.msk [vmem:[#allocation2 + $0x18] sm:$0xff] %vm234, %v226
    %vm239 = vcmask 125952
    %240 = vst.msk [vmem:[#allocation2 + $0x20] sm:$0xf] %vm239, %v231
    %s241 = sld [smem:[#allocation8]]
    %v242 = vld [vmem:[#allocation2] sm:$0xff]
    %v243 = vld [vmem:[#allocation2 + $0x8] sm:$0xff]
    %v244 = vld [vmem:[#allocation2 + $0x10] sm:$0xff]
    %v245 = vld [vmem:[#allocation2 + $0x18] sm:$0xff]
    %v246 = vld [vmem:[#allocation2 + $0x20] sm:$0x3]
    %v247 = vld [vmem:[%s7] sm:$0xff]
    %v248 = vld [vmem:[%s7 + $0x8] sm:$0xff]
    %v249 = vld [vmem:[%s7 + $0x10] sm:$0x3]
    %v250 = vld [vmem:[#allocation2 + $0x1] sm:$0xff]
    %v251 = vld [vmem:[#allocation2 + $0x9] sm:$0xff]
    %v252 = vld [vmem:[#allocation2 + $0x11] sm:$0xff]
    %v253 = vld [vmem:[#allocation2 + $0x19] sm:$0xff]
    %v254 = vld [vmem:[#allocation2 + $0x21] sm:$0x3]
    %s255 = scalar_lea.vmem %s7, 24
    %v256 = vld [vmem:[%s255] sm:$0xff]
    %v257 = vld [vmem:[%s255 + $0x8] sm:$0xff]
    %v258 = vld [vmem:[%s255 + $0x10] sm:$0x3]
    %v260 = vsel %vm91, %v250, 0
    %v263 = vsel %vm91, %v251, 0
    %v266 = vsel %vm91, %v252, 0
    %v269 = vsel %vm91, %v253, 0
    %v272 = vsel %vm91, %v254, 0
    %vm274 = vcmask 1041408
    %v276 = vsel %vm274, %v258, 0
    %278 = vmatprep.subr.mxu0 0.0
    %279 = vmatpush1.msra.mxu0 0.0
    %280 = vmatprep.subr.mxu0 0.0
    %281 = vmatpush1.msra.mxu0 0.0
    %282 = vmatprep.subr.mxu0 0.0
    %283 = vmatpush1.msra.mxu0 0.0
    %284 = vmatprep.subr.mxu0 0.0
    %285 = vmatpush1.msra.mxu0 0.0
    %286 = vmatprep.subr.mxu0 0.0
    %287 = vmatpush1.msra.mxu0 0.0
    %288 = vmatprep.subr.mxu0 0.0
    %289 = vmatpush1.msra.mxu0 0.0
    %290 = vmatprep.subr.mxu0 0.0
    %291 = vmatpush1.msra.mxu0 0.0
    %292 = vmatprep.subr.mxu0 0.0
    %293 = vmatpush1.msra.mxu0 0.0
    %294 = vmatprep.subr.mxu0 0.0
    %295 = vmatpush1.msra.mxu0 0.0
    %296 = vmatprep.subr.mxu0 0.0
    %297 = vmatpush1.msra.mxu0 0.0
    %298 = vmatprep.subr.mxu0 0.0
    %299 = vmatpush1.msra.mxu0 0.0
    %300 = vmatprep.subr.mxu0 0.0
    %301 = vmatpush1.msra.mxu0 0.0
    %302 = vmatprep.subr.mxu0 0.0
    %303 = vmatpush1.msra.mxu0 0.0
    %304 = vmatprep.subr.mxu0 0.0
    %305 = vmatpush1.msra.mxu0 %v276
    %306 = vmatprep.subr.mxu0 0.0
    %307 = vmatpush1.msra.mxu0 %v257
    %308 = vmatprep.subr.mxu0 0.0
    %309 = vmatpush1.msra.mxu0 %v256
    %310 = vmatprep.subr.mxu0 0.0
    %311 = vmatpush2.msra.mxu0 0.0
    %312 = vmatprep.subr.mxu0 0.0
    %313 = vmatpush2.msra.mxu0 0.0
    %314 = vmatprep.subr.mxu0 0.0
    %315 = vmatpush2.msra.mxu0 0.0
    %316 = vmatprep.subr.mxu0 0.0
    %317 = vmatpush2.msra.mxu0 0.0
    %318 = vmatprep.subr.mxu0 0.0
    %319 = vmatpush2.msra.mxu0 0.0
    %320 = vmatprep.subr.mxu0 0.0
    %321 = vmatpush2.msra.mxu0 0.0
    %322 = vmatprep.subr.mxu0 0.0
    %323 = vmatpush2.msra.mxu0 0.0
    %324 = vmatprep.subr.mxu0 0.0
    %325 = vmatpush2.msra.mxu0 0.0
    %326 = vmatprep.subr.mxu0 0.0
    %327 = vmatpush2.msra.mxu0 0.0
    %328 = vmatprep.subr.mxu0 0.0
    %329 = vmatpush2.msra.mxu0 0.0
    %330 = vmatprep.subr.mxu0 0.0
    %331 = vmatpush2.msra.mxu0 0.0
    %332 = vmatprep.subr.mxu0 0.0
    %333 = vmatpush2.msra.mxu0 0.0
    %334 = vmatprep.subr.mxu0 0.0
    %335 = vmatpush2.msra.mxu0 0.0
    %336 = vmatprep.subr.mxu0 0.0
    %337 = vmatpush2.msra.mxu0 0.0
    %338 = vmatprep.subr.mxu0 0.0
    %339 = vmatpush2.msra.mxu0 0.0
    %340 = vmatprep.subr.mxu0 0.0
    %341 = vmatpush2.msra.mxu0 0.0
    %342 = vmatprep.mubr.f32.mxu0 0.0
    %343 = vmatmul.mubr.f32.gmra.mxu0 %v260
    %v344 = vpop.f32.mrf.mxu0
    %v345 = vadd.f32 0.0, %v344
    %v346 = vpop.f32.mrf.mxu0
    %347 = vmatprep.mubr.f32.mxu0 0.0
    %348 = vmatmul.mubr.f32.gmra.mxu0 %v263
    %v349 = vpop.f32.mrf.mxu0
    %v350 = vadd.f32 0.0, %v349
    %v351 = vpop.f32.mrf.mxu0
    %352 = vmatprep.mubr.f32.mxu0 0.0
    %353 = vmatmul.mubr.f32.gmra.mxu0 %v266
    %v354 = vpop.f32.mrf.mxu0
    %v355 = vadd.f32 0.0, %v354
    %v356 = vpop.f32.mrf.mxu0
    %357 = vmatprep.mubr.f32.mxu0 0.0
    %358 = vmatmul.mubr.f32.gmra.mxu0 %v269
    %v359 = vpop.f32.mrf.mxu0
    %v360 = vadd.f32 0.0, %v359
    %v361 = vpop.f32.mrf.mxu0
    %362 = vmatprep.mubr.f32.mxu0 0.0
    %363 = vmatmul.mubr.f32.gmra.mxu0 %v272
    %v364 = vpop.f32.mrf.mxu0
    %v365 = vadd.f32 0.0, %v364
    %v366 = vpop.f32.mrf.mxu0
    %367 = vdwg.mxu0
    %v369 = vsel %vm91, %v242, 0
    %v372 = vsel %vm91, %v243, 0
    %v375 = vsel %vm91, %v244, 0
    %v378 = vsel %vm91, %v245, 0
    %v381 = vsel %vm91, %v246, 0
    %v384 = vsel %vm274, %v249, 0
    %386 = vmatprep.subr.mxu0 0.0
    %387 = vmatpush1.msra.mxu0 0.0
    %388 = vmatprep.subr.mxu0 0.0
    %389 = vmatpush1.msra.mxu0 0.0
    %390 = vmatprep.subr.mxu0 0.0
    %391 = vmatpush1.msra.mxu0 0.0
    %392 = vmatprep.subr.mxu0 0.0
    %393 = vmatpush1.msra.mxu0 0.0
    %394 = vmatprep.subr.mxu0 0.0
    %395 = vmatpush1.msra.mxu0 0.0
    %396 = vmatprep.subr.mxu0 0.0
    %397 = vmatpush1.msra.mxu0 0.0
    %398 = vmatprep.subr.mxu0 0.0
    %399 = vmatpush1.msra.mxu0 0.0
    %400 = vmatprep.subr.mxu0 0.0
    %401 = vmatpush1.msra.mxu0 0.0
    %402 = vmatprep.subr.mxu0 0.0
    %403 = vmatpush1.msra.mxu0 0.0
    %404 = vmatprep.subr.mxu0 0.0
    %405 = vmatpush1.msra.mxu0 0.0
    %406 = vmatprep.subr.mxu0 0.0
    %407 = vmatpush1.msra.mxu0 0.0
    %408 = vmatprep.subr.mxu0 0.0
    %409 = vmatpush1.msra.mxu0 0.0
    %410 = vmatprep.subr.mxu0 0.0
    %411 = vmatpush1.msra.mxu0 0.0
    %412 = vmatprep.subr.mxu0 0.0
    %413 = vmatpush1.msra.mxu0 %v384
    %414 = vmatprep.subr.mxu0 0.0
    %415 = vmatpush1.msra.mxu0 %v248
    %416 = vmatprep.subr.mxu0 0.0
    %417 = vmatpush1.msra.mxu0 %v247
    %418 = vmatprep.subr.mxu0 0.0
    %419 = vmatpush2.msra.mxu0 0.0
    %420 = vmatprep.subr.mxu0 0.0
    %421 = vmatpush2.msra.mxu0 0.0
    %422 = vmatprep.subr.mxu0 0.0
    %423 = vmatpush2.msra.mxu0 0.0
    %424 = vmatprep.subr.mxu0 0.0
    %425 = vmatpush2.msra.mxu0 0.0
    %426 = vmatprep.subr.mxu0 0.0
    %427 = vmatpush2.msra.mxu0 0.0
    %428 = vmatprep.subr.mxu0 0.0
    %429 = vmatpush2.msra.mxu0 0.0
    %430 = vmatprep.subr.mxu0 0.0
    %431 = vmatpush2.msra.mxu0 0.0
    %432 = vmatprep.subr.mxu0 0.0
    %433 = vmatpush2.msra.mxu0 0.0
    %434 = vmatprep.subr.mxu0 0.0
    %435 = vmatpush2.msra.mxu0 0.0
    %436 = vmatprep.subr.mxu0 0.0
    %437 = vmatpush2.msra.mxu0 0.0
    %438 = vmatprep.subr.mxu0 0.0
    %439 = vmatpush2.msra.mxu0 0.0
    %440 = vmatprep.subr.mxu0 0.0
    %441 = vmatpush2.msra.mxu0 0.0
    %442 = vmatprep.subr.mxu0 0.0
    %443 = vmatpush2.msra.mxu0 0.0
    %444 = vmatprep.subr.mxu0 0.0
    %445 = vmatpush2.msra.mxu0 0.0
    %446 = vmatprep.subr.mxu0 0.0
    %447 = vmatpush2.msra.mxu0 0.0
    %448 = vmatprep.subr.mxu0 0.0
    %449 = vmatpush2.msra.mxu0 0.0
    %450 = vmatprep.mubr.f32.mxu0 0.0
    %451 = vmatmul.mubr.f32.gmra.mxu0 %v369
    %v452 = vpop.f32.mrf.mxu0
    %v453 = vadd.f32 %v345, %v452
    %v454 = vpop.f32.mrf.mxu0
    %455 = vmatprep.mubr.f32.mxu0 0.0
    %456 = vmatmul.mubr.f32.gmra.mxu0 %v372
    %v457 = vpop.f32.mrf.mxu0
    %v458 = vadd.f32 %v350, %v457
    %v459 = vpop.f32.mrf.mxu0
    %460 = vmatprep.mubr.f32.mxu0 0.0
    %461 = vmatmul.mubr.f32.gmra.mxu0 %v375
    %v462 = vpop.f32.mrf.mxu0
    %v463 = vadd.f32 %v355, %v462
    %v464 = vpop.f32.mrf.mxu0
    %465 = vmatprep.mubr.f32.mxu0 0.0
    %466 = vmatmul.mubr.f32.gmra.mxu0 %v378
    %v467 = vpop.f32.mrf.mxu0
    %v468 = vadd.f32 %v360, %v467
    %v469 = vpop.f32.mrf.mxu0
    %470 = vmatprep.mubr.f32.mxu0 0.0
    %471 = vmatmul.mubr.f32.gmra.mxu0 %v381
    %v472 = vpop.f32.mrf.mxu0
    %v473 = vadd.f32 %v365, %v472
    %v474 = vpop.f32.mrf.mxu0
    %475 = vdwg.mxu0
    %v476 = vld [vmem:[#allocation2 + $0x2] sm:$0xff]
    %v477 = vld [vmem:[#allocation2 + $0xa] sm:$0xff]
    %v478 = vld [vmem:[#allocation2 + $0x12] sm:$0xff]
    %v479 = vld [vmem:[#allocation2 + $0x1a] sm:$0xff]
    %v480 = vld [vmem:[#allocation2 + $0x22] sm:$0x3]
    %s481 = scalar_lea.vmem %s7, 48
    %v482 = vld [vmem:[%s481] sm:$0xff]
    %v483 = vld [vmem:[%s481 + $0x8] sm:$0xff]
    %v484 = vld [vmem:[%s481 + $0x10] sm:$0x3]
    %v486 = vsel %vm91, %v476, 0
    %v489 = vsel %vm91, %v477, 0
    %v492 = vsel %vm91, %v478, 0
    %v495 = vsel %vm91, %v479, 0
    %v498 = vsel %vm91, %v480, 0
    %v501 = vsel %vm274, %v484, 0
    %503 = vmatprep.subr.mxu0 0.0
    %504 = vmatpush1.msra.mxu0 0.0
    %505 = vmatprep.subr.mxu0 0.0
    %506 = vmatpush1.msra.mxu0 0.0
    %507 = vmatprep.subr.mxu0 0.0
    %508 = vmatpush1.msra.mxu0 0.0
    %509 = vmatprep.subr.mxu0 0.0
    %510 = vmatpush1.msra.mxu0 0.0
    %511 = vmatprep.subr.mxu0 0.0
    %512 = vmatpush1.msra.mxu0 0.0
    %513 = vmatprep.subr.mxu0 0.0
    %514 = vmatpush1.msra.mxu0 0.0
    %515 = vmatprep.subr.mxu0 0.0
    %516 = vmatpush1.msra.mxu0 0.0
    %517 = vmatprep.subr.mxu0 0.0
    %518 = vmatpush1.msra.mxu0 0.0
    %519 = vmatprep.subr.mxu0 0.0
    %520 = vmatpush1.msra.mxu0 0.0
    %521 = vmatprep.subr.mxu0 0.0
    %522 = vmatpush1.msra.mxu0 0.0
    %523 = vmatprep.subr.mxu0 0.0
    %524 = vmatpush1.msra.mxu0 0.0
    %525 = vmatprep.subr.mxu0 0.0
    %526 = vmatpush1.msra.mxu0 0.0
    %527 = vmatprep.subr.mxu0 0.0
    %528 = vmatpush1.msra.mxu0 0.0
    %529 = vmatprep.subr.mxu0 0.0
    %530 = vmatpush1.msra.mxu0 %v501
    %531 = vmatprep.subr.mxu0 0.0
    %532 = vmatpush1.msra.mxu0 %v483
    %533 = vmatprep.subr.mxu0 0.0
    %534 = vmatpush1.msra.mxu0 %v482
    %535 = vmatprep.subr.mxu0 0.0
    %536 = vmatpush2.msra.mxu0 0.0
    %537 = vmatprep.subr.mxu0 0.0
    %538 = vmatpush2.msra.mxu0 0.0
    %539 = vmatprep.subr.mxu0 0.0
    %540 = vmatpush2.msra.mxu0 0.0
    %541 = vmatprep.subr.mxu0 0.0
    %542 = vmatpush2.msra.mxu0 0.0
    %543 = vmatprep.subr.mxu0 0.0
    %544 = vmatpush2.msra.mxu0 0.0
    %545 = vmatprep.subr.mxu0 0.0
    %546 = vmatpush2.msra.mxu0 0.0
    %547 = vmatprep.subr.mxu0 0.0
    %548 = vmatpush2.msra.mxu0 0.0
    %549 = vmatprep.subr.mxu0 0.0
    %550 = vmatpush2.msra.mxu0 0.0
    %551 = vmatprep.subr.mxu0 0.0
    %552 = vmatpush2.msra.mxu0 0.0
    %553 = vmatprep.subr.mxu0 0.0
    %554 = vmatpush2.msra.mxu0 0.0
    %555 = vmatprep.subr.mxu0 0.0
    %556 = vmatpush2.msra.mxu0 0.0
    %557 = vmatprep.subr.mxu0 0.0
    %558 = vmatpush2.msra.mxu0 0.0
    %559 = vmatprep.subr.mxu0 0.0
    %560 = vmatpush2.msra.mxu0 0.0
    %561 = vmatprep.subr.mxu0 0.0
    %562 = vmatpush2.msra.mxu0 0.0
    %563 = vmatprep.subr.mxu0 0.0
    %564 = vmatpush2.msra.mxu0 0.0
    %565 = vmatprep.subr.mxu0 0.0
    %566 = vmatpush2.msra.mxu0 0.0
    %567 = vmatprep.mubr.f32.mxu0 0.0
    %568 = vmatmul.mubr.f32.gmra.mxu0 %v486
    %v569 = vpop.f32.mrf.mxu0
    %v570 = vadd.f32 0.0, %v569
    %v571 = vpop.f32.mrf.mxu0
    %572 = vmatprep.mubr.f32.mxu0 0.0
    %573 = vmatmul.mubr.f32.gmra.mxu0 %v489
    %v574 = vpop.f32.mrf.mxu0
    %v575 = vadd.f32 0.0, %v574
    %v576 = vpop.f32.mrf.mxu0
    %577 = vmatprep.mubr.f32.mxu0 0.0
    %578 = vmatmul.mubr.f32.gmra.mxu0 %v492
    %v579 = vpop.f32.mrf.mxu0
    %v580 = vadd.f32 0.0, %v579
    %v581 = vpop.f32.mrf.mxu0
    %582 = vmatprep.mubr.f32.mxu0 0.0
    %583 = vmatmul.mubr.f32.gmra.mxu0 %v495
    %v584 = vpop.f32.mrf.mxu0
    %v585 = vadd.f32 0.0, %v584
    %v586 = vpop.f32.mrf.mxu0
    %587 = vmatprep.mubr.f32.mxu0 0.0
    %588 = vmatmul.mubr.f32.gmra.mxu0 %v498
    %v589 = vpop.f32.mrf.mxu0
    %v590 = vadd.f32 0.0, %v589
    %v591 = vpop.f32.mrf.mxu0
    %592 = vdwg.mxu0
    %v593 = vadd.f32 %v453, %v570
    %v594 = vadd.f32 %v458, %v575
    %v595 = vadd.f32 %v463, %v580
    %v596 = vadd.f32 %v468, %v585
    %v597 = vadd.f32 %v473, %v590
    %v598 = vld [vmem:[%s8] sm:$0x1]
    %v600 = vlaneseq
    %v601 = vshrl.u32 %v600, 7
    %v602 = vsub.s32 0, %v601
    %v603 = vrot.slane %v598, %v602
    %v605 = vmul.f32 %v593, %v603
    %v606 = vmul.f32 %v594, %v603
    %v607 = vmul.f32 %v595, %v603
    %v608 = vmul.f32 %v596, %v603
    %v609 = vmul.f32 %v597, %v603
    %v610 = vld [vmem:[%s9] sm:$0x1]
    %v612 = vlaneseq
    %v613 = vshrl.u32 %v612, 7
    %v614 = vsub.s32 0, %v613
    %v615 = vrot.slane %v610, %v614
    %v617 = vadd.f32 %v605, %v615
    %v618 = vadd.f32 %v606, %v615
    %v619 = vadd.f32 %v607, %v615
    %v620 = vadd.f32 %v608, %v615
    %v621 = vadd.f32 %v609, %v615
    %v622 = vstv %s241
    %v623 = vmul.f32 %v622, %v617
    %v624 = vmul.f32 %v622, %v618
    %v625 = vmul.f32 %v622, %v619
    %v626 = vmul.f32 %v622, %v620
    %v627 = vmul.f32 %v622, %v621
    %v628 = vxor.u32 %v623, 2147483648
    %v629 = vxor.u32 %v624, 2147483648
    %v630 = vxor.u32 %v625, 2147483648
    %v631 = vxor.u32 %v626, 2147483648
    %v632 = vxor.u32 %v627, 2147483648
    %v633 = vmul.f32 %v628, 1.442695
    %v634 = vpow.pop %v633
    %v635 = vmul.f32 %v629, 1.442695
    %v636 = vpow.pop %v635
    %v637 = vmul.f32 %v630, 1.442695
    %v638 = vpow.pop %v637
    %v639 = vmul.f32 %v631, 1.442695
    %v640 = vpow.pop %v639
    %v641 = vmul.f32 %v632, 1.442695
    %v642 = vpow.pop %v641
    %v643 = vadd.f32 %v634, 1.0
    %v644 = vadd.f32 %v636, 1.0
    %v645 = vadd.f32 %v638, 1.0
    %v646 = vadd.f32 %v640, 1.0
    %v647 = vadd.f32 %v642, 1.0
    %v648 = vrcp.pop %v643
    %v649 = vmul.f32 1.0, %v648
    %v650 = vrcp.pop %v644
    %v651 = vmul.f32 1.0, %v650
    %v652 = vrcp.pop %v645
    %v653 = vmul.f32 1.0, %v652
    %v654 = vrcp.pop %v646
    %v655 = vmul.f32 1.0, %v654
    %v656 = vrcp.pop %v647
    %v657 = vmul.f32 1.0, %v656
    %v658 = vmul.f32 %v617, %v649
    %v659 = vmul.f32 %v618, %v651
    %v660 = vmul.f32 %v619, %v653
    %v661 = vmul.f32 %v620, %v655
    %v662 = vmul.f32 %v621, %v657
    %668 = vrot.lane.b32.xlu0 %v658, 64
    %v669 = vpop.permute.xlu0 %668
    %670 = vrot.lane.b32.xlu0 %v659, 64
    %v671 = vpop.permute.xlu0 %670
    %672 = vrot.lane.b32.xlu0 %v660, 64
    %v673 = vpop.permute.xlu0 %672
    %674 = vrot.lane.b32.xlu0 %v661, 64
    %v675 = vpop.permute.xlu0 %674
    %676 = vrot.lane.b32.xlu0 %v662, 64
    %v677 = vpop.permute.xlu0 %676
    %v683 = vmax.f32 %v658, %v669
    %v684 = vmax.f32 %v659, %v671
    %v685 = vmax.f32 %v660, %v673
    %v686 = vmax.f32 %v661, %v675
    %v687 = vmax.f32 %v662, %v677
    %v688 = vld [vmem:[%s4] sm:$0xff]
    %v689 = vld [vmem:[%s4 + $0x8] sm:$0xff]
    %v690 = vld [vmem:[%s4 + $0x10] sm:$0xff]
    %v691 = vld [vmem:[%s4 + $0x18] sm:$0xff]
    %v692 = vld [vmem:[%s4 + $0x20] sm:$0xff]
    %v693 = vld [vmem:[%s4 + $0x28] sm:$0xf]
    %vm694 = vcmask 277504
    %v696 = vsel %vm694, %v688, 0
    %v699 = vsel %vm694, %v689, 0
    %v702 = vsel %vm694, %v690, 0
    %v705 = vsel %vm694, %v691, 0
    %v708 = vsel %vm694, %v692, 0
    %v711 = vsel %vm694, %v693, 0
    %v714 = vsel %vm274, %v687, 0
    %716 = vmatprep.subr.mxu0 0.0
    %717 = vmatpush1.msra.mxu0 0.0
    %718 = vmatprep.subr.mxu0 0.0
    %719 = vmatpush1.msra.mxu0 0.0
    %720 = vmatprep.subr.mxu0 0.0
    %721 = vmatpush1.msra.mxu0 0.0
    %722 = vmatprep.subr.mxu0 0.0
    %723 = vmatpush1.msra.mxu0 0.0
    %724 = vmatprep.subr.mxu0 0.0
    %725 = vmatpush1.msra.mxu0 0.0
    %726 = vmatprep.subr.mxu0 0.0
    %727 = vmatpush1.msra.mxu0 0.0
    %728 = vmatprep.subr.mxu0 0.0
    %729 = vmatpush1.msra.mxu0 0.0
    %730 = vmatprep.subr.mxu0 0.0
    %731 = vmatpush1.msra.mxu0 0.0
    %732 = vmatprep.subr.mxu0 0.0
    %733 = vmatpush1.msra.mxu0 0.0
    %734 = vmatprep.subr.mxu0 0.0
    %735 = vmatpush1.msra.mxu0 0.0
    %736 = vmatprep.subr.mxu0 0.0
    %737 = vmatpush1.msra.mxu0 0.0
    %738 = vmatprep.subr.mxu0 0.0
    %739 = vmatpush1.msra.mxu0 %v714
    %740 = vmatprep.subr.mxu0 0.0
    %741 = vmatpush1.msra.mxu0 %v686
    %742 = vmatprep.subr.mxu0 0.0
    %743 = vmatpush1.msra.mxu0 %v685
    %744 = vmatprep.subr.mxu0 0.0
    %745 = vmatpush1.msra.mxu0 %v684
    %746 = vmatprep.subr.mxu0 0.0
    %747 = vmatpush1.msra.mxu0 %v683
    %748 = vmatprep.subr.mxu0 0.0
    %749 = vmatpush2.msra.mxu0 0.0
    %750 = vmatprep.subr.mxu0 0.0
    %751 = vmatpush2.msra.mxu0 0.0
    %752 = vmatprep.subr.mxu0 0.0
    %753 = vmatpush2.msra.mxu0 0.0
    %754 = vmatprep.subr.mxu0 0.0
    %755 = vmatpush2.msra.mxu0 0.0
    %756 = vmatprep.subr.mxu0 0.0
    %757 = vmatpush2.msra.mxu0 0.0
    %758 = vmatprep.subr.mxu0 0.0
    %759 = vmatpush2.msra.mxu0 0.0
    %760 = vmatprep.subr.mxu0 0.0
    %761 = vmatpush2.msra.mxu0 0.0
    %762 = vmatprep.subr.mxu0 0.0
    %763 = vmatpush2.msra.mxu0 0.0
    %764 = vmatprep.subr.mxu0 0.0
    %765 = vmatpush2.msra.mxu0 0.0
    %766 = vmatprep.subr.mxu0 0.0
    %767 = vmatpush2.msra.mxu0 0.0
    %768 = vmatprep.subr.mxu0 0.0
    %769 = vmatpush2.msra.mxu0 0.0
    %770 = vmatprep.subr.mxu0 0.0
    %771 = vmatpush2.msra.mxu0 0.0
    %772 = vmatprep.subr.mxu0 0.0
    %773 = vmatpush2.msra.mxu0 0.0
    %774 = vmatprep.subr.mxu0 0.0
    %775 = vmatpush2.msra.mxu0 0.0
    %776 = vmatprep.subr.mxu0 0.0
    %777 = vmatpush2.msra.mxu0 0.0
    %778 = vmatprep.subr.mxu0 0.0
    %779 = vmatpush2.msra.mxu0 0.0
    %780 = vmatprep.mubr.f32.mxu0 0.0
    %781 = vmatmul.mubr.f32.gmra.mxu0 %v696
    %v782 = vpop.f32.mrf.mxu0
    %v783 = vadd.f32 0.0, %v782
    %v784 = vpop.f32.mrf.mxu0
    %785 = vmatprep.mubr.f32.mxu0 0.0
    %786 = vmatmul.mubr.f32.gmra.mxu0 %v699
    %v787 = vpop.f32.mrf.mxu0
    %v788 = vadd.f32 0.0, %v787
    %v789 = vpop.f32.mrf.mxu0
    %790 = vmatprep.mubr.f32.mxu0 0.0
    %791 = vmatmul.mubr.f32.gmra.mxu0 %v702
    %v792 = vpop.f32.mrf.mxu0
    %v793 = vadd.f32 0.0, %v792
    %v794 = vpop.f32.mrf.mxu0
    %795 = vmatprep.mubr.f32.mxu0 0.0
    %796 = vmatmul.mubr.f32.gmra.mxu0 %v705
    %v797 = vpop.f32.mrf.mxu0
    %v798 = vadd.f32 0.0, %v797
    %v799 = vpop.f32.mrf.mxu0
    %800 = vmatprep.mubr.f32.mxu0 0.0
    %801 = vmatmul.mubr.f32.gmra.mxu0 %v708
    %v802 = vpop.f32.mrf.mxu0
    %v803 = vadd.f32 0.0, %v802
    %v804 = vpop.f32.mrf.mxu0
    %805 = vmatprep.mubr.f32.mxu0 0.0
    %806 = vmatmul.mubr.f32.gmra.mxu0 %v711
    %v807 = vpop.f32.mrf.mxu0
    %v808 = vadd.f32 0.0, %v807
    %v809 = vpop.f32.mrf.mxu0
    %810 = vdwg.mxu0
    %v811 = vmax.f32 %v783, %v798
    %v812 = vmax.f32 %v788, %v803
    %v813 = vmax.f32 %v793, %v808
    %vm814 = vcmask 523264
    %815 = vst.msk [vmem:[#allocation3] sm:$0xff] %vm814, %v811
    %816 = vst.msk [vmem:[#allocation3 + $0x8] sm:$0xff] %vm814, %v812
    %vm817 = vcmask 519168
    %818 = vst.msk [vmem:[#allocation3 + $0x10] sm:$0xf] %vm817, %v813
    %s819 = sld [smem:[#allocation8 + $0x1]]
    %v820 = vld [vmem:[#allocation3] sm:$0xff]
    %v821 = vld [vmem:[#allocation3 + $0x8] sm:$0xff]
    %v822 = vld [vmem:[#allocation3 + $0x10] sm:$0x3]
    %v823 = vld [vmem:[%s10] sm:$0xff]
    %v824 = vld [vmem:[%s10 + $0x8] sm:$0xff]
    %v825 = vld [vmem:[%s10 + $0x10] sm:$0xff]
    %v826 = vld [vmem:[%s10 + $0x18] sm:$0xff]
    %v827 = vld [vmem:[%s10 + $0x20] sm:$0xff]
    %v828 = vld [vmem:[%s10 + $0x28] sm:$0xff]
    %v829 = vld [vmem:[%s10 + $0x30] sm:$0xff]
    %v830 = vld [vmem:[%s10 + $0x38] sm:$0xff]
    %v831 = vld [vmem:[%s10 + $0x40] sm:$0xff]
    %v832 = vld [vmem:[%s10 + $0x48] sm:$0xff]
    %v833 = vld [vmem:[#allocation3 + $0x1] sm:$0xff]
    %v834 = vld [vmem:[#allocation3 + $0x9] sm:$0xff]
    %v835 = vld [vmem:[#allocation3 + $0x11] sm:$0x3]
    %s836 = scalar_lea.vmem %s10, 80
    %v837 = vld [vmem:[%s836] sm:$0xff]
    %v838 = vld [vmem:[%s836 + $0x8] sm:$0xff]
    %v839 = vld [vmem:[%s836 + $0x10] sm:$0xff]
    %v840 = vld [vmem:[%s836 + $0x18] sm:$0xff]
    %v841 = vld [vmem:[%s836 + $0x20] sm:$0xff]
    %v842 = vld [vmem:[%s836 + $0x28] sm:$0xff]
    %v843 = vld [vmem:[%s836 + $0x30] sm:$0xff]
    %v844 = vld [vmem:[%s836 + $0x38] sm:$0xff]
    %v845 = vld [vmem:[%s836 + $0x40] sm:$0xff]
    %v846 = vld [vmem:[%s836 + $0x48] sm:$0xff]
    %v848 = vsel %vm98, %v833, 0
    %v851 = vsel %vm98, %v834, 0
    %v854 = vsel %vm98, %v835, 0
    %856 = vmatprep.subr.mxu0 0.0
    %857 = vmatpush1.msra.mxu0 0.0
    %858 = vmatprep.subr.mxu0 0.0
    %859 = vmatpush1.msra.mxu0 0.0
    %860 = vmatprep.subr.mxu0 0.0
    %861 = vmatpush1.msra.mxu0 0.0
    %862 = vmatprep.subr.mxu0 0.0
    %863 = vmatpush1.msra.mxu0 0.0
    %864 = vmatprep.subr.mxu0 0.0
    %865 = vmatpush1.msra.mxu0 0.0
    %866 = vmatprep.subr.mxu0 0.0
    %867 = vmatpush1.msra.mxu0 0.0
    %868 = vmatprep.subr.mxu0 0.0
    %869 = vmatpush1.msra.mxu0 %v846
    %870 = vmatprep.subr.mxu0 0.0
    %871 = vmatpush1.msra.mxu0 %v845
    %872 = vmatprep.subr.mxu0 0.0
    %873 = vmatpush1.msra.mxu0 %v844
    %874 = vmatprep.subr.mxu0 0.0
    %875 = vmatpush1.msra.mxu0 %v843
    %876 = vmatprep.subr.mxu0 0.0
    %877 = vmatpush1.msra.mxu0 %v842
    %878 = vmatprep.subr.mxu0 0.0
    %879 = vmatpush1.msra.mxu0 %v841
    %880 = vmatprep.subr.mxu0 0.0
    %881 = vmatpush1.msra.mxu0 %v840
    %882 = vmatprep.subr.mxu0 0.0
    %883 = vmatpush1.msra.mxu0 %v839
    %884 = vmatprep.subr.mxu0 0.0
    %885 = vmatpush1.msra.mxu0 %v838
    %886 = vmatprep.subr.mxu0 0.0
    %887 = vmatpush1.msra.mxu0 %v837
    %888 = vmatprep.subr.mxu0 0.0
    %889 = vmatpush2.msra.mxu0 0.0
    %890 = vmatprep.subr.mxu0 0.0
    %891 = vmatpush2.msra.mxu0 0.0
    %892 = vmatprep.subr.mxu0 0.0
    %893 = vmatpush2.msra.mxu0 0.0
    %894 = vmatprep.subr.mxu0 0.0
    %895 = vmatpush2.msra.mxu0 0.0
    %896 = vmatprep.subr.mxu0 0.0
    %897 = vmatpush2.msra.mxu0 0.0
    %898 = vmatprep.subr.mxu0 0.0
    %899 = vmatpush2.msra.mxu0 0.0
    %900 = vmatprep.subr.mxu0 0.0
    %901 = vmatpush2.msra.mxu0 0.0
    %902 = vmatprep.subr.mxu0 0.0
    %903 = vmatpush2.msra.mxu0 0.0
    %904 = vmatprep.subr.mxu0 0.0
    %905 = vmatpush2.msra.mxu0 0.0
    %906 = vmatprep.subr.mxu0 0.0
    %907 = vmatpush2.msra.mxu0 0.0
    %908 = vmatprep.subr.mxu0 0.0
    %909 = vmatpush2.msra.mxu0 0.0
    %910 = vmatprep.subr.mxu0 0.0
    %911 = vmatpush2.msra.mxu0 0.0
    %912 = vmatprep.subr.mxu0 0.0
    %913 = vmatpush2.msra.mxu0 0.0
    %914 = vmatprep.subr.mxu0 0.0
    %915 = vmatpush2.msra.mxu0 0.0
    %916 = vmatprep.subr.mxu0 0.0
    %917 = vmatpush2.msra.mxu0 0.0
    %918 = vmatprep.subr.mxu0 0.0
    %919 = vmatpush2.msra.mxu0 0.0
    %920 = vmatprep.mubr.f32.mxu0 0.0
    %921 = vmatmul.mubr.f32.gmra.mxu0 %v848
    %v922 = vpop.f32.mrf.mxu0
    %v923 = vadd.f32 0.0, %v922
    %v924 = vpop.f32.mrf.mxu0
    %925 = vmatprep.mubr.f32.mxu0 0.0
    %926 = vmatmul.mubr.f32.gmra.mxu0 %v851
    %v927 = vpop.f32.mrf.mxu0
    %v928 = vadd.f32 0.0, %v927
    %v929 = vpop.f32.mrf.mxu0
    %930 = vmatprep.mubr.f32.mxu0 0.0
    %931 = vmatmul.mubr.f32.gmra.mxu0 %v854
    %v932 = vpop.f32.mrf.mxu0
    %v933 = vadd.f32 0.0, %v932
    %v934 = vpop.f32.mrf.mxu0
    %935 = vdwg.mxu0
    %v937 = vsel %vm98, %v820, 0
    %v940 = vsel %vm98, %v821, 0
    %v943 = vsel %vm98, %v822, 0
    %945 = vmatprep.subr.mxu0 0.0
    %946 = vmatpush1.msra.mxu0 0.0
    %947 = vmatprep.subr.mxu0 0.0
    %948 = vmatpush1.msra.mxu0 0.0
    %949 = vmatprep.subr.mxu0 0.0
    %950 = vmatpush1.msra.mxu0 0.0
    %951 = vmatprep.subr.mxu0 0.0
    %952 = vmatpush1.msra.mxu0 0.0
    %953 = vmatprep.subr.mxu0 0.0
    %954 = vmatpush1.msra.mxu0 0.0
    %955 = vmatprep.subr.mxu0 0.0
    %956 = vmatpush1.msra.mxu0 0.0
    %957 = vmatprep.subr.mxu0 0.0
    %958 = vmatpush1.msra.mxu0 %v832
    %959 = vmatprep.subr.mxu0 0.0
    %960 = vmatpush1.msra.mxu0 %v831
    %961 = vmatprep.subr.mxu0 0.0
    %962 = vmatpush1.msra.mxu0 %v830
    %963 = vmatprep.subr.mxu0 0.0
    %964 = vmatpush1.msra.mxu0 %v829
    %965 = vmatprep.subr.mxu0 0.0
    %966 = vmatpush1.msra.mxu0 %v828
    %967 = vmatprep.subr.mxu0 0.0
    %968 = vmatpush1.msra.mxu0 %v827
    %969 = vmatprep.subr.mxu0 0.0
    %970 = vmatpush1.msra.mxu0 %v826
    %971 = vmatprep.subr.mxu0 0.0
    %972 = vmatpush1.msra.mxu0 %v825
    %973 = vmatprep.subr.mxu0 0.0
    %974 = vmatpush1.msra.mxu0 %v824
    %975 = vmatprep.subr.mxu0 0.0
    %976 = vmatpush1.msra.mxu0 %v823
    %977 = vmatprep.subr.mxu0 0.0
    %978 = vmatpush2.msra.mxu0 0.0
    %979 = vmatprep.subr.mxu0 0.0
    %980 = vmatpush2.msra.mxu0 0.0
    %981 = vmatprep.subr.mxu0 0.0
    %982 = vmatpush2.msra.mxu0 0.0
    %983 = vmatprep.subr.mxu0 0.0
    %984 = vmatpush2.msra.mxu0 0.0
    %985 = vmatprep.subr.mxu0 0.0
    %986 = vmatpush2.msra.mxu0 0.0
    %987 = vmatprep.subr.mxu0 0.0
    %988 = vmatpush2.msra.mxu0 0.0
    %989 = vmatprep.subr.mxu0 0.0
    %990 = vmatpush2.msra.mxu0 0.0
    %991 = vmatprep.subr.mxu0 0.0
    %992 = vmatpush2.msra.mxu0 0.0
    %993 = vmatprep.subr.mxu0 0.0
    %994 = vmatpush2.msra.mxu0 0.0
    %995 = vmatprep.subr.mxu0 0.0
    %996 = vmatpush2.msra.mxu0 0.0
    %997 = vmatprep.subr.mxu0 0.0
    %998 = vmatpush2.msra.mxu0 0.0
    %999 = vmatprep.subr.mxu0 0.0
    %1000 = vmatpush2.msra.mxu0 0.0
    %1001 = vmatprep.subr.mxu0 0.0
    %1002 = vmatpush2.msra.mxu0 0.0
    %1003 = vmatprep.subr.mxu0 0.0
    %1004 = vmatpush2.msra.mxu0 0.0
    %1005 = vmatprep.subr.mxu0 0.0
    %1006 = vmatpush2.msra.mxu0 0.0
    %1007 = vmatprep.subr.mxu0 0.0
    %1008 = vmatpush2.msra.mxu0 0.0
    %1009 = vmatprep.mubr.f32.mxu0 0.0
    %1010 = vmatmul.mubr.f32.gmra.mxu0 %v937
    %v1011 = vpop.f32.mrf.mxu0
    %v1012 = vadd.f32 %v923, %v1011
    %v1013 = vpop.f32.mrf.mxu0
    %1014 = vmatprep.mubr.f32.mxu0 0.0
    %1015 = vmatmul.mubr.f32.gmra.mxu0 %v940
    %v1016 = vpop.f32.mrf.mxu0
    %v1017 = vadd.f32 %v928, %v1016
    %v1018 = vpop.f32.mrf.mxu0
    %1019 = vmatprep.mubr.f32.mxu0 0.0
    %1020 = vmatmul.mubr.f32.gmra.mxu0 %v943
    %v1021 = vpop.f32.mrf.mxu0
    %v1022 = vadd.f32 %v933, %v1021
    %v1023 = vpop.f32.mrf.mxu0
    %1024 = vdwg.mxu0
    %v1025 = vld [vmem:[#allocation3 + $0x2] sm:$0xff]
    %v1026 = vld [vmem:[#allocation3 + $0xa] sm:$0xff]
    %v1027 = vld [vmem:[#allocation3 + $0x12] sm:$0x3]
    %s1028 = scalar_lea.vmem %s10, 160
    %v1029 = vld [vmem:[%s1028] sm:$0xff]
    %v1030 = vld [vmem:[%s1028 + $0x8] sm:$0xff]
    %v1031 = vld [vmem:[%s1028 + $0x10] sm:$0xff]
    %v1032 = vld [vmem:[%s1028 + $0x18] sm:$0xff]
    %v1033 = vld [vmem:[%s1028 + $0x20] sm:$0xff]
    %v1034 = vld [vmem:[%s1028 + $0x28] sm:$0xff]
    %v1035 = vld [vmem:[%s1028 + $0x30] sm:$0xff]
    %v1036 = vld [vmem:[%s1028 + $0x38] sm:$0xff]
    %v1037 = vld [vmem:[%s1028 + $0x40] sm:$0xff]
    %v1038 = vld [vmem:[%s1028 + $0x48] sm:$0xff]
    %v1040 = vsel %vm98, %v1025, 0
    %v1043 = vsel %vm98, %v1026, 0
    %v1046 = vsel %vm98, %v1027, 0
    %1048 = vmatprep.subr.mxu0 0.0
    %1049 = vmatpush1.msra.mxu0 0.0
    %1050 = vmatprep.subr.mxu0 0.0
    %1051 = vmatpush1.msra.mxu0 0.0
    %1052 = vmatprep.subr.mxu0 0.0
    %1053 = vmatpush1.msra.mxu0 0.0
    %1054 = vmatprep.subr.mxu0 0.0
    %1055 = vmatpush1.msra.mxu0 0.0
    %1056 = vmatprep.subr.mxu0 0.0
    %1057 = vmatpush1.msra.mxu0 0.0
    %1058 = vmatprep.subr.mxu0 0.0
    %1059 = vmatpush1.msra.mxu0 0.0
    %1060 = vmatprep.subr.mxu0 0.0
    %1061 = vmatpush1.msra.mxu0 %v1038
    %1062 = vmatprep.subr.mxu0 0.0
    %1063 = vmatpush1.msra.mxu0 %v1037
    %1064 = vmatprep.subr.mxu0 0.0
    %1065 = vmatpush1.msra.mxu0 %v1036
    %1066 = vmatprep.subr.mxu0 0.0
    %1067 = vmatpush1.msra.mxu0 %v1035
    %1068 = vmatprep.subr.mxu0 0.0
    %1069 = vmatpush1.msra.mxu0 %v1034
    %1070 = vmatprep.subr.mxu0 0.0
    %1071 = vmatpush1.msra.mxu0 %v1033
    %1072 = vmatprep.subr.mxu0 0.0
    %1073 = vmatpush1.msra.mxu0 %v1032
    %1074 = vmatprep.subr.mxu0 0.0
    %1075 = vmatpush1.msra.mxu0 %v1031
    %1076 = vmatprep.subr.mxu0 0.0
    %1077 = vmatpush1.msra.mxu0 %v1030
    %1078 = vmatprep.subr.mxu0 0.0
    %1079 = vmatpush1.msra.mxu0 %v1029
    %1080 = vmatprep.subr.mxu0 0.0
    %1081 = vmatpush2.msra.mxu0 0.0
    %1082 = vmatprep.subr.mxu0 0.0
    %1083 = vmatpush2.msra.mxu0 0.0
    %1084 = vmatprep.subr.mxu0 0.0
    %1085 = vmatpush2.msra.mxu0 0.0
    %1086 = vmatprep.subr.mxu0 0.0
    %1087 = vmatpush2.msra.mxu0 0.0
    %1088 = vmatprep.subr.mxu0 0.0
    %1089 = vmatpush2.msra.mxu0 0.0
    %1090 = vmatprep.subr.mxu0 0.0
    %1091 = vmatpush2.msra.mxu0 0.0
    %1092 = vmatprep.subr.mxu0 0.0
    %1093 = vmatpush2.msra.mxu0 0.0
    %1094 = vmatprep.subr.mxu0 0.0
    %1095 = vmatpush2.msra.mxu0 0.0
    %1096 = vmatprep.subr.mxu0 0.0
    %1097 = vmatpush2.msra.mxu0 0.0
    %1098 = vmatprep.subr.mxu0 0.0
    %1099 = vmatpush2.msra.mxu0 0.0
    %1100 = vmatprep.subr.mxu0 0.0
    %1101 = vmatpush2.msra.mxu0 0.0
    %1102 = vmatprep.subr.mxu0 0.0
    %1103 = vmatpush2.msra.mxu0 0.0
    %1104 = vmatprep.subr.mxu0 0.0
    %1105 = vmatpush2.msra.mxu0 0.0
    %1106 = vmatprep.subr.mxu0 0.0
    %1107 = vmatpush2.msra.mxu0 0.0
    %1108 = vmatprep.subr.mxu0 0.0
    %1109 = vmatpush2.msra.mxu0 0.0
    %1110 = vmatprep.subr.mxu0 0.0
    %1111 = vmatpush2.msra.mxu0 0.0
    %1112 = vmatprep.mubr.f32.mxu0 0.0
    %1113 = vmatmul.mubr.f32.gmra.mxu0 %v1040
    %v1114 = vpop.f32.mrf.mxu0
    %v1115 = vadd.f32 0.0, %v1114
    %v1116 = vpop.f32.mrf.mxu0
    %1117 = vmatprep.mubr.f32.mxu0 0.0
    %1118 = vmatmul.mubr.f32.gmra.mxu0 %v1043
    %v1119 = vpop.f32.mrf.mxu0
    %v1120 = vadd.f32 0.0, %v1119
    %v1121 = vpop.f32.mrf.mxu0
    %1122 = vmatprep.mubr.f32.mxu0 0.0
    %1123 = vmatmul.mubr.f32.gmra.mxu0 %v1046
    %v1124 = vpop.f32.mrf.mxu0
    %v1125 = vadd.f32 0.0, %v1124
    %v1126 = vpop.f32.mrf.mxu0
    %1127 = vdwg.mxu0
    %v1128 = vadd.f32 %v1012, %v1115
    %v1129 = vadd.f32 %v1017, %v1120
    %v1130 = vadd.f32 %v1022, %v1125
    %v1131 = vld [vmem:[%s11] sm:$0x1]
    %v1133 = vlaneseq
    %v1134 = vshrl.u32 %v1133, 7
    %v1135 = vsub.s32 0, %v1134
    %v1136 = vrot.slane %v1131, %v1135
    %v1138 = vmul.f32 %v1128, %v1136
    %v1139 = vmul.f32 %v1129, %v1136
    %v1140 = vmul.f32 %v1130, %v1136
    %v1141 = vld [vmem:[%s12] sm:$0x1]
    %v1143 = vlaneseq
    %v1144 = vshrl.u32 %v1143, 7
    %v1145 = vsub.s32 0, %v1144
    %v1146 = vrot.slane %v1141, %v1145
    %v1148 = vadd.f32 %v1138, %v1146
    %v1149 = vadd.f32 %v1139, %v1146
    %v1150 = vadd.f32 %v1140, %v1146
    %v1151 = vstv %s819
    %v1152 = vmul.f32 %v1151, %v1148
    %v1153 = vmul.f32 %v1151, %v1149
    %v1154 = vmul.f32 %v1151, %v1150
    %v1155 = vxor.u32 %v1152, 2147483648
    %v1156 = vxor.u32 %v1153, 2147483648
    %v1157 = vxor.u32 %v1154, 2147483648
    %v1158 = vmul.f32 %v1155, 1.442695
    %v1159 = vpow.pop %v1158
    %v1160 = vmul.f32 %v1156, 1.442695
    %v1161 = vpow.pop %v1160
    %v1162 = vmul.f32 %v1157, 1.442695
    %v1163 = vpow.pop %v1162
    %v1164 = vadd.f32 %v1159, 1.0
    %v1165 = vadd.f32 %v1161, 1.0
    %v1166 = vadd.f32 %v1163, 1.0
    %v1167 = vrcp.pop %v1164
    %v1168 = vmul.f32 1.0, %v1167
    %v1169 = vrcp.pop %v1165
    %v1170 = vmul.f32 1.0, %v1169
    %v1171 = vrcp.pop %v1166
    %v1172 = vmul.f32 1.0, %v1171
    %v1173 = vmul.f32 %v1148, %v1168
    %v1174 = vmul.f32 %v1149, %v1170
    %v1175 = vmul.f32 %v1150, %v1172
    %1179 = vrot.lane.b32.xlu0 %v1173, 64
    %v1180 = vpop.permute.xlu0 %1179
    %1181 = vrot.lane.b32.xlu0 %v1174, 64
    %v1182 = vpop.permute.xlu0 %1181
    %1183 = vrot.lane.b32.xlu0 %v1175, 64
    %v1184 = vpop.permute.xlu0 %1183
    %v1188 = vmax.f32 %v1173, %v1180
    %v1189 = vmax.f32 %v1174, %v1182
    %v1190 = vmax.f32 %v1175, %v1184
    %v1191 = vld [vmem:[%s5] sm:$0xff]
    %v1192 = vld [vmem:[%s5 + $0x8] sm:$0xff]
    %v1193 = vld [vmem:[%s5 + $0x10] sm:$0xff]
    %v1194 = vld [vmem:[%s5 + $0x18] sm:$0xf]
    %v1196 = vsel %vm91, %v1191, 0
    %v1199 = vsel %vm91, %v1192, 0
    %v1202 = vsel %vm91, %v1193, 0
    %v1205 = vsel %vm91, %v1194, 0
    %v1208 = vsel %vm274, %v1190, 0
    %1210 = vmatprep.subr.mxu0 0.0
    %1211 = vmatpush1.msra.mxu0 0.0
    %1212 = vmatprep.subr.mxu0 0.0
    %1213 = vmatpush1.msra.mxu0 0.0
    %1214 = vmatprep.subr.mxu0 0.0
    %1215 = vmatpush1.msra.mxu0 0.0
    %1216 = vmatprep.subr.mxu0 0.0
    %1217 = vmatpush1.msra.mxu0 0.0
    %1218 = vmatprep.subr.mxu0 0.0
    %1219 = vmatpush1.msra.mxu0 0.0
    %1220 = vmatprep.subr.mxu0 0.0
    %1221 = vmatpush1.msra.mxu0 0.0
    %1222 = vmatprep.subr.mxu0 0.0
    %1223 = vmatpush1.msra.mxu0 0.0
    %1224 = vmatprep.subr.mxu0 0.0
    %1225 = vmatpush1.msra.mxu0 0.0
    %1226 = vmatprep.subr.mxu0 0.0
    %1227 = vmatpush1.msra.mxu0 0.0
    %1228 = vmatprep.subr.mxu0 0.0
    %1229 = vmatpush1.msra.mxu0 0.0
    %1230 = vmatprep.subr.mxu0 0.0
    %1231 = vmatpush1.msra.mxu0 0.0
    %1232 = vmatprep.subr.mxu0 0.0
    %1233 = vmatpush1.msra.mxu0 0.0
    %1234 = vmatprep.subr.mxu0 0.0
    %1235 = vmatpush1.msra.mxu0 0.0
    %1236 = vmatprep.subr.mxu0 0.0
    %1237 = vmatpush1.msra.mxu0 %v1208
    %1238 = vmatprep.subr.mxu0 0.0
    %1239 = vmatpush1.msra.mxu0 %v1189
    %1240 = vmatprep.subr.mxu0 0.0
    %1241 = vmatpush1.msra.mxu0 %v1188
    %1242 = vmatprep.subr.mxu0 0.0
    %1243 = vmatpush2.msra.mxu0 0.0
    %1244 = vmatprep.subr.mxu0 0.0
    %1245 = vmatpush2.msra.mxu0 0.0
    %1246 = vmatprep.subr.mxu0 0.0
    %1247 = vmatpush2.msra.mxu0 0.0
    %1248 = vmatprep.subr.mxu0 0.0
    %1249 = vmatpush2.msra.mxu0 0.0
    %1250 = vmatprep.subr.mxu0 0.0
    %1251 = vmatpush2.msra.mxu0 0.0
    %1252 = vmatprep.subr.mxu0 0.0
    %1253 = vmatpush2.msra.mxu0 0.0
    %1254 = vmatprep.subr.mxu0 0.0
    %1255 = vmatpush2.msra.mxu0 0.0
    %1256 = vmatprep.subr.mxu0 0.0
    %1257 = vmatpush2.msra.mxu0 0.0
    %1258 = vmatprep.subr.mxu0 0.0
    %1259 = vmatpush2.msra.mxu0 0.0
    %1260 = vmatprep.subr.mxu0 0.0
    %1261 = vmatpush2.msra.mxu0 0.0
    %1262 = vmatprep.subr.mxu0 0.0
    %1263 = vmatpush2.msra.mxu0 0.0
    %1264 = vmatprep.subr.mxu0 0.0
    %1265 = vmatpush2.msra.mxu0 0.0
    %1266 = vmatprep.subr.mxu0 0.0
    %1267 = vmatpush2.msra.mxu0 0.0
    %1268 = vmatprep.subr.mxu0 0.0
    %1269 = vmatpush2.msra.mxu0 0.0
    %1270 = vmatprep.subr.mxu0 0.0
    %1271 = vmatpush2.msra.mxu0 0.0
    %1272 = vmatprep.subr.mxu0 0.0
    %1273 = vmatpush2.msra.mxu0 0.0
    %1274 = vmatprep.mubr.f32.mxu0 0.0
    %1275 = vmatmul.mubr.f32.gmra.mxu0 %v1196
    %v1276 = vpop.f32.mrf.mxu0
    %v1277 = vadd.f32 0.0, %v1276
    %v1278 = vpop.f32.mrf.mxu0
    %1279 = vmatprep.mubr.f32.mxu0 0.0
    %1280 = vmatmul.mubr.f32.gmra.mxu0 %v1199
    %v1281 = vpop.f32.mrf.mxu0
    %v1282 = vadd.f32 0.0, %v1281
    %v1283 = vpop.f32.mrf.mxu0
    %1284 = vmatprep.mubr.f32.mxu0 0.0
    %1285 = vmatmul.mubr.f32.gmra.mxu0 %v1202
    %v1286 = vpop.f32.mrf.mxu0
    %v1287 = vadd.f32 0.0, %v1286
    %v1288 = vpop.f32.mrf.mxu0
    %1289 = vmatprep.mubr.f32.mxu0 0.0
    %1290 = vmatmul.mubr.f32.gmra.mxu0 %v1205
    %v1291 = vpop.f32.mrf.mxu0
    %v1292 = vadd.f32 0.0, %v1291
    %v1293 = vpop.f32.mrf.mxu0
    %1294 = vdwg.mxu0
    %v1295 = vmax.f32 %v1277, %v1287
    %v1296 = vmax.f32 %v1282, %v1292
    %1297 = vst.msk [vmem:[#allocation4] sm:$0xff] %vm814, %v1295
    %1298 = vst.msk [vmem:[#allocation4 + $0x8] sm:$0xf] %vm817, %v1296
    %s1299 = sld [smem:[#allocation8 + $0x2]]
    %v1300 = vld [vmem:[#allocation4] sm:$0xff]
    %v1301 = vld [vmem:[#allocation4 + $0x8] sm:$0x3]
    %v1302 = vld [vmem:[%s13] sm:$0xff]
    %v1303 = vld [vmem:[%s13 + $0x8] sm:$0xff]
    %v1304 = vld [vmem:[%s13 + $0x10] sm:$0xff]
    %v1305 = vld [vmem:[%s13 + $0x18] sm:$0xff]
    %v1306 = vld [vmem:[%s13 + $0x20] sm:$0xff]
    %v1307 = vld [vmem:[%s13 + $0x28] sm:$0xff]
    %v1308 = vld [vmem:[%s13 + $0x30] sm:$0xff]
    %v1309 = vld [vmem:[%s13 + $0x38] sm:$0xff]
    %v1310 = vld [vmem:[%s13 + $0x40] sm:$0xff]
    %v1311 = vld [vmem:[%s13 + $0x48] sm:$0xff]
    %v1312 = vld [vmem:[%s13 + $0x50] sm:$0xff]
    %v1313 = vld [vmem:[%s13 + $0x58] sm:$0xff]
    %v1314 = vld [vmem:[#allocation4 + $0x1] sm:$0xff]
    %v1315 = vld [vmem:[#allocation4 + $0x9] sm:$0x3]
    %s1316 = scalar_lea.vmem %s13, 96
    %v1317 = vld [vmem:[%s1316] sm:$0xff]
    %v1318 = vld [vmem:[%s1316 + $0x8] sm:$0xff]
    %v1319 = vld [vmem:[%s1316 + $0x10] sm:$0xff]
    %v1320 = vld [vmem:[%s1316 + $0x18] sm:$0xff]
    %v1321 = vld [vmem:[%s1316 + $0x20] sm:$0xff]
    %v1322 = vld [vmem:[%s1316 + $0x28] sm:$0xff]
    %v1323 = vld [vmem:[%s1316 + $0x30] sm:$0xff]
    %v1324 = vld [vmem:[%s1316 + $0x38] sm:$0xff]
    %v1325 = vld [vmem:[%s1316 + $0x40] sm:$0xff]
    %v1326 = vld [vmem:[%s1316 + $0x48] sm:$0xff]
    %v1327 = vld [vmem:[%s1316 + $0x50] sm:$0xff]
    %v1328 = vld [vmem:[%s1316 + $0x58] sm:$0xff]
    %v1330 = vsel %vm103, %v1314, 0
    %v1333 = vsel %vm103, %v1315, 0
    %1335 = vmatprep.subr.mxu0 0.0
    %1336 = vmatpush1.msra.mxu0 0.0
    %1337 = vmatprep.subr.mxu0 0.0
    %1338 = vmatpush1.msra.mxu0 0.0
    %1339 = vmatprep.subr.mxu0 0.0
    %1340 = vmatpush1.msra.mxu0 0.0
    %1341 = vmatprep.subr.mxu0 0.0
    %1342 = vmatpush1.msra.mxu0 0.0
    %1343 = vmatprep.subr.mxu0 0.0
    %1344 = vmatpush1.msra.mxu0 %v1328
    %1345 = vmatprep.subr.mxu0 0.0
    %1346 = vmatpush1.msra.mxu0 %v1327
    %1347 = vmatprep.subr.mxu0 0.0
    %1348 = vmatpush1.msra.mxu0 %v1326
    %1349 = vmatprep.subr.mxu0 0.0
    %1350 = vmatpush1.msra.mxu0 %v1325
    %1351 = vmatprep.subr.mxu0 0.0
    %1352 = vmatpush1.msra.mxu0 %v1324
    %1353 = vmatprep.subr.mxu0 0.0
    %1354 = vmatpush1.msra.mxu0 %v1323
    %1355 = vmatprep.subr.mxu0 0.0
    %1356 = vmatpush1.msra.mxu0 %v1322
    %1357 = vmatprep.subr.mxu0 0.0
    %1358 = vmatpush1.msra.mxu0 %v1321
    %1359 = vmatprep.subr.mxu0 0.0
    %1360 = vmatpush1.msra.mxu0 %v1320
    %1361 = vmatprep.subr.mxu0 0.0
    %1362 = vmatpush1.msra.mxu0 %v1319
    %1363 = vmatprep.subr.mxu0 0.0
    %1364 = vmatpush1.msra.mxu0 %v1318
    %1365 = vmatprep.subr.mxu0 0.0
    %1366 = vmatpush1.msra.mxu0 %v1317
    %1367 = vmatprep.subr.mxu0 0.0
    %1368 = vmatpush2.msra.mxu0 0.0
    %1369 = vmatprep.subr.mxu0 0.0
    %1370 = vmatpush2.msra.mxu0 0.0
    %1371 = vmatprep.subr.mxu0 0.0
    %1372 = vmatpush2.msra.mxu0 0.0
    %1373 = vmatprep.subr.mxu0 0.0
    %1374 = vmatpush2.msra.mxu0 0.0
    %1375 = vmatprep.subr.mxu0 0.0
    %1376 = vmatpush2.msra.mxu0 0.0
    %1377 = vmatprep.subr.mxu0 0.0
    %1378 = vmatpush2.msra.mxu0 0.0
    %1379 = vmatprep.subr.mxu0 0.0
    %1380 = vmatpush2.msra.mxu0 0.0
    %1381 = vmatprep.subr.mxu0 0.0
    %1382 = vmatpush2.msra.mxu0 0.0
    %1383 = vmatprep.subr.mxu0 0.0
    %1384 = vmatpush2.msra.mxu0 0.0
    %1385 = vmatprep.subr.mxu0 0.0
    %1386 = vmatpush2.msra.mxu0 0.0
    %1387 = vmatprep.subr.mxu0 0.0
    %1388 = vmatpush2.msra.mxu0 0.0
    %1389 = vmatprep.subr.mxu0 0.0
    %1390 = vmatpush2.msra.mxu0 0.0
    %1391 = vmatprep.subr.mxu0 0.0
    %1392 = vmatpush2.msra.mxu0 0.0
    %1393 = vmatprep.subr.mxu0 0.0
    %1394 = vmatpush2.msra.mxu0 0.0
    %1395 = vmatprep.subr.mxu0 0.0
    %1396 = vmatpush2.msra.mxu0 0.0
    %1397 = vmatprep.subr.mxu0 0.0
    %1398 = vmatpush2.msra.mxu0 0.0
    %1399 = vmatprep.mubr.f32.mxu0 0.0
    %1400 = vmatmul.mubr.f32.gmra.mxu0 %v1330
    %v1401 = vpop.f32.mrf.mxu0
    %v1402 = vadd.f32 0.0, %v1401
    %v1403 = vpop.f32.mrf.mxu0
    %1404 = vmatprep.mubr.f32.mxu0 0.0
    %1405 = vmatmul.mubr.f32.gmra.mxu0 %v1333
    %v1406 = vpop.f32.mrf.mxu0
    %v1407 = vadd.f32 0.0, %v1406
    %v1408 = vpop.f32.mrf.mxu0
    %1409 = vdwg.mxu0
    %v1411 = vsel %vm103, %v1300, 0
    %v1414 = vsel %vm103, %v1301, 0
    %1416 = vmatprep.subr.mxu0 0.0
    %1417 = vmatpush1.msra.mxu0 0.0
    %1418 = vmatprep.subr.mxu0 0.0
    %1419 = vmatpush1.msra.mxu0 0.0
    %1420 = vmatprep.subr.mxu0 0.0
    %1421 = vmatpush1.msra.mxu0 0.0
    %1422 = vmatprep.subr.mxu0 0.0
    %1423 = vmatpush1.msra.mxu0 0.0
    %1424 = vmatprep.subr.mxu0 0.0
    %1425 = vmatpush1.msra.mxu0 %v1313
    %1426 = vmatprep.subr.mxu0 0.0
    %1427 = vmatpush1.msra.mxu0 %v1312
    %1428 = vmatprep.subr.mxu0 0.0
    %1429 = vmatpush1.msra.mxu0 %v1311
    %1430 = vmatprep.subr.mxu0 0.0
    %1431 = vmatpush1.msra.mxu0 %v1310
    %1432 = vmatprep.subr.mxu0 0.0
    %1433 = vmatpush1.msra.mxu0 %v1309
    %1434 = vmatprep.subr.mxu0 0.0
    %1435 = vmatpush1.msra.mxu0 %v1308
    %1436 = vmatprep.subr.mxu0 0.0
    %1437 = vmatpush1.msra.mxu0 %v1307
    %1438 = vmatprep.subr.mxu0 0.0
    %1439 = vmatpush1.msra.mxu0 %v1306
    %1440 = vmatprep.subr.mxu0 0.0
    %1441 = vmatpush1.msra.mxu0 %v1305
    %1442 = vmatprep.subr.mxu0 0.0
    %1443 = vmatpush1.msra.mxu0 %v1304
    %1444 = vmatprep.subr.mxu0 0.0
    %1445 = vmatpush1.msra.mxu0 %v1303
    %1446 = vmatprep.subr.mxu0 0.0
    %1447 = vmatpush1.msra.mxu0 %v1302
    %1448 = vmatprep.subr.mxu0 0.0
    %1449 = vmatpush2.msra.mxu0 0.0
    %1450 = vmatprep.subr.mxu0 0.0
    %1451 = vmatpush2.msra.mxu0 0.0
    %1452 = vmatprep.subr.mxu0 0.0
    %1453 = vmatpush2.msra.mxu0 0.0
    %1454 = vmatprep.subr.mxu0 0.0
    %1455 = vmatpush2.msra.mxu0 0.0
    %1456 = vmatprep.subr.mxu0 0.0
    %1457 = vmatpush2.msra.mxu0 0.0
    %1458 = vmatprep.subr.mxu0 0.0
    %1459 = vmatpush2.msra.mxu0 0.0
    %1460 = vmatprep.subr.mxu0 0.0
    %1461 = vmatpush2.msra.mxu0 0.0
    %1462 = vmatprep.subr.mxu0 0.0
    %1463 = vmatpush2.msra.mxu0 0.0
    %1464 = vmatprep.subr.mxu0 0.0
    %1465 = vmatpush2.msra.mxu0 0.0
    %1466 = vmatprep.subr.mxu0 0.0
    %1467 = vmatpush2.msra.mxu0 0.0
    %1468 = vmatprep.subr.mxu0 0.0
    %1469 = vmatpush2.msra.mxu0 0.0
    %1470 = vmatprep.subr.mxu0 0.0
    %1471 = vmatpush2.msra.mxu0 0.0
    %1472 = vmatprep.subr.mxu0 0.0
    %1473 = vmatpush2.msra.mxu0 0.0
    %1474 = vmatprep.subr.mxu0 0.0
    %1475 = vmatpush2.msra.mxu0 0.0
    %1476 = vmatprep.subr.mxu0 0.0
    %1477 = vmatpush2.msra.mxu0 0.0
    %1478 = vmatprep.subr.mxu0 0.0
    %1479 = vmatpush2.msra.mxu0 0.0
    %1480 = vmatprep.mubr.f32.mxu0 0.0
    %1481 = vmatmul.mubr.f32.gmra.mxu0 %v1411
    %v1482 = vpop.f32.mrf.mxu0
    %v1483 = vadd.f32 %v1402, %v1482
    %v1484 = vpop.f32.mrf.mxu0
    %1485 = vmatprep.mubr.f32.mxu0 0.0
    %1486 = vmatmul.mubr.f32.gmra.mxu0 %v1414
    %v1487 = vpop.f32.mrf.mxu0
    %v1488 = vadd.f32 %v1407, %v1487
    %v1489 = vpop.f32.mrf.mxu0
    %1490 = vdwg.mxu0
    %v1491 = vld [vmem:[#allocation4 + $0x2] sm:$0xff]
    %v1492 = vld [vmem:[#allocation4 + $0xa] sm:$0x3]
    %s1493 = scalar_lea.vmem %s13, 192
    %v1494 = vld [vmem:[%s1493] sm:$0xff]
    %v1495 = vld [vmem:[%s1493 + $0x8] sm:$0xff]
    %v1496 = vld [vmem:[%s1493 + $0x10] sm:$0xff]
    %v1497 = vld [vmem:[%s1493 + $0x18] sm:$0xff]
    %v1498 = vld [vmem:[%s1493 + $0x20] sm:$0xff]
    %v1499 = vld [vmem:[%s1493 + $0x28] sm:$0xff]
    %v1500 = vld [vmem:[%s1493 + $0x30] sm:$0xff]
    %v1501 = vld [vmem:[%s1493 + $0x38] sm:$0xff]
    %v1502 = vld [vmem:[%s1493 + $0x40] sm:$0xff]
    %v1503 = vld [vmem:[%s1493 + $0x48] sm:$0xff]
    %v1504 = vld [vmem:[%s1493 + $0x50] sm:$0xff]
    %v1505 = vld [vmem:[%s1493 + $0x58] sm:$0xff]
    %v1507 = vsel %vm103, %v1491, 0
    %v1510 = vsel %vm103, %v1492, 0
    %1512 = vmatprep.subr.mxu0 0.0
    %1513 = vmatpush1.msra.mxu0 0.0
    %1514 = vmatprep.subr.mxu0 0.0
    %1515 = vmatpush1.msra.mxu0 0.0
    %1516 = vmatprep.subr.mxu0 0.0
    %1517 = vmatpush1.msra.mxu0 0.0
    %1518 = vmatprep.subr.mxu0 0.0
    %1519 = vmatpush1.msra.mxu0 0.0
    %1520 = vmatprep.subr.mxu0 0.0
    %1521 = vmatpush1.msra.mxu0 %v1505
    %1522 = vmatprep.subr.mxu0 0.0
    %1523 = vmatpush1.msra.mxu0 %v1504
    %1524 = vmatprep.subr.mxu0 0.0
    %1525 = vmatpush1.msra.mxu0 %v1503
    %1526 = vmatprep.subr.mxu0 0.0
    %1527 = vmatpush1.msra.mxu0 %v1502
    %1528 = vmatprep.subr.mxu0 0.0
    %1529 = vmatpush1.msra.mxu0 %v1501
    %1530 = vmatprep.subr.mxu0 0.0
    %1531 = vmatpush1.msra.mxu0 %v1500
    %1532 = vmatprep.subr.mxu0 0.0
    %1533 = vmatpush1.msra.mxu0 %v1499
    %1534 = vmatprep.subr.mxu0 0.0
    %1535 = vmatpush1.msra.mxu0 %v1498
    %1536 = vmatprep.subr.mxu0 0.0
    %1537 = vmatpush1.msra.mxu0 %v1497
    %1538 = vmatprep.subr.mxu0 0.0
    %1539 = vmatpush1.msra.mxu0 %v1496
    %1540 = vmatprep.subr.mxu0 0.0
    %1541 = vmatpush1.msra.mxu0 %v1495
    %1542 = vmatprep.subr.mxu0 0.0
    %1543 = vmatpush1.msra.mxu0 %v1494
    %1544 = vmatprep.subr.mxu0 0.0
    %1545 = vmatpush2.msra.mxu0 0.0
    %1546 = vmatprep.subr.mxu0 0.0
    %1547 = vmatpush2.msra.mxu0 0.0
    %1548 = vmatprep.subr.mxu0 0.0
    %1549 = vmatpush2.msra.mxu0 0.0
    %1550 = vmatprep.subr.mxu0 0.0
    %1551 = vmatpush2.msra.mxu0 0.0
    %1552 = vmatprep.subr.mxu0 0.0
    %1553 = vmatpush2.msra.mxu0 0.0
    %1554 = vmatprep.subr.mxu0 0.0
    %1555 = vmatpush2.msra.mxu0 0.0
    %1556 = vmatprep.subr.mxu0 0.0
    %1557 = vmatpush2.msra.mxu0 0.0
    %1558 = vmatprep.subr.mxu0 0.0
    %1559 = vmatpush2.msra.mxu0 0.0
    %1560 = vmatprep.subr.mxu0 0.0
    %1561 = vmatpush2.msra.mxu0 0.0
    %1562 = vmatprep.subr.mxu0 0.0
    %1563 = vmatpush2.msra.mxu0 0.0
    %1564 = vmatprep.subr.mxu0 0.0
    %1565 = vmatpush2.msra.mxu0 0.0
    %1566 = vmatprep.subr.mxu0 0.0
    %1567 = vmatpush2.msra.mxu0 0.0
    %1568 = vmatprep.subr.mxu0 0.0
    %1569 = vmatpush2.msra.mxu0 0.0
    %1570 = vmatprep.subr.mxu0 0.0
    %1571 = vmatpush2.msra.mxu0 0.0
    %1572 = vmatprep.subr.mxu0 0.0
    %1573 = vmatpush2.msra.mxu0 0.0
    %1574 = vmatprep.subr.mxu0 0.0
    %1575 = vmatpush2.msra.mxu0 0.0
    %1576 = vmatprep.mubr.f32.mxu0 0.0
    %1577 = vmatmul.mubr.f32.gmra.mxu0 %v1507
    %v1578 = vpop.f32.mrf.mxu0
    %v1579 = vadd.f32 0.0, %v1578
    %v1580 = vpop.f32.mrf.mxu0
    %1581 = vmatprep.mubr.f32.mxu0 0.0
    %1582 = vmatmul.mubr.f32.gmra.mxu0 %v1510
    %v1583 = vpop.f32.mrf.mxu0
    %v1584 = vadd.f32 0.0, %v1583
    %v1585 = vpop.f32.mrf.mxu0
    %1586 = vdwg.mxu0
    %v1587 = vadd.f32 %v1483, %v1579
    %v1588 = vadd.f32 %v1488, %v1584
    %v1589 = vld [vmem:[%s14] sm:$0x1]
    %v1591 = vlaneseq
    %v1592 = vshrl.u32 %v1591, 7
    %v1593 = vsub.s32 0, %v1592
    %v1594 = vrot.slane %v1589, %v1593
    %v1596 = vmul.f32 %v1587, %v1594
    %v1597 = vmul.f32 %v1588, %v1594
    %v1598 = vld [vmem:[%s15] sm:$0x1]
    %v1600 = vlaneseq
    %v1601 = vshrl.u32 %v1600, 7
    %v1602 = vsub.s32 0, %v1601
    %v1603 = vrot.slane %v1598, %v1602
    %v1605 = vadd.f32 %v1596, %v1603
    %v1606 = vadd.f32 %v1597, %v1603
    %v1607 = vstv %s1299
    %v1608 = vmul.f32 %v1607, %v1605
    %v1609 = vmul.f32 %v1607, %v1606
    %v1610 = vxor.u32 %v1608, 2147483648
    %v1611 = vxor.u32 %v1609, 2147483648
    %v1612 = vmul.f32 %v1610, 1.442695
    %v1613 = vpow.pop %v1612
    %v1614 = vmul.f32 %v1611, 1.442695
    %v1615 = vpow.pop %v1614
    %v1616 = vadd.f32 %v1613, 1.0
    %v1617 = vadd.f32 %v1615, 1.0
    %v1618 = vrcp.pop %v1616
    %v1619 = vmul.f32 1.0, %v1618
    %v1620 = vrcp.pop %v1617
    %v1621 = vmul.f32 1.0, %v1620
    %v1622 = vmul.f32 %v1605, %v1619
    %v1623 = vmul.f32 %v1606, %v1621
    %1626 = vrot.lane.b32.xlu0 %v1622, 64
    %v1627 = vpop.permute.xlu0 %1626
    %1628 = vrot.lane.b32.xlu0 %v1623, 64
    %v1629 = vpop.permute.xlu0 %1628
    %v1632 = vmax.f32 %v1622, %v1627
    %v1633 = vmax.f32 %v1623, %v1629
    %v1634 = vld [vmem:[%s6] sm:$0xff]
    %v1635 = vld [vmem:[%s6 + $0x8] sm:$0xff]
    %v1636 = vld [vmem:[%s6 + $0x10] sm:$0xff]
    %v1637 = vld [vmem:[%s6 + $0x18] sm:$0xff]
    %vm1638 = vcmask 80896
    %v1640 = vsel %vm1638, %v1634, 0
    %v1643 = vsel %vm1638, %v1635, 0
    %v1646 = vsel %vm1638, %v1636, 0
    %v1649 = vsel %vm1638, %v1637, 0
    %v1652 = vsel %vm274, %v1633, 0
    %1654 = vmatprep.subr.mxu0 0.0
    %1655 = vmatpush1.msra.mxu0 0.0
    %1656 = vmatprep.subr.mxu0 0.0
    %1657 = vmatpush1.msra.mxu0 0.0
    %1658 = vmatprep.subr.mxu0 0.0
    %1659 = vmatpush1.msra.mxu0 0.0
    %1660 = vmatprep.subr.mxu0 0.0
    %1661 = vmatpush1.msra.mxu0 0.0
    %1662 = vmatprep.subr.mxu0 0.0
    %1663 = vmatpush1.msra.mxu0 0.0
    %1664 = vmatprep.subr.mxu0 0.0
    %1665 = vmatpush1.msra.mxu0 0.0
    %1666 = vmatprep.subr.mxu0 0.0
    %1667 = vmatpush1.msra.mxu0 0.0
    %1668 = vmatprep.subr.mxu0 0.0
    %1669 = vmatpush1.msra.mxu0 0.0
    %1670 = vmatprep.subr.mxu0 0.0
    %1671 = vmatpush1.msra.mxu0 0.0
    %1672 = vmatprep.subr.mxu0 0.0
    %1673 = vmatpush1.msra.mxu0 0.0
    %1674 = vmatprep.subr.mxu0 0.0
    %1675 = vmatpush1.msra.mxu0 0.0
    %1676 = vmatprep.subr.mxu0 0.0
    %1677 = vmatpush1.msra.mxu0 0.0
    %1678 = vmatprep.subr.mxu0 0.0
    %1679 = vmatpush1.msra.mxu0 0.0
    %1680 = vmatprep.subr.mxu0 0.0
    %1681 = vmatpush1.msra.mxu0 0.0
    %1682 = vmatprep.subr.mxu0 0.0
    %1683 = vmatpush1.msra.mxu0 %v1652
    %1684 = vmatprep.subr.mxu0 0.0
    %1685 = vmatpush1.msra.mxu0 %v1632
    %1686 = vmatprep.subr.mxu0 0.0
    %1687 = vmatpush2.msra.mxu0 0.0
    %1688 = vmatprep.subr.mxu0 0.0
    %1689 = vmatpush2.msra.mxu0 0.0
    %1690 = vmatprep.subr.mxu0 0.0
    %1691 = vmatpush2.msra.mxu0 0.0
    %1692 = vmatprep.subr.mxu0 0.0
    %1693 = vmatpush2.msra.mxu0 0.0
    %1694 = vmatprep.subr.mxu0 0.0
    %1695 = vmatpush2.msra.mxu0 0.0
    %1696 = vmatprep.subr.mxu0 0.0
    %1697 = vmatpush2.msra.mxu0 0.0
    %1698 = vmatprep.subr.mxu0 0.0
    %1699 = vmatpush2.msra.mxu0 0.0
    %1700 = vmatprep.subr.mxu0 0.0
    %1701 = vmatpush2.msra.mxu0 0.0
    %1702 = vmatprep.subr.mxu0 0.0
    %1703 = vmatpush2.msra.mxu0 0.0
    %1704 = vmatprep.subr.mxu0 0.0
    %1705 = vmatpush2.msra.mxu0 0.0
    %1706 = vmatprep.subr.mxu0 0.0
    %1707 = vmatpush2.msra.mxu0 0.0
    %1708 = vmatprep.subr.mxu0 0.0
    %1709 = vmatpush2.msra.mxu0 0.0
    %1710 = vmatprep.subr.mxu0 0.0
    %1711 = vmatpush2.msra.mxu0 0.0
    %1712 = vmatprep.subr.mxu0 0.0
    %1713 = vmatpush2.msra.mxu0 0.0
    %1714 = vmatprep.subr.mxu0 0.0
    %1715 = vmatpush2.msra.mxu0 0.0
    %1716 = vmatprep.subr.mxu0 0.0
    %1717 = vmatpush2.msra.mxu0 0.0
    %1718 = vmatprep.mubr.f32.mxu0 0.0
    %1719 = vmatmul.mubr.f32.gmra.mxu0 %v1640
    %v1720 = vpop.f32.mrf.mxu0
    %v1721 = vadd.f32 0.0, %v1720
    %v1722 = vpop.f32.mrf.mxu0
    %1723 = vmatprep.mubr.f32.mxu0 0.0
    %1724 = vmatmul.mubr.f32.gmra.mxu0 %v1643
    %v1725 = vpop.f32.mrf.mxu0
    %v1726 = vadd.f32 0.0, %v1725
    %v1727 = vpop.f32.mrf.mxu0
    %1728 = vmatprep.mubr.f32.mxu0 0.0
    %1729 = vmatmul.mubr.f32.gmra.mxu0 %v1646
    %v1730 = vpop.f32.mrf.mxu0
    %v1731 = vadd.f32 0.0, %v1730
    %v1732 = vpop.f32.mrf.mxu0
    %1733 = vmatprep.mubr.f32.mxu0 0.0
    %1734 = vmatmul.mubr.f32.gmra.mxu0 %v1649
    %v1735 = vpop.f32.mrf.mxu0
    %v1736 = vadd.f32 0.0, %v1735
    %v1737 = vpop.f32.mrf.mxu0
    %1738 = vdwg.mxu0
    %v1739 = vmax.f32 %v1721, %v1731
    %v1740 = vmax.f32 %v1726, %v1736
    %v1741 = vld [vmem:[%s16] sm:$0xff]
    %v1742 = vld [vmem:[%s16 + $0x8] sm:$0xff]
    %v1743 = vld [vmem:[%s16 + $0x10] sm:$0xff]
    %v1744 = vld [vmem:[%s16 + $0x18] sm:$0xff]
    %v1745 = vld [vmem:[%s16 + $0x20] sm:$0xff]
    %v1746 = vld [vmem:[%s16 + $0x28] sm:$0xff]
    %v1747 = vld [vmem:[%s16 + $0x30] sm:$0xff]
    %v1748 = vld [vmem:[%s16 + $0x38] sm:$0xff]
    %s1749 = scalar_lea.vmem %s16, 64
    %v1750 = vld [vmem:[%s1749] sm:$0xff]
    %v1751 = vld [vmem:[%s1749 + $0x8] sm:$0xff]
    %v1752 = vld [vmem:[%s1749 + $0x10] sm:$0xff]
    %v1753 = vld [vmem:[%s1749 + $0x18] sm:$0xff]
    %v1754 = vld [vmem:[%s1749 + $0x20] sm:$0xff]
    %v1755 = vld [vmem:[%s1749 + $0x28] sm:$0xff]
    %v1756 = vld [vmem:[%s1749 + $0x30] sm:$0xff]
    %v1757 = vld [vmem:[%s1749 + $0x38] sm:$0xff]
    %v1759 = vsel %vm814, %v1740, 0
    %1761 = vmatprep.subr.mxu0 0.0
    %1762 = vmatpush1.msra.mxu0 0.0
    %1763 = vmatprep.subr.mxu0 0.0
    %1764 = vmatpush1.msra.mxu0 0.0
    %1765 = vmatprep.subr.mxu0 0.0
    %1766 = vmatpush1.msra.mxu0 0.0
    %1767 = vmatprep.subr.mxu0 0.0
    %1768 = vmatpush1.msra.mxu0 0.0
    %1769 = vmatprep.subr.mxu0 0.0
    %1770 = vmatpush1.msra.mxu0 0.0
    %1771 = vmatprep.subr.mxu0 0.0
    %1772 = vmatpush1.msra.mxu0 0.0
    %1773 = vmatprep.subr.mxu0 0.0
    %1774 = vmatpush1.msra.mxu0 0.0
    %1775 = vmatprep.subr.mxu0 0.0
    %1776 = vmatpush1.msra.mxu0 0.0
    %1777 = vmatprep.subr.mxu0 0.0
    %1778 = vmatpush1.msra.mxu0 %v1757
    %1779 = vmatprep.subr.mxu0 0.0
    %1780 = vmatpush1.msra.mxu0 %v1756
    %1781 = vmatprep.subr.mxu0 0.0
    %1782 = vmatpush1.msra.mxu0 %v1755
    %1783 = vmatprep.subr.mxu0 0.0
    %1784 = vmatpush1.msra.mxu0 %v1754
    %1785 = vmatprep.subr.mxu0 0.0
    %1786 = vmatpush1.msra.mxu0 %v1753
    %1787 = vmatprep.subr.mxu0 0.0
    %1788 = vmatpush1.msra.mxu0 %v1752
    %1789 = vmatprep.subr.mxu0 0.0
    %1790 = vmatpush1.msra.mxu0 %v1751
    %1791 = vmatprep.subr.mxu0 0.0
    %1792 = vmatpush1.msra.mxu0 %v1750
    %1793 = vmatprep.subr.mxu0 0.0
    %1794 = vmatpush2.msra.mxu0 0.0
    %1795 = vmatprep.subr.mxu0 0.0
    %1796 = vmatpush2.msra.mxu0 0.0
    %1797 = vmatprep.subr.mxu0 0.0
    %1798 = vmatpush2.msra.mxu0 0.0
    %1799 = vmatprep.subr.mxu0 0.0
    %1800 = vmatpush2.msra.mxu0 0.0
    %1801 = vmatprep.subr.mxu0 0.0
    %1802 = vmatpush2.msra.mxu0 0.0
    %1803 = vmatprep.subr.mxu0 0.0
    %1804 = vmatpush2.msra.mxu0 0.0
    %1805 = vmatprep.subr.mxu0 0.0
    %1806 = vmatpush2.msra.mxu0 0.0
    %1807 = vmatprep.subr.mxu0 0.0
    %1808 = vmatpush2.msra.mxu0 0.0
    %1809 = vmatprep.subr.mxu0 0.0
    %1810 = vmatpush2.msra.mxu0 0.0
    %1811 = vmatprep.subr.mxu0 0.0
    %1812 = vmatpush2.msra.mxu0 0.0
    %1813 = vmatprep.subr.mxu0 0.0
    %1814 = vmatpush2.msra.mxu0 0.0
    %1815 = vmatprep.subr.mxu0 0.0
    %1816 = vmatpush2.msra.mxu0 0.0
    %1817 = vmatprep.subr.mxu0 0.0
    %1818 = vmatpush2.msra.mxu0 0.0
    %1819 = vmatprep.subr.mxu0 0.0
    %1820 = vmatpush2.msra.mxu0 0.0
    %1821 = vmatprep.subr.mxu0 0.0
    %1822 = vmatpush2.msra.mxu0 0.0
    %1823 = vmatprep.subr.mxu0 0.0
    %1824 = vmatpush2.msra.mxu0 0.0
    %1825 = vmatprep.mubr.f32.mxu0 0.0
    %1826 = vmatmul.mubr.f32.gmra.mxu0 %v1759
    %v1827 = vpop.f32.mrf.mxu0
    %v1828 = vadd.f32 0.0, %v1827
    %v1829 = vpop.f32.mrf.mxu0
    %1830 = vdwg.mxu0
    %v1832 = vsel %vm814, %v1739, 0
    %1834 = vmatprep.subr.mxu0 0.0
    %1835 = vmatpush1.msra.mxu0 0.0
    %1836 = vmatprep.subr.mxu0 0.0
    %1837 = vmatpush1.msra.mxu0 0.0
    %1838 = vmatprep.subr.mxu0 0.0
    %1839 = vmatpush1.msra.mxu0 0.0
    %1840 = vmatprep.subr.mxu0 0.0
    %1841 = vmatpush1.msra.mxu0 0.0
    %1842 = vmatprep.subr.mxu0 0.0
    %1843 = vmatpush1.msra.mxu0 0.0
    %1844 = vmatprep.subr.mxu0 0.0
    %1845 = vmatpush1.msra.mxu0 0.0
    %1846 = vmatprep.subr.mxu0 0.0
    %1847 = vmatpush1.msra.mxu0 0.0
    %1848 = vmatprep.subr.mxu0 0.0
    %1849 = vmatpush1.msra.mxu0 0.0
    %1850 = vmatprep.subr.mxu0 0.0
    %1851 = vmatpush1.msra.mxu0 %v1748
    %1852 = vmatprep.subr.mxu0 0.0
    %1853 = vmatpush1.msra.mxu0 %v1747
    %1854 = vmatprep.subr.mxu0 0.0
    %1855 = vmatpush1.msra.mxu0 %v1746
    %1856 = vmatprep.subr.mxu0 0.0
    %1857 = vmatpush1.msra.mxu0 %v1745
    %1858 = vmatprep.subr.mxu0 0.0
    %1859 = vmatpush1.msra.mxu0 %v1744
    %1860 = vmatprep.subr.mxu0 0.0
    %1861 = vmatpush1.msra.mxu0 %v1743
    %1862 = vmatprep.subr.mxu0 0.0
    %1863 = vmatpush1.msra.mxu0 %v1742
    %1864 = vmatprep.subr.mxu0 0.0
    %1865 = vmatpush1.msra.mxu0 %v1741
    %1866 = vmatprep.subr.mxu0 0.0
    %1867 = vmatpush2.msra.mxu0 0.0
    %1868 = vmatprep.subr.mxu0 0.0
    %1869 = vmatpush2.msra.mxu0 0.0
    %1870 = vmatprep.subr.mxu0 0.0
    %1871 = vmatpush2.msra.mxu0 0.0
    %1872 = vmatprep.subr.mxu0 0.0
    %1873 = vmatpush2.msra.mxu0 0.0
    %1874 = vmatprep.subr.mxu0 0.0
    %1875 = vmatpush2.msra.mxu0 0.0
    %1876 = vmatprep.subr.mxu0 0.0
    %1877 = vmatpush2.msra.mxu0 0.0
    %1878 = vmatprep.subr.mxu0 0.0
    %1879 = vmatpush2.msra.mxu0 0.0
    %1880 = vmatprep.subr.mxu0 0.0
    %1881 = vmatpush2.msra.mxu0 0.0
    %1882 = vmatprep.subr.mxu0 0.0
    %1883 = vmatpush2.msra.mxu0 0.0
    %1884 = vmatprep.subr.mxu0 0.0
    %1885 = vmatpush2.msra.mxu0 0.0
    %1886 = vmatprep.subr.mxu0 0.0
    %1887 = vmatpush2.msra.mxu0 0.0
    %1888 = vmatprep.subr.mxu0 0.0
    %1889 = vmatpush2.msra.mxu0 0.0
    %1890 = vmatprep.subr.mxu0 0.0
    %1891 = vmatpush2.msra.mxu0 0.0
    %1892 = vmatprep.subr.mxu0 0.0
    %1893 = vmatpush2.msra.mxu0 0.0
    %1894 = vmatprep.subr.mxu0 0.0
    %1895 = vmatpush2.msra.mxu0 0.0
    %1896 = vmatprep.subr.mxu0 0.0
    %1897 = vmatpush2.msra.mxu0 0.0
    %1898 = vmatprep.mubr.f32.mxu0 0.0
    %1899 = vmatmul.mubr.f32.gmra.mxu0 %v1832
    %v1900 = vpop.f32.mrf.mxu0
    %v1901 = vadd.f32 %v1828, %v1900
    %v1902 = vpop.f32.mrf.mxu0
    %1903 = vdwg.mxu0
    %s1904 = sld [smem:[#allocation5 + $0x80]]
    %s1905 = sld [smem:[#allocation5 + $0x81]]
    %s1906 = scalar_lea.vmem %s0, 32
    %v1907 = vld [vmem:[%s1906] sm:$0xff]
    %v1908 = vld [vmem:[%s1906 + $0x8] sm:$0xff]
    %v1909 = vld [vmem:[%s1906 + $0x10] sm:$0xff]
    %v1910 = vld [vmem:[%s1906 + $0x18] sm:$0xff]
    %v1911 = vstv %s1904
    %v1912 = vmul.f32 %v1907, %v1911
    %v1913 = vmul.f32 %v1908, %v1911
    %v1914 = vmul.f32 %v1909, %v1911
    %v1915 = vmul.f32 %v1910, %v1911
    %v1916 = vstv %s1905
    %v1917 = vadd.f32 %v1912, %v1916
    %v1918 = vadd.f32 %v1913, %v1916
    %v1919 = vadd.f32 %v1914, %v1916
    %v1920 = vadd.f32 %v1915, %v1916
    %v1921 = vld [vmem:[%s3] sm:$0xff]
    %v1922 = vld [vmem:[%s3 + $0x8] sm:$0xff]
    %v1923 = vld [vmem:[%s3 + $0x10] sm:$0xff]
    %v1924 = vld [vmem:[%s3 + $0x18] sm:$0xff]
    %v1925 = vld [vmem:[%s3 + $0x20] sm:$0xf]
    %v1927 = vsel %vm128, %v1921, 0
    %v1930 = vsel %vm128, %v1922, 0
    %v1933 = vsel %vm128, %v1923, 0
    %v1936 = vsel %vm128, %v1924, 0
    %v1939 = vsel %vm128, %v1925, 0
    %1941 = vmatprep.subr.mxu0 0.0
    %1942 = vmatpush1.msra.mxu0 0.0
    %1943 = vmatprep.subr.mxu0 0.0
    %1944 = vmatpush1.msra.mxu0 0.0
    %1945 = vmatprep.subr.mxu0 0.0
    %1946 = vmatpush1.msra.mxu0 0.0
    %1947 = vmatprep.subr.mxu0 0.0
    %1948 = vmatpush1.msra.mxu0 0.0
    %1949 = vmatprep.subr.mxu0 0.0
    %1950 = vmatpush1.msra.mxu0 0.0
    %1951 = vmatprep.subr.mxu0 0.0
    %1952 = vmatpush1.msra.mxu0 0.0
    %1953 = vmatprep.subr.mxu0 0.0
    %1954 = vmatpush1.msra.mxu0 0.0
    %1955 = vmatprep.subr.mxu0 0.0
    %1956 = vmatpush1.msra.mxu0 0.0
    %1957 = vmatprep.subr.mxu0 0.0
    %1958 = vmatpush1.msra.mxu0 0.0
    %1959 = vmatprep.subr.mxu0 0.0
    %1960 = vmatpush1.msra.mxu0 0.0
    %1961 = vmatprep.subr.mxu0 0.0
    %1962 = vmatpush1.msra.mxu0 0.0
    %1963 = vmatprep.subr.mxu0 0.0
    %1964 = vmatpush1.msra.mxu0 0.0
    %1965 = vmatprep.subr.mxu0 0.0
    %1966 = vmatpush1.msra.mxu0 %v1920
    %1967 = vmatprep.subr.mxu0 0.0
    %1968 = vmatpush1.msra.mxu0 %v1919
    %1969 = vmatprep.subr.mxu0 0.0
    %1970 = vmatpush1.msra.mxu0 %v1918
    %1971 = vmatprep.subr.mxu0 0.0
    %1972 = vmatpush1.msra.mxu0 %v1917
    %1973 = vmatprep.subr.mxu0 0.0
    %1974 = vmatpush2.msra.mxu0 0.0
    %1975 = vmatprep.subr.mxu0 0.0
    %1976 = vmatpush2.msra.mxu0 0.0
    %1977 = vmatprep.subr.mxu0 0.0
    %1978 = vmatpush2.msra.mxu0 0.0
    %1979 = vmatprep.subr.mxu0 0.0
    %1980 = vmatpush2.msra.mxu0 0.0
    %1981 = vmatprep.subr.mxu0 0.0
    %1982 = vmatpush2.msra.mxu0 0.0
    %1983 = vmatprep.subr.mxu0 0.0
    %1984 = vmatpush2.msra.mxu0 0.0
    %1985 = vmatprep.subr.mxu0 0.0
    %1986 = vmatpush2.msra.mxu0 0.0
    %1987 = vmatprep.subr.mxu0 0.0
    %1988 = vmatpush2.msra.mxu0 0.0
    %1989 = vmatprep.subr.mxu0 0.0
    %1990 = vmatpush2.msra.mxu0 0.0
    %1991 = vmatprep.subr.mxu0 0.0
    %1992 = vmatpush2.msra.mxu0 0.0
    %1993 = vmatprep.subr.mxu0 0.0
    %1994 = vmatpush2.msra.mxu0 0.0
    %1995 = vmatprep.subr.mxu0 0.0
    %1996 = vmatpush2.msra.mxu0 0.0
    %1997 = vmatprep.subr.mxu0 0.0
    %1998 = vmatpush2.msra.mxu0 0.0
    %1999 = vmatprep.subr.mxu0 0.0
    %2000 = vmatpush2.msra.mxu0 0.0
    %2001 = vmatprep.subr.mxu0 0.0
    %2002 = vmatpush2.msra.mxu0 0.0
    %2003 = vmatprep.subr.mxu0 0.0
    %2004 = vmatpush2.msra.mxu0 0.0
    %2005 = vmatprep.mubr.f32.mxu0 0.0
    %2006 = vmatmul.mubr.f32.gmra.mxu0 %v1927
    %v2007 = vpop.f32.mrf.mxu0
    %v2008 = vadd.f32 0.0, %v2007
    %v2009 = vpop.f32.mrf.mxu0
    %2010 = vmatprep.mubr.f32.mxu0 0.0
    %2011 = vmatmul.mubr.f32.gmra.mxu0 %v1930
    %v2012 = vpop.f32.mrf.mxu0
    %v2013 = vadd.f32 0.0, %v2012
    %v2014 = vpop.f32.mrf.mxu0
    %2015 = vmatprep.mubr.f32.mxu0 0.0
    %2016 = vmatmul.mubr.f32.gmra.mxu0 %v1933
    %v2017 = vpop.f32.mrf.mxu0
    %v2018 = vadd.f32 0.0, %v2017
    %v2019 = vpop.f32.mrf.mxu0
    %2020 = vmatprep.mubr.f32.mxu0 0.0
    %2021 = vmatmul.mubr.f32.gmra.mxu0 %v1936
    %v2022 = vpop.f32.mrf.mxu0
    %v2023 = vadd.f32 0.0, %v2022
    %v2024 = vpop.f32.mrf.mxu0
    %2025 = vmatprep.mubr.f32.mxu0 0.0
    %2026 = vmatmul.mubr.f32.gmra.mxu0 %v1939
    %v2027 = vpop.f32.mrf.mxu0
    %v2028 = vadd.f32 0.0, %v2027
    %v2029 = vpop.f32.mrf.mxu0
    %2030 = vdwg.mxu0
    %2031 = vst.msk [vmem:[#allocation2] sm:$0xff] %vm234, %v2008
    %2032 = vst.msk [vmem:[#allocation2 + $0x8] sm:$0xff] %vm234, %v2013
    %2033 = vst.msk [vmem:[#allocation2 + $0x10] sm:$0xff] %vm234, %v2018
    %2034 = vst.msk [vmem:[#allocation2 + $0x18] sm:$0xff] %vm234, %v2023
    %2035 = vst.msk [vmem:[#allocation2 + $0x20] sm:$0xf] %vm239, %v2028
    %s2036 = sld [smem:[#allocation8 + $0x3]]
    %v2037 = vld [vmem:[#allocation2] sm:$0xff]
    %v2038 = vld [vmem:[#allocation2 + $0x8] sm:$0xff]
    %v2039 = vld [vmem:[#allocation2 + $0x10] sm:$0xff]
    %v2040 = vld [vmem:[#allocation2 + $0x18] sm:$0xff]
    %v2041 = vld [vmem:[#allocation2 + $0x20] sm:$0x3]
    %s2042 = scalar_lea.vmem %s7, 72
    %v2043 = vld [vmem:[%s2042] sm:$0xff]
    %v2044 = vld [vmem:[%s2042 + $0x8] sm:$0xff]
    %v2045 = vld [vmem:[%s2042 + $0x10] sm:$0x3]
    %v2046 = vld [vmem:[#allocation2 + $0x1] sm:$0xff]
    %v2047 = vld [vmem:[#allocation2 + $0x9] sm:$0xff]
    %v2048 = vld [vmem:[#allocation2 + $0x11] sm:$0xff]
    %v2049 = vld [vmem:[#allocation2 + $0x19] sm:$0xff]
    %v2050 = vld [vmem:[#allocation2 + $0x21] sm:$0x3]
    %s2051 = scalar_lea.vmem %s7, 96
    %v2052 = vld [vmem:[%s2051] sm:$0xff]
    %v2053 = vld [vmem:[%s2051 + $0x8] sm:$0xff]
    %v2054 = vld [vmem:[%s2051 + $0x10] sm:$0x3]
    %v2056 = vsel %vm91, %v2046, 0
    %v2059 = vsel %vm91, %v2047, 0
    %v2062 = vsel %vm91, %v2048, 0
    %v2065 = vsel %vm91, %v2049, 0
    %v2068 = vsel %vm91, %v2050, 0
    %v2071 = vsel %vm274, %v2054, 0
    %2073 = vmatprep.subr.mxu0 0.0
    %2074 = vmatpush1.msra.mxu0 0.0
    %2075 = vmatprep.subr.mxu0 0.0
    %2076 = vmatpush1.msra.mxu0 0.0
    %2077 = vmatprep.subr.mxu0 0.0
    %2078 = vmatpush1.msra.mxu0 0.0
    %2079 = vmatprep.subr.mxu0 0.0
    %2080 = vmatpush1.msra.mxu0 0.0
    %2081 = vmatprep.subr.mxu0 0.0
    %2082 = vmatpush1.msra.mxu0 0.0
    %2083 = vmatprep.subr.mxu0 0.0
    %2084 = vmatpush1.msra.mxu0 0.0
    %2085 = vmatprep.subr.mxu0 0.0
    %2086 = vmatpush1.msra.mxu0 0.0
    %2087 = vmatprep.subr.mxu0 0.0
    %2088 = vmatpush1.msra.mxu0 0.0
    %2089 = vmatprep.subr.mxu0 0.0
    %2090 = vmatpush1.msra.mxu0 0.0
    %2091 = vmatprep.subr.mxu0 0.0
    %2092 = vmatpush1.msra.mxu0 0.0
    %2093 = vmatprep.subr.mxu0 0.0
    %2094 = vmatpush1.msra.mxu0 0.0
    %2095 = vmatprep.subr.mxu0 0.0
    %2096 = vmatpush1.msra.mxu0 0.0
    %2097 = vmatprep.subr.mxu0 0.0
    %2098 = vmatpush1.msra.mxu0 0.0
    %2099 = vmatprep.subr.mxu0 0.0
    %2100 = vmatpush1.msra.mxu0 %v2071
    %2101 = vmatprep.subr.mxu0 0.0
    %2102 = vmatpush1.msra.mxu0 %v2053
    %2103 = vmatprep.subr.mxu0 0.0
    %2104 = vmatpush1.msra.mxu0 %v2052
    %2105 = vmatprep.subr.mxu0 0.0
    %2106 = vmatpush2.msra.mxu0 0.0
    %2107 = vmatprep.subr.mxu0 0.0
    %2108 = vmatpush2.msra.mxu0 0.0
    %2109 = vmatprep.subr.mxu0 0.0
    %2110 = vmatpush2.msra.mxu0 0.0
    %2111 = vmatprep.subr.mxu0 0.0
    %2112 = vmatpush2.msra.mxu0 0.0
    %2113 = vmatprep.subr.mxu0 0.0
    %2114 = vmatpush2.msra.mxu0 0.0
    %2115 = vmatprep.subr.mxu0 0.0
    %2116 = vmatpush2.msra.mxu0 0.0
    %2117 = vmatprep.subr.mxu0 0.0
    %2118 = vmatpush2.msra.mxu0 0.0
    %2119 = vmatprep.subr.mxu0 0.0
    %2120 = vmatpush2.msra.mxu0 0.0
    %2121 = vmatprep.subr.mxu0 0.0
    %2122 = vmatpush2.msra.mxu0 0.0
    %2123 = vmatprep.subr.mxu0 0.0
    %2124 = vmatpush2.msra.mxu0 0.0
    %2125 = vmatprep.subr.mxu0 0.0
    %2126 = vmatpush2.msra.mxu0 0.0
    %2127 = vmatprep.subr.mxu0 0.0
    %2128 = vmatpush2.msra.mxu0 0.0
    %2129 = vmatprep.subr.mxu0 0.0
    %2130 = vmatpush2.msra.mxu0 0.0
    %2131 = vmatprep.subr.mxu0 0.0
    %2132 = vmatpush2.msra.mxu0 0.0
    %2133 = vmatprep.subr.mxu0 0.0
    %2134 = vmatpush2.msra.mxu0 0.0
    %2135 = vmatprep.subr.mxu0 0.0
    %2136 = vmatpush2.msra.mxu0 0.0
    %2137 = vmatprep.mubr.f32.mxu0 0.0
    %2138 = vmatmul.mubr.f32.gmra.mxu0 %v2056
    %v2139 = vpop.f32.mrf.mxu0
    %v2140 = vadd.f32 0.0, %v2139
    %v2141 = vpop.f32.mrf.mxu0
    %2142 = vmatprep.mubr.f32.mxu0 0.0
    %2143 = vmatmul.mubr.f32.gmra.mxu0 %v2059
    %v2144 = vpop.f32.mrf.mxu0
    %v2145 = vadd.f32 0.0, %v2144
    %v2146 = vpop.f32.mrf.mxu0
    %2147 = vmatprep.mubr.f32.mxu0 0.0
    %2148 = vmatmul.mubr.f32.gmra.mxu0 %v2062
    %v2149 = vpop.f32.mrf.mxu0
    %v2150 = vadd.f32 0.0, %v2149
    %v2151 = vpop.f32.mrf.mxu0
    %2152 = vmatprep.mubr.f32.mxu0 0.0
    %2153 = vmatmul.mubr.f32.gmra.mxu0 %v2065
    %v2154 = vpop.f32.mrf.mxu0
    %v2155 = vadd.f32 0.0, %v2154
    %v2156 = vpop.f32.mrf.mxu0
    %2157 = vmatprep.mubr.f32.mxu0 0.0
    %2158 = vmatmul.mubr.f32.gmra.mxu0 %v2068
    %v2159 = vpop.f32.mrf.mxu0
    %v2160 = vadd.f32 0.0, %v2159
    %v2161 = vpop.f32.mrf.mxu0
    %2162 = vdwg.mxu0
    %v2164 = vsel %vm91, %v2037, 0
    %v2167 = vsel %vm91, %v2038, 0
    %v2170 = vsel %vm91, %v2039, 0
    %v2173 = vsel %vm91, %v2040, 0
    %v2176 = vsel %vm91, %v2041, 0
    %v2179 = vsel %vm274, %v2045, 0
    %2181 = vmatprep.subr.mxu0 0.0
    %2182 = vmatpush1.msra.mxu0 0.0
    %2183 = vmatprep.subr.mxu0 0.0
    %2184 = vmatpush1.msra.mxu0 0.0
    %2185 = vmatprep.subr.mxu0 0.0
    %2186 = vmatpush1.msra.mxu0 0.0
    %2187 = vmatprep.subr.mxu0 0.0
    %2188 = vmatpush1.msra.mxu0 0.0
    %2189 = vmatprep.subr.mxu0 0.0
    %2190 = vmatpush1.msra.mxu0 0.0
    %2191 = vmatprep.subr.mxu0 0.0
    %2192 = vmatpush1.msra.mxu0 0.0
    %2193 = vmatprep.subr.mxu0 0.0
    %2194 = vmatpush1.msra.mxu0 0.0
    %2195 = vmatprep.subr.mxu0 0.0
    %2196 = vmatpush1.msra.mxu0 0.0
    %2197 = vmatprep.subr.mxu0 0.0
    %2198 = vmatpush1.msra.mxu0 0.0
    %2199 = vmatprep.subr.mxu0 0.0
    %2200 = vmatpush1.msra.mxu0 0.0
    %2201 = vmatprep.subr.mxu0 0.0
    %2202 = vmatpush1.msra.mxu0 0.0
    %2203 = vmatprep.subr.mxu0 0.0
    %2204 = vmatpush1.msra.mxu0 0.0
    %2205 = vmatprep.subr.mxu0 0.0
    %2206 = vmatpush1.msra.mxu0 0.0
    %2207 = vmatprep.subr.mxu0 0.0
    %2208 = vmatpush1.msra.mxu0 %v2179
    %2209 = vmatprep.subr.mxu0 0.0
    %2210 = vmatpush1.msra.mxu0 %v2044
    %2211 = vmatprep.subr.mxu0 0.0
    %2212 = vmatpush1.msra.mxu0 %v2043
    %2213 = vmatprep.subr.mxu0 0.0
    %2214 = vmatpush2.msra.mxu0 0.0
    %2215 = vmatprep.subr.mxu0 0.0
    %2216 = vmatpush2.msra.mxu0 0.0
    %2217 = vmatprep.subr.mxu0 0.0
    %2218 = vmatpush2.msra.mxu0 0.0
    %2219 = vmatprep.subr.mxu0 0.0
    %2220 = vmatpush2.msra.mxu0 0.0
    %2221 = vmatprep.subr.mxu0 0.0
    %2222 = vmatpush2.msra.mxu0 0.0
    %2223 = vmatprep.subr.mxu0 0.0
    %2224 = vmatpush2.msra.mxu0 0.0
    %2225 = vmatprep.subr.mxu0 0.0
    %2226 = vmatpush2.msra.mxu0 0.0
    %2227 = vmatprep.subr.mxu0 0.0
    %2228 = vmatpush2.msra.mxu0 0.0
    %2229 = vmatprep.subr.mxu0 0.0
    %2230 = vmatpush2.msra.mxu0 0.0
    %2231 = vmatprep.subr.mxu0 0.0
    %2232 = vmatpush2.msra.mxu0 0.0
    %2233 = vmatprep.subr.mxu0 0.0
    %2234 = vmatpush2.msra.mxu0 0.0
    %2235 = vmatprep.subr.mxu0 0.0
    %2236 = vmatpush2.msra.mxu0 0.0
    %2237 = vmatprep.subr.mxu0 0.0
    %2238 = vmatpush2.msra.mxu0 0.0
    %2239 = vmatprep.subr.mxu0 0.0
    %2240 = vmatpush2.msra.mxu0 0.0
    %2241 = vmatprep.subr.mxu0 0.0
    %2242 = vmatpush2.msra.mxu0 0.0
    %2243 = vmatprep.subr.mxu0 0.0
    %2244 = vmatpush2.msra.mxu0 0.0
    %2245 = vmatprep.mubr.f32.mxu0 0.0
    %2246 = vmatmul.mubr.f32.gmra.mxu0 %v2164
    %v2247 = vpop.f32.mrf.mxu0
    %v2248 = vadd.f32 %v2140, %v2247
    %v2249 = vpop.f32.mrf.mxu0
    %2250 = vmatprep.mubr.f32.mxu0 0.0
    %2251 = vmatmul.mubr.f32.gmra.mxu0 %v2167
    %v2252 = vpop.f32.mrf.mxu0
    %v2253 = vadd.f32 %v2145, %v2252
    %v2254 = vpop.f32.mrf.mxu0
    %2255 = vmatprep.mubr.f32.mxu0 0.0
    %2256 = vmatmul.mubr.f32.gmra.mxu0 %v2170
    %v2257 = vpop.f32.mrf.mxu0
    %v2258 = vadd.f32 %v2150, %v2257
    %v2259 = vpop.f32.mrf.mxu0
    %2260 = vmatprep.mubr.f32.mxu0 0.0
    %2261 = vmatmul.mubr.f32.gmra.mxu0 %v2173
    %v2262 = vpop.f32.mrf.mxu0
    %v2263 = vadd.f32 %v2155, %v2262
    %v2264 = vpop.f32.mrf.mxu0
    %2265 = vmatprep.mubr.f32.mxu0 0.0
    %2266 = vmatmul.mubr.f32.gmra.mxu0 %v2176
    %v2267 = vpop.f32.mrf.mxu0
    %v2268 = vadd.f32 %v2160, %v2267
    %v2269 = vpop.f32.mrf.mxu0
    %2270 = vdwg.mxu0
    %v2271 = vld [vmem:[#allocation2 + $0x2] sm:$0xff]
    %v2272 = vld [vmem:[#allocation2 + $0xa] sm:$0xff]
    %v2273 = vld [vmem:[#allocation2 + $0x12] sm:$0xff]
    %v2274 = vld [vmem:[#allocation2 + $0x1a] sm:$0xff]
    %v2275 = vld [vmem:[#allocation2 + $0x22] sm:$0x3]
    %s2276 = scalar_lea.vmem %s7, 120
    %v2277 = vld [vmem:[%s2276] sm:$0xff]
    %v2278 = vld [vmem:[%s2276 + $0x8] sm:$0xff]
    %v2279 = vld [vmem:[%s2276 + $0x10] sm:$0x3]
    %v2281 = vsel %vm91, %v2271, 0
    %v2284 = vsel %vm91, %v2272, 0
    %v2287 = vsel %vm91, %v2273, 0
    %v2290 = vsel %vm91, %v2274, 0
    %v2293 = vsel %vm91, %v2275, 0
    %v2296 = vsel %vm274, %v2279, 0
    %2298 = vmatprep.subr.mxu0 0.0
    %2299 = vmatpush1.msra.mxu0 0.0
    %2300 = vmatprep.subr.mxu0 0.0
    %2301 = vmatpush1.msra.mxu0 0.0
    %2302 = vmatprep.subr.mxu0 0.0
    %2303 = vmatpush1.msra.mxu0 0.0
    %2304 = vmatprep.subr.mxu0 0.0
    %2305 = vmatpush1.msra.mxu0 0.0
    %2306 = vmatprep.subr.mxu0 0.0
    %2307 = vmatpush1.msra.mxu0 0.0
    %2308 = vmatprep.subr.mxu0 0.0
    %2309 = vmatpush1.msra.mxu0 0.0
    %2310 = vmatprep.subr.mxu0 0.0
    %2311 = vmatpush1.msra.mxu0 0.0
    %2312 = vmatprep.subr.mxu0 0.0
    %2313 = vmatpush1.msra.mxu0 0.0
    %2314 = vmatprep.subr.mxu0 0.0
    %2315 = vmatpush1.msra.mxu0 0.0
    %2316 = vmatprep.subr.mxu0 0.0
    %2317 = vmatpush1.msra.mxu0 0.0
    %2318 = vmatprep.subr.mxu0 0.0
    %2319 = vmatpush1.msra.mxu0 0.0
    %2320 = vmatprep.subr.mxu0 0.0
    %2321 = vmatpush1.msra.mxu0 0.0
    %2322 = vmatprep.subr.mxu0 0.0
    %2323 = vmatpush1.msra.mxu0 0.0
    %2324 = vmatprep.subr.mxu0 0.0
    %2325 = vmatpush1.msra.mxu0 %v2296
    %2326 = vmatprep.subr.mxu0 0.0
    %2327 = vmatpush1.msra.mxu0 %v2278
    %2328 = vmatprep.subr.mxu0 0.0
    %2329 = vmatpush1.msra.mxu0 %v2277
    %2330 = vmatprep.subr.mxu0 0.0
    %2331 = vmatpush2.msra.mxu0 0.0
    %2332 = vmatprep.subr.mxu0 0.0
    %2333 = vmatpush2.msra.mxu0 0.0
    %2334 = vmatprep.subr.mxu0 0.0
    %2335 = vmatpush2.msra.mxu0 0.0
    %2336 = vmatprep.subr.mxu0 0.0
    %2337 = vmatpush2.msra.mxu0 0.0
    %2338 = vmatprep.subr.mxu0 0.0
    %2339 = vmatpush2.msra.mxu0 0.0
    %2340 = vmatprep.subr.mxu0 0.0
    %2341 = vmatpush2.msra.mxu0 0.0
    %2342 = vmatprep.subr.mxu0 0.0
    %2343 = vmatpush2.msra.mxu0 0.0
    %2344 = vmatprep.subr.mxu0 0.0
    %2345 = vmatpush2.msra.mxu0 0.0
    %2346 = vmatprep.subr.mxu0 0.0
    %2347 = vmatpush2.msra.mxu0 0.0
    %2348 = vmatprep.subr.mxu0 0.0
    %2349 = vmatpush2.msra.mxu0 0.0
    %2350 = vmatprep.subr.mxu0 0.0
    %2351 = vmatpush2.msra.mxu0 0.0
    %2352 = vmatprep.subr.mxu0 0.0
    %2353 = vmatpush2.msra.mxu0 0.0
    %2354 = vmatprep.subr.mxu0 0.0
    %2355 = vmatpush2.msra.mxu0 0.0
    %2356 = vmatprep.subr.mxu0 0.0
    %2357 = vmatpush2.msra.mxu0 0.0
    %2358 = vmatprep.subr.mxu0 0.0
    %2359 = vmatpush2.msra.mxu0 0.0
    %2360 = vmatprep.subr.mxu0 0.0
    %2361 = vmatpush2.msra.mxu0 0.0
    %2362 = vmatprep.mubr.f32.mxu0 0.0
    %2363 = vmatmul.mubr.f32.gmra.mxu0 %v2281
    %v2364 = vpop.f32.mrf.mxu0
    %v2365 = vadd.f32 0.0, %v2364
    %v2366 = vpop.f32.mrf.mxu0
    %2367 = vmatprep.mubr.f32.mxu0 0.0
    %2368 = vmatmul.mubr.f32.gmra.mxu0 %v2284
    %v2369 = vpop.f32.mrf.mxu0
    %v2370 = vadd.f32 0.0, %v2369
    %v2371 = vpop.f32.mrf.mxu0
    %2372 = vmatprep.mubr.f32.mxu0 0.0
    %2373 = vmatmul.mubr.f32.gmra.mxu0 %v2287
    %v2374 = vpop.f32.mrf.mxu0
    %v2375 = vadd.f32 0.0, %v2374
    %v2376 = vpop.f32.mrf.mxu0
    %2377 = vmatprep.mubr.f32.mxu0 0.0
    %2378 = vmatmul.mubr.f32.gmra.mxu0 %v2290
    %v2379 = vpop.f32.mrf.mxu0
    %v2380 = vadd.f32 0.0, %v2379
    %v2381 = vpop.f32.mrf.mxu0
    %2382 = vmatprep.mubr.f32.mxu0 0.0
    %2383 = vmatmul.mubr.f32.gmra.mxu0 %v2293
    %v2384 = vpop.f32.mrf.mxu0
    %v2385 = vadd.f32 0.0, %v2384
    %v2386 = vpop.f32.mrf.mxu0
    %2387 = vdwg.mxu0
    %v2388 = vadd.f32 %v2248, %v2365
    %v2389 = vadd.f32 %v2253, %v2370
    %v2390 = vadd.f32 %v2258, %v2375
    %v2391 = vadd.f32 %v2263, %v2380
    %v2392 = vadd.f32 %v2268, %v2385
    %s2393 = scalar_lea.vmem %s8, 1
    %v2394 = vld [vmem:[%s2393] sm:$0x1]
    %v2396 = vlaneseq
    %v2397 = vshrl.u32 %v2396, 7
    %v2398 = vsub.s32 0, %v2397
    %v2399 = vrot.slane %v2394, %v2398
    %v2401 = vmul.f32 %v2388, %v2399
    %v2402 = vmul.f32 %v2389, %v2399
    %v2403 = vmul.f32 %v2390, %v2399
    %v2404 = vmul.f32 %v2391, %v2399
    %v2405 = vmul.f32 %v2392, %v2399
    %s2406 = scalar_lea.vmem %s9, 1
    %v2407 = vld [vmem:[%s2406] sm:$0x1]
    %v2409 = vlaneseq
    %v2410 = vshrl.u32 %v2409, 7
    %v2411 = vsub.s32 0, %v2410
    %v2412 = vrot.slane %v2407, %v2411
    %v2414 = vadd.f32 %v2401, %v2412
    %v2415 = vadd.f32 %v2402, %v2412
    %v2416 = vadd.f32 %v2403, %v2412
    %v2417 = vadd.f32 %v2404, %v2412
    %v2418 = vadd.f32 %v2405, %v2412
    %v2419 = vstv %s2036
    %v2420 = vmul.f32 %v2419, %v2414
    %v2421 = vmul.f32 %v2419, %v2415
    %v2422 = vmul.f32 %v2419, %v2416
    %v2423 = vmul.f32 %v2419, %v2417
    %v2424 = vmul.f32 %v2419, %v2418
    %v2425 = vxor.u32 %v2420, 2147483648
    %v2426 = vxor.u32 %v2421, 2147483648
    %v2427 = vxor.u32 %v2422, 2147483648
    %v2428 = vxor.u32 %v2423, 2147483648
    %v2429 = vxor.u32 %v2424, 2147483648
    %v2430 = vmul.f32 %v2425, 1.442695
    %v2431 = vpow.pop %v2430
    %v2432 = vmul.f32 %v2426, 1.442695
    %v2433 = vpow.pop %v2432
    %v2434 = vmul.f32 %v2427, 1.442695
    %v2435 = vpow.pop %v2434
    %v2436 = vmul.f32 %v2428, 1.442695
    %v2437 = vpow.pop %v2436
    %v2438 = vmul.f32 %v2429, 1.442695
    %v2439 = vpow.pop %v2438
    %v2440 = vadd.f32 %v2431, 1.0
    %v2441 = vadd.f32 %v2433, 1.0
    %v2442 = vadd.f32 %v2435, 1.0
    %v2443 = vadd.f32 %v2437, 1.0
    %v2444 = vadd.f32 %v2439, 1.0
    %v2445 = vrcp.pop %v2440
    %v2446 = vmul.f32 1.0, %v2445
    %v2447 = vrcp.pop %v2441
    %v2448 = vmul.f32 1.0, %v2447
    %v2449 = vrcp.pop %v2442
    %v2450 = vmul.f32 1.0, %v2449
    %v2451 = vrcp.pop %v2443
    %v2452 = vmul.f32 1.0, %v2451
    %v2453 = vrcp.pop %v2444
    %v2454 = vmul.f32 1.0, %v2453
    %v2455 = vmul.f32 %v2414, %v2446
    %v2456 = vmul.f32 %v2415, %v2448
    %v2457 = vmul.f32 %v2416, %v2450
    %v2458 = vmul.f32 %v2417, %v2452
    %v2459 = vmul.f32 %v2418, %v2454
    %2465 = vrot.lane.b32.xlu0 %v2455, 64
    %v2466 = vpop.permute.xlu0 %2465
    %2467 = vrot.lane.b32.xlu0 %v2456, 64
    %v2468 = vpop.permute.xlu0 %2467
    %2469 = vrot.lane.b32.xlu0 %v2457, 64
    %v2470 = vpop.permute.xlu0 %2469
    %2471 = vrot.lane.b32.xlu0 %v2458, 64
    %v2472 = vpop.permute.xlu0 %2471
    %2473 = vrot.lane.b32.xlu0 %v2459, 64
    %v2474 = vpop.permute.xlu0 %2473
    %v2480 = vmax.f32 %v2455, %v2466
    %v2481 = vmax.f32 %v2456, %v2468
    %v2482 = vmax.f32 %v2457, %v2470
    %v2483 = vmax.f32 %v2458, %v2472
    %v2484 = vmax.f32 %v2459, %v2474
    %v2485 = vld [vmem:[%s4] sm:$0xff]
    %v2486 = vld [vmem:[%s4 + $0x8] sm:$0xff]
    %v2487 = vld [vmem:[%s4 + $0x10] sm:$0xff]
    %v2488 = vld [vmem:[%s4 + $0x18] sm:$0xff]
    %v2489 = vld [vmem:[%s4 + $0x20] sm:$0xff]
    %v2490 = vld [vmem:[%s4 + $0x28] sm:$0xf]
    %v2492 = vsel %vm694, %v2485, 0
    %v2495 = vsel %vm694, %v2486, 0
    %v2498 = vsel %vm694, %v2487, 0
    %v2501 = vsel %vm694, %v2488, 0
    %v2504 = vsel %vm694, %v2489, 0
    %v2507 = vsel %vm694, %v2490, 0
    %v2510 = vsel %vm274, %v2484, 0
    %2512 = vmatprep.subr.mxu0 0.0
    %2513 = vmatpush1.msra.mxu0 0.0
    %2514 = vmatprep.subr.mxu0 0.0
    %2515 = vmatpush1.msra.mxu0 0.0
    %2516 = vmatprep.subr.mxu0 0.0
    %2517 = vmatpush1.msra.mxu0 0.0
    %2518 = vmatprep.subr.mxu0 0.0
    %2519 = vmatpush1.msra.mxu0 0.0
    %2520 = vmatprep.subr.mxu0 0.0
    %2521 = vmatpush1.msra.mxu0 0.0
    %2522 = vmatprep.subr.mxu0 0.0
    %2523 = vmatpush1.msra.mxu0 0.0
    %2524 = vmatprep.subr.mxu0 0.0
    %2525 = vmatpush1.msra.mxu0 0.0
    %2526 = vmatprep.subr.mxu0 0.0
    %2527 = vmatpush1.msra.mxu0 0.0
    %2528 = vmatprep.subr.mxu0 0.0
    %2529 = vmatpush1.msra.mxu0 0.0
    %2530 = vmatprep.subr.mxu0 0.0
    %2531 = vmatpush1.msra.mxu0 0.0
    %2532 = vmatprep.subr.mxu0 0.0
    %2533 = vmatpush1.msra.mxu0 0.0
    %2534 = vmatprep.subr.mxu0 0.0
    %2535 = vmatpush1.msra.mxu0 %v2510
    %2536 = vmatprep.subr.mxu0 0.0
    %2537 = vmatpush1.msra.mxu0 %v2483
    %2538 = vmatprep.subr.mxu0 0.0
    %2539 = vmatpush1.msra.mxu0 %v2482
    %2540 = vmatprep.subr.mxu0 0.0
    %2541 = vmatpush1.msra.mxu0 %v2481
    %2542 = vmatprep.subr.mxu0 0.0
    %2543 = vmatpush1.msra.mxu0 %v2480
    %2544 = vmatprep.subr.mxu0 0.0
    %2545 = vmatpush2.msra.mxu0 0.0
    %2546 = vmatprep.subr.mxu0 0.0
    %2547 = vmatpush2.msra.mxu0 0.0
    %2548 = vmatprep.subr.mxu0 0.0
    %2549 = vmatpush2.msra.mxu0 0.0
    %2550 = vmatprep.subr.mxu0 0.0
    %2551 = vmatpush2.msra.mxu0 0.0
    %2552 = vmatprep.subr.mxu0 0.0
    %2553 = vmatpush2.msra.mxu0 0.0
    %2554 = vmatprep.subr.mxu0 0.0
    %2555 = vmatpush2.msra.mxu0 0.0
    %2556 = vmatprep.subr.mxu0 0.0
    %2557 = vmatpush2.msra.mxu0 0.0
    %2558 = vmatprep.subr.mxu0 0.0
    %2559 = vmatpush2.msra.mxu0 0.0
    %2560 = vmatprep.subr.mxu0 0.0
    %2561 = vmatpush2.msra.mxu0 0.0
    %2562 = vmatprep.subr.mxu0 0.0
    %2563 = vmatpush2.msra.mxu0 0.0
    %2564 = vmatprep.subr.mxu0 0.0
    %2565 = vmatpush2.msra.mxu0 0.0
    %2566 = vmatprep.subr.mxu0 0.0
    %2567 = vmatpush2.msra.mxu0 0.0
    %2568 = vmatprep.subr.mxu0 0.0
    %2569 = vmatpush2.msra.mxu0 0.0
    %2570 = vmatprep.subr.mxu0 0.0
    %2571 = vmatpush2.msra.mxu0 0.0
    %2572 = vmatprep.subr.mxu0 0.0
    %2573 = vmatpush2.msra.mxu0 0.0
    %2574 = vmatprep.subr.mxu0 0.0
    %2575 = vmatpush2.msra.mxu0 0.0
    %2576 = vmatprep.mubr.f32.mxu0 0.0
    %2577 = vmatmul.mubr.f32.gmra.mxu0 %v2492
    %v2578 = vpop.f32.mrf.mxu0
    %v2579 = vadd.f32 0.0, %v2578
    %v2580 = vpop.f32.mrf.mxu0
    %2581 = vmatprep.mubr.f32.mxu0 0.0
    %2582 = vmatmul.mubr.f32.gmra.mxu0 %v2495
    %v2583 = vpop.f32.mrf.mxu0
    %v2584 = vadd.f32 0.0, %v2583
    %v2585 = vpop.f32.mrf.mxu0
    %2586 = vmatprep.mubr.f32.mxu0 0.0
    %2587 = vmatmul.mubr.f32.gmra.mxu0 %v2498
    %v2588 = vpop.f32.mrf.mxu0
    %v2589 = vadd.f32 0.0, %v2588
    %v2590 = vpop.f32.mrf.mxu0
    %2591 = vmatprep.mubr.f32.mxu0 0.0
    %2592 = vmatmul.mubr.f32.gmra.mxu0 %v2501
    %v2593 = vpop.f32.mrf.mxu0
    %v2594 = vadd.f32 0.0, %v2593
    %v2595 = vpop.f32.mrf.mxu0
    %2596 = vmatprep.mubr.f32.mxu0 0.0
    %2597 = vmatmul.mubr.f32.gmra.mxu0 %v2504
    %v2598 = vpop.f32.mrf.mxu0
    %v2599 = vadd.f32 0.0, %v2598
    %v2600 = vpop.f32.mrf.mxu0
    %2601 = vmatprep.mubr.f32.mxu0 0.0
    %2602 = vmatmul.mubr.f32.gmra.mxu0 %v2507
    %v2603 = vpop.f32.mrf.mxu0
    %v2604 = vadd.f32 0.0, %v2603
    %v2605 = vpop.f32.mrf.mxu0
    %2606 = vdwg.mxu0
    %v2607 = vmax.f32 %v2579, %v2594
    %v2608 = vmax.f32 %v2584, %v2599
    %v2609 = vmax.f32 %v2589, %v2604
    %2610 = vst.msk [vmem:[#allocation3] sm:$0xff] %vm814, %v2607
    %2611 = vst.msk [vmem:[#allocation3 + $0x8] sm:$0xff] %vm814, %v2608
    %2612 = vst.msk [vmem:[#allocation3 + $0x10] sm:$0xf] %vm817, %v2609
    %s2613 = sld [smem:[#allocation8 + $0x4]]
    %v2614 = vld [vmem:[#allocation3] sm:$0xff]
    %v2615 = vld [vmem:[#allocation3 + $0x8] sm:$0xff]
    %v2616 = vld [vmem:[#allocation3 + $0x10] sm:$0x3]
    %s2617 = scalar_lea.vmem %s10, 240
    %v2618 = vld [vmem:[%s2617] sm:$0xff]
    %v2619 = vld [vmem:[%s2617 + $0x8] sm:$0xff]
    %v2620 = vld [vmem:[%s2617 + $0x10] sm:$0xff]
    %v2621 = vld [vmem:[%s2617 + $0x18] sm:$0xff]
    %v2622 = vld [vmem:[%s2617 + $0x20] sm:$0xff]
    %v2623 = vld [vmem:[%s2617 + $0x28] sm:$0xff]
    %v2624 = vld [vmem:[%s2617 + $0x30] sm:$0xff]
    %v2625 = vld [vmem:[%s2617 + $0x38] sm:$0xff]
    %v2626 = vld [vmem:[%s2617 + $0x40] sm:$0xff]
    %v2627 = vld [vmem:[%s2617 + $0x48] sm:$0xff]
    %v2628 = vld [vmem:[#allocation3 + $0x1] sm:$0xff]
    %v2629 = vld [vmem:[#allocation3 + $0x9] sm:$0xff]
    %v2630 = vld [vmem:[#allocation3 + $0x11] sm:$0x3]
    %s2631 = scalar_lea.vmem %s10, 320
    %v2632 = vld [vmem:[%s2631] sm:$0xff]
    %v2633 = vld [vmem:[%s2631 + $0x8] sm:$0xff]
    %v2634 = vld [vmem:[%s2631 + $0x10] sm:$0xff]
    %v2635 = vld [vmem:[%s2631 + $0x18] sm:$0xff]
    %v2636 = vld [vmem:[%s2631 + $0x20] sm:$0xff]
    %v2637 = vld [vmem:[%s2631 + $0x28] sm:$0xff]
    %v2638 = vld [vmem:[%s2631 + $0x30] sm:$0xff]
    %v2639 = vld [vmem:[%s2631 + $0x38] sm:$0xff]
    %v2640 = vld [vmem:[%s2631 + $0x40] sm:$0xff]
    %v2641 = vld [vmem:[%s2631 + $0x48] sm:$0xff]
    %v2643 = vsel %vm98, %v2628, 0
    %v2646 = vsel %vm98, %v2629, 0
    %v2649 = vsel %vm98, %v2630, 0
    %2651 = vmatprep.subr.mxu0 0.0
    %2652 = vmatpush1.msra.mxu0 0.0
    %2653 = vmatprep.subr.mxu0 0.0
    %2654 = vmatpush1.msra.mxu0 0.0
    %2655 = vmatprep.subr.mxu0 0.0
    %2656 = vmatpush1.msra.mxu0 0.0
    %2657 = vmatprep.subr.mxu0 0.0
    %2658 = vmatpush1.msra.mxu0 0.0
    %2659 = vmatprep.subr.mxu0 0.0
    %2660 = vmatpush1.msra.mxu0 0.0
    %2661 = vmatprep.subr.mxu0 0.0
    %2662 = vmatpush1.msra.mxu0 0.0
    %2663 = vmatprep.subr.mxu0 0.0
    %2664 = vmatpush1.msra.mxu0 %v2641
    %2665 = vmatprep.subr.mxu0 0.0
    %2666 = vmatpush1.msra.mxu0 %v2640
    %2667 = vmatprep.subr.mxu0 0.0
    %2668 = vmatpush1.msra.mxu0 %v2639
    %2669 = vmatprep.subr.mxu0 0.0
    %2670 = vmatpush1.msra.mxu0 %v2638
    %2671 = vmatprep.subr.mxu0 0.0
    %2672 = vmatpush1.msra.mxu0 %v2637
    %2673 = vmatprep.subr.mxu0 0.0
    %2674 = vmatpush1.msra.mxu0 %v2636
    %2675 = vmatprep.subr.mxu0 0.0
    %2676 = vmatpush1.msra.mxu0 %v2635
    %2677 = vmatprep.subr.mxu0 0.0
    %2678 = vmatpush1.msra.mxu0 %v2634
    %2679 = vmatprep.subr.mxu0 0.0
    %2680 = vmatpush1.msra.mxu0 %v2633
    %2681 = vmatprep.subr.mxu0 0.0
    %2682 = vmatpush1.msra.mxu0 %v2632
    %2683 = vmatprep.subr.mxu0 0.0
    %2684 = vmatpush2.msra.mxu0 0.0
    %2685 = vmatprep.subr.mxu0 0.0
    %2686 = vmatpush2.msra.mxu0 0.0
    %2687 = vmatprep.subr.mxu0 0.0
    %2688 = vmatpush2.msra.mxu0 0.0
    %2689 = vmatprep.subr.mxu0 0.0
    %2690 = vmatpush2.msra.mxu0 0.0
    %2691 = vmatprep.subr.mxu0 0.0
    %2692 = vmatpush2.msra.mxu0 0.0
    %2693 = vmatprep.subr.mxu0 0.0
    %2694 = vmatpush2.msra.mxu0 0.0
    %2695 = vmatprep.subr.mxu0 0.0
    %2696 = vmatpush2.msra.mxu0 0.0
    %2697 = vmatprep.subr.mxu0 0.0
    %2698 = vmatpush2.msra.mxu0 0.0
    %2699 = vmatprep.subr.mxu0 0.0
    %2700 = vmatpush2.msra.mxu0 0.0
    %2701 = vmatprep.subr.mxu0 0.0
    %2702 = vmatpush2.msra.mxu0 0.0
    %2703 = vmatprep.subr.mxu0 0.0
    %2704 = vmatpush2.msra.mxu0 0.0
    %2705 = vmatprep.subr.mxu0 0.0
    %2706 = vmatpush2.msra.mxu0 0.0
    %2707 = vmatprep.subr.mxu0 0.0
    %2708 = vmatpush2.msra.mxu0 0.0
    %2709 = vmatprep.subr.mxu0 0.0
    %2710 = vmatpush2.msra.mxu0 0.0
    %2711 = vmatprep.subr.mxu0 0.0
    %2712 = vmatpush2.msra.mxu0 0.0
    %2713 = vmatprep.subr.mxu0 0.0
    %2714 = vmatpush2.msra.mxu0 0.0
    %2715 = vmatprep.mubr.f32.mxu0 0.0
    %2716 = vmatmul.mubr.f32.gmra.mxu0 %v2643
    %v2717 = vpop.f32.mrf.mxu0
    %v2718 = vadd.f32 0.0, %v2717
    %v2719 = vpop.f32.mrf.mxu0
    %2720 = vmatprep.mubr.f32.mxu0 0.0
    %2721 = vmatmul.mubr.f32.gmra.mxu0 %v2646
    %v2722 = vpop.f32.mrf.mxu0
    %v2723 = vadd.f32 0.0, %v2722
    %v2724 = vpop.f32.mrf.mxu0
    %2725 = vmatprep.mubr.f32.mxu0 0.0
    %2726 = vmatmul.mubr.f32.gmra.mxu0 %v2649
    %v2727 = vpop.f32.mrf.mxu0
    %v2728 = vadd.f32 0.0, %v2727
    %v2729 = vpop.f32.mrf.mxu0
    %2730 = vdwg.mxu0
    %v2732 = vsel %vm98, %v2614, 0
    %v2735 = vsel %vm98, %v2615, 0
    %v2738 = vsel %vm98, %v2616, 0
    %2740 = vmatprep.subr.mxu0 0.0
    %2741 = vmatpush1.msra.mxu0 0.0
    %2742 = vmatprep.subr.mxu0 0.0
    %2743 = vmatpush1.msra.mxu0 0.0
    %2744 = vmatprep.subr.mxu0 0.0
    %2745 = vmatpush1.msra.mxu0 0.0
    %2746 = vmatprep.subr.mxu0 0.0
    %2747 = vmatpush1.msra.mxu0 0.0
    %2748 = vmatprep.subr.mxu0 0.0
    %2749 = vmatpush1.msra.mxu0 0.0
    %2750 = vmatprep.subr.mxu0 0.0
    %2751 = vmatpush1.msra.mxu0 0.0
    %2752 = vmatprep.subr.mxu0 0.0
    %2753 = vmatpush1.msra.mxu0 %v2627
    %2754 = vmatprep.subr.mxu0 0.0
    %2755 = vmatpush1.msra.mxu0 %v2626
    %2756 = vmatprep.subr.mxu0 0.0
    %2757 = vmatpush1.msra.mxu0 %v2625
    %2758 = vmatprep.subr.mxu0 0.0
    %2759 = vmatpush1.msra.mxu0 %v2624
    %2760 = vmatprep.subr.mxu0 0.0
    %2761 = vmatpush1.msra.mxu0 %v2623
    %2762 = vmatprep.subr.mxu0 0.0
    %2763 = vmatpush1.msra.mxu0 %v2622
    %2764 = vmatprep.subr.mxu0 0.0
    %2765 = vmatpush1.msra.mxu0 %v2621
    %2766 = vmatprep.subr.mxu0 0.0
    %2767 = vmatpush1.msra.mxu0 %v2620
    %2768 = vmatprep.subr.mxu0 0.0
    %2769 = vmatpush1.msra.mxu0 %v2619
    %2770 = vmatprep.subr.mxu0 0.0
    %2771 = vmatpush1.msra.mxu0 %v2618
    %2772 = vmatprep.subr.mxu0 0.0
    %2773 = vmatpush2.msra.mxu0 0.0
    %2774 = vmatprep.subr.mxu0 0.0
    %2775 = vmatpush2.msra.mxu0 0.0
    %2776 = vmatprep.subr.mxu0 0.0
    %2777 = vmatpush2.msra.mxu0 0.0
    %2778 = vmatprep.subr.mxu0 0.0
    %2779 = vmatpush2.msra.mxu0 0.0
    %2780 = vmatprep.subr.mxu0 0.0
    %2781 = vmatpush2.msra.mxu0 0.0
    %2782 = vmatprep.subr.mxu0 0.0
    %2783 = vmatpush2.msra.mxu0 0.0
    %2784 = vmatprep.subr.mxu0 0.0
    %2785 = vmatpush2.msra.mxu0 0.0
    %2786 = vmatprep.subr.mxu0 0.0
    %2787 = vmatpush2.msra.mxu0 0.0
    %2788 = vmatprep.subr.mxu0 0.0
    %2789 = vmatpush2.msra.mxu0 0.0
    %2790 = vmatprep.subr.mxu0 0.0
    %2791 = vmatpush2.msra.mxu0 0.0
    %2792 = vmatprep.subr.mxu0 0.0
    %2793 = vmatpush2.msra.mxu0 0.0
    %2794 = vmatprep.subr.mxu0 0.0
    %2795 = vmatpush2.msra.mxu0 0.0
    %2796 = vmatprep.subr.mxu0 0.0
    %2797 = vmatpush2.msra.mxu0 0.0
    %2798 = vmatprep.subr.mxu0 0.0
    %2799 = vmatpush2.msra.mxu0 0.0
    %2800 = vmatprep.subr.mxu0 0.0
    %2801 = vmatpush2.msra.mxu0 0.0
    %2802 = vmatprep.subr.mxu0 0.0
    %2803 = vmatpush2.msra.mxu0 0.0
    %2804 = vmatprep.mubr.f32.mxu0 0.0
    %2805 = vmatmul.mubr.f32.gmra.mxu0 %v2732
    %v2806 = vpop.f32.mrf.mxu0
    %v2807 = vadd.f32 %v2718, %v2806
    %v2808 = vpop.f32.mrf.mxu0
    %2809 = vmatprep.mubr.f32.mxu0 0.0
    %2810 = vmatmul.mubr.f32.gmra.mxu0 %v2735
    %v2811 = vpop.f32.mrf.mxu0
    %v2812 = vadd.f32 %v2723, %v2811
    %v2813 = vpop.f32.mrf.mxu0
    %2814 = vmatprep.mubr.f32.mxu0 0.0
    %2815 = vmatmul.mubr.f32.gmra.mxu0 %v2738
    %v2816 = vpop.f32.mrf.mxu0
    %v2817 = vadd.f32 %v2728, %v2816
    %v2818 = vpop.f32.mrf.mxu0
    %2819 = vdwg.mxu0
    %v2820 = vld [vmem:[#allocation3 + $0x2] sm:$0xff]
    %v2821 = vld [vmem:[#allocation3 + $0xa] sm:$0xff]
    %v2822 = vld [vmem:[#allocation3 + $0x12] sm:$0x3]
    %s2823 = scalar_lea.vmem %s10, 400
    %v2824 = vld [vmem:[%s2823] sm:$0xff]
    %v2825 = vld [vmem:[%s2823 + $0x8] sm:$0xff]
    %v2826 = vld [vmem:[%s2823 + $0x10] sm:$0xff]
    %v2827 = vld [vmem:[%s2823 + $0x18] sm:$0xff]
    %v2828 = vld [vmem:[%s2823 + $0x20] sm:$0xff]
    %v2829 = vld [vmem:[%s2823 + $0x28] sm:$0xff]
    %v2830 = vld [vmem:[%s2823 + $0x30] sm:$0xff]
    %v2831 = vld [vmem:[%s2823 + $0x38] sm:$0xff]
    %v2832 = vld [vmem:[%s2823 + $0x40] sm:$0xff]
    %v2833 = vld [vmem:[%s2823 + $0x48] sm:$0xff]
    %v2835 = vsel %vm98, %v2820, 0
    %v2838 = vsel %vm98, %v2821, 0
    %v2841 = vsel %vm98, %v2822, 0
    %2843 = vmatprep.subr.mxu0 0.0
    %2844 = vmatpush1.msra.mxu0 0.0
    %2845 = vmatprep.subr.mxu0 0.0
    %2846 = vmatpush1.msra.mxu0 0.0
    %2847 = vmatprep.subr.mxu0 0.0
    %2848 = vmatpush1.msra.mxu0 0.0
    %2849 = vmatprep.subr.mxu0 0.0
    %2850 = vmatpush1.msra.mxu0 0.0
    %2851 = vmatprep.subr.mxu0 0.0
    %2852 = vmatpush1.msra.mxu0 0.0
    %2853 = vmatprep.subr.mxu0 0.0
    %2854 = vmatpush1.msra.mxu0 0.0
    %2855 = vmatprep.subr.mxu0 0.0
    %2856 = vmatpush1.msra.mxu0 %v2833
    %2857 = vmatprep.subr.mxu0 0.0
    %2858 = vmatpush1.msra.mxu0 %v2832
    %2859 = vmatprep.subr.mxu0 0.0
    %2860 = vmatpush1.msra.mxu0 %v2831
    %2861 = vmatprep.subr.mxu0 0.0
    %2862 = vmatpush1.msra.mxu0 %v2830
    %2863 = vmatprep.subr.mxu0 0.0
    %2864 = vmatpush1.msra.mxu0 %v2829
    %2865 = vmatprep.subr.mxu0 0.0
    %2866 = vmatpush1.msra.mxu0 %v2828
    %2867 = vmatprep.subr.mxu0 0.0
    %2868 = vmatpush1.msra.mxu0 %v2827
    %2869 = vmatprep.subr.mxu0 0.0
    %2870 = vmatpush1.msra.mxu0 %v2826
    %2871 = vmatprep.subr.mxu0 0.0
    %2872 = vmatpush1.msra.mxu0 %v2825
    %2873 = vmatprep.subr.mxu0 0.0
    %2874 = vmatpush1.msra.mxu0 %v2824
    %2875 = vmatprep.subr.mxu0 0.0
    %2876 = vmatpush2.msra.mxu0 0.0
    %2877 = vmatprep.subr.mxu0 0.0
    %2878 = vmatpush2.msra.mxu0 0.0
    %2879 = vmatprep.subr.mxu0 0.0
    %2880 = vmatpush2.msra.mxu0 0.0
    %2881 = vmatprep.subr.mxu0 0.0
    %2882 = vmatpush2.msra.mxu0 0.0
    %2883 = vmatprep.subr.mxu0 0.0
    %2884 = vmatpush2.msra.mxu0 0.0
    %2885 = vmatprep.subr.mxu0 0.0
    %2886 = vmatpush2.msra.mxu0 0.0
    %2887 = vmatprep.subr.mxu0 0.0
    %2888 = vmatpush2.msra.mxu0 0.0
    %2889 = vmatprep.subr.mxu0 0.0
    %2890 = vmatpush2.msra.mxu0 0.0
    %2891 = vmatprep.subr.mxu0 0.0
    %2892 = vmatpush2.msra.mxu0 0.0
    %2893 = vmatprep.subr.mxu0 0.0
    %2894 = vmatpush2.msra.mxu0 0.0
    %2895 = vmatprep.subr.mxu0 0.0
    %2896 = vmatpush2.msra.mxu0 0.0
    %2897 = vmatprep.subr.mxu0 0.0
    %2898 = vmatpush2.msra.mxu0 0.0
    %2899 = vmatprep.subr.mxu0 0.0
    %2900 = vmatpush2.msra.mxu0 0.0
    %2901 = vmatprep.subr.mxu0 0.0
    %2902 = vmatpush2.msra.mxu0 0.0
    %2903 = vmatprep.subr.mxu0 0.0
    %2904 = vmatpush2.msra.mxu0 0.0
    %2905 = vmatprep.subr.mxu0 0.0
    %2906 = vmatpush2.msra.mxu0 0.0
    %2907 = vmatprep.mubr.f32.mxu0 0.0
    %2908 = vmatmul.mubr.f32.gmra.mxu0 %v2835
    %v2909 = vpop.f32.mrf.mxu0
    %v2910 = vadd.f32 0.0, %v2909
    %v2911 = vpop.f32.mrf.mxu0
    %2912 = vmatprep.mubr.f32.mxu0 0.0
    %2913 = vmatmul.mubr.f32.gmra.mxu0 %v2838
    %v2914 = vpop.f32.mrf.mxu0
    %v2915 = vadd.f32 0.0, %v2914
    %v2916 = vpop.f32.mrf.mxu0
    %2917 = vmatprep.mubr.f32.mxu0 0.0
    %2918 = vmatmul.mubr.f32.gmra.mxu0 %v2841
    %v2919 = vpop.f32.mrf.mxu0
    %v2920 = vadd.f32 0.0, %v2919
    %v2921 = vpop.f32.mrf.mxu0
    %2922 = vdwg.mxu0
    %v2923 = vadd.f32 %v2807, %v2910
    %v2924 = vadd.f32 %v2812, %v2915
    %v2925 = vadd.f32 %v2817, %v2920
    %s2926 = scalar_lea.vmem %s11, 1
    %v2927 = vld [vmem:[%s2926] sm:$0x1]
    %v2929 = vlaneseq
    %v2930 = vshrl.u32 %v2929, 7
    %v2931 = vsub.s32 0, %v2930
    %v2932 = vrot.slane %v2927, %v2931
    %v2934 = vmul.f32 %v2923, %v2932
    %v2935 = vmul.f32 %v2924, %v2932
    %v2936 = vmul.f32 %v2925, %v2932
    %s2937 = scalar_lea.vmem %s12, 1
    %v2938 = vld [vmem:[%s2937] sm:$0x1]
    %v2940 = vlaneseq
    %v2941 = vshrl.u32 %v2940, 7
    %v2942 = vsub.s32 0, %v2941
    %v2943 = vrot.slane %v2938, %v2942
    %v2945 = vadd.f32 %v2934, %v2943
    %v2946 = vadd.f32 %v2935, %v2943
    %v2947 = vadd.f32 %v2936, %v2943
    %v2948 = vstv %s2613
    %v2949 = vmul.f32 %v2948, %v2945
    %v2950 = vmul.f32 %v2948, %v2946
    %v2951 = vmul.f32 %v2948, %v2947
    %v2952 = vxor.u32 %v2949, 2147483648
    %v2953 = vxor.u32 %v2950, 2147483648
    %v2954 = vxor.u32 %v2951, 2147483648
    %v2955 = vmul.f32 %v2952, 1.442695
    %v2956 = vpow.pop %v2955
    %v2957 = vmul.f32 %v2953, 1.442695
    %v2958 = vpow.pop %v2957
    %v2959 = vmul.f32 %v2954, 1.442695
    %v2960 = vpow.pop %v2959
    %v2961 = vadd.f32 %v2956, 1.0
    %v2962 = vadd.f32 %v2958, 1.0
    %v2963 = vadd.f32 %v2960, 1.0
    %v2964 = vrcp.pop %v2961
    %v2965 = vmul.f32 1.0, %v2964
    %v2966 = vrcp.pop %v2962
    %v2967 = vmul.f32 1.0, %v2966
    %v2968 = vrcp.pop %v2963
    %v2969 = vmul.f32 1.0, %v2968
    %v2970 = vmul.f32 %v2945, %v2965
    %v2971 = vmul.f32 %v2946, %v2967
    %v2972 = vmul.f32 %v2947, %v2969
    %2976 = vrot.lane.b32.xlu0 %v2970, 64
    %v2977 = vpop.permute.xlu0 %2976
    %2978 = vrot.lane.b32.xlu0 %v2971, 64
    %v2979 = vpop.permute.xlu0 %2978
    %2980 = vrot.lane.b32.xlu0 %v2972, 64
    %v2981 = vpop.permute.xlu0 %2980
    %v2985 = vmax.f32 %v2970, %v2977
    %v2986 = vmax.f32 %v2971, %v2979
    %v2987 = vmax.f32 %v2972, %v2981
    %v2988 = vld [vmem:[%s5] sm:$0xff]
    %v2989 = vld [vmem:[%s5 + $0x8] sm:$0xff]
    %v2990 = vld [vmem:[%s5 + $0x10] sm:$0xff]
    %v2991 = vld [vmem:[%s5 + $0x18] sm:$0xf]
    %v2993 = vsel %vm91, %v2988, 0
    %v2996 = vsel %vm91, %v2989, 0
    %v2999 = vsel %vm91, %v2990, 0
    %v3002 = vsel %vm91, %v2991, 0
    %v3005 = vsel %vm274, %v2987, 0
    %3007 = vmatprep.subr.mxu0 0.0
    %3008 = vmatpush1.msra.mxu0 0.0
    %3009 = vmatprep.subr.mxu0 0.0
    %3010 = vmatpush1.msra.mxu0 0.0
    %3011 = vmatprep.subr.mxu0 0.0
    %3012 = vmatpush1.msra.mxu0 0.0
    %3013 = vmatprep.subr.mxu0 0.0
    %3014 = vmatpush1.msra.mxu0 0.0
    %3015 = vmatprep.subr.mxu0 0.0
    %3016 = vmatpush1.msra.mxu0 0.0
    %3017 = vmatprep.subr.mxu0 0.0
    %3018 = vmatpush1.msra.mxu0 0.0
    %3019 = vmatprep.subr.mxu0 0.0
    %3020 = vmatpush1.msra.mxu0 0.0
    %3021 = vmatprep.subr.mxu0 0.0
    %3022 = vmatpush1.msra.mxu0 0.0
    %3023 = vmatprep.subr.mxu0 0.0
    %3024 = vmatpush1.msra.mxu0 0.0
    %3025 = vmatprep.subr.mxu0 0.0
    %3026 = vmatpush1.msra.mxu0 0.0
    %3027 = vmatprep.subr.mxu0 0.0
    %3028 = vmatpush1.msra.mxu0 0.0
    %3029 = vmatprep.subr.mxu0 0.0
    %3030 = vmatpush1.msra.mxu0 0.0
    %3031 = vmatprep.subr.mxu0 0.0
    %3032 = vmatpush1.msra.mxu0 0.0
    %3033 = vmatprep.subr.mxu0 0.0
    %3034 = vmatpush1.msra.mxu0 %v3005
    %3035 = vmatprep.subr.mxu0 0.0
    %3036 = vmatpush1.msra.mxu0 %v2986
    %3037 = vmatprep.subr.mxu0 0.0
    %3038 = vmatpush1.msra.mxu0 %v2985
    %3039 = vmatprep.subr.mxu0 0.0
    %3040 = vmatpush2.msra.mxu0 0.0
    %3041 = vmatprep.subr.mxu0 0.0
    %3042 = vmatpush2.msra.mxu0 0.0
    %3043 = vmatprep.subr.mxu0 0.0
    %3044 = vmatpush2.msra.mxu0 0.0
    %3045 = vmatprep.subr.mxu0 0.0
    %3046 = vmatpush2.msra.mxu0 0.0
    %3047 = vmatprep.subr.mxu0 0.0
    %3048 = vmatpush2.msra.mxu0 0.0
    %3049 = vmatprep.subr.mxu0 0.0
    %3050 = vmatpush2.msra.mxu0 0.0
    %3051 = vmatprep.subr.mxu0 0.0
    %3052 = vmatpush2.msra.mxu0 0.0
    %3053 = vmatprep.subr.mxu0 0.0
    %3054 = vmatpush2.msra.mxu0 0.0
    %3055 = vmatprep.subr.mxu0 0.0
    %3056 = vmatpush2.msra.mxu0 0.0
    %3057 = vmatprep.subr.mxu0 0.0
    %3058 = vmatpush2.msra.mxu0 0.0
    %3059 = vmatprep.subr.mxu0 0.0
    %3060 = vmatpush2.msra.mxu0 0.0
    %3061 = vmatprep.subr.mxu0 0.0
    %3062 = vmatpush2.msra.mxu0 0.0
    %3063 = vmatprep.subr.mxu0 0.0
    %3064 = vmatpush2.msra.mxu0 0.0
    %3065 = vmatprep.subr.mxu0 0.0
    %3066 = vmatpush2.msra.mxu0 0.0
    %3067 = vmatprep.subr.mxu0 0.0
    %3068 = vmatpush2.msra.mxu0 0.0
    %3069 = vmatprep.subr.mxu0 0.0
    %3070 = vmatpush2.msra.mxu0 0.0
    %3071 = vmatprep.mubr.f32.mxu0 0.0
    %3072 = vmatmul.mubr.f32.gmra.mxu0 %v2993
    %v3073 = vpop.f32.mrf.mxu0
    %v3074 = vadd.f32 0.0, %v3073
    %v3075 = vpop.f32.mrf.mxu0
    %3076 = vmatprep.mubr.f32.mxu0 0.0
    %3077 = vmatmul.mubr.f32.gmra.mxu0 %v2996
    %v3078 = vpop.f32.mrf.mxu0
    %v3079 = vadd.f32 0.0, %v3078
    %v3080 = vpop.f32.mrf.mxu0
    %3081 = vmatprep.mubr.f32.mxu0 0.0
    %3082 = vmatmul.mubr.f32.gmra.mxu0 %v2999
    %v3083 = vpop.f32.mrf.mxu0
    %v3084 = vadd.f32 0.0, %v3083
    %v3085 = vpop.f32.mrf.mxu0
    %3086 = vmatprep.mubr.f32.mxu0 0.0
    %3087 = vmatmul.mubr.f32.gmra.mxu0 %v3002
    %v3088 = vpop.f32.mrf.mxu0
    %v3089 = vadd.f32 0.0, %v3088
    %v3090 = vpop.f32.mrf.mxu0
    %3091 = vdwg.mxu0
    %v3092 = vmax.f32 %v3074, %v3084
    %v3093 = vmax.f32 %v3079, %v3089
    %3094 = vst.msk [vmem:[#allocation4] sm:$0xff] %vm814, %v3092
    %3095 = vst.msk [vmem:[#allocation4 + $0x8] sm:$0xf] %vm817, %v3093
    %s3096 = sld [smem:[#allocation8 + $0x5]]
    %v3097 = vld [vmem:[#allocation4] sm:$0xff]
    %v3098 = vld [vmem:[#allocation4 + $0x8] sm:$0x3]
    %s3099 = scalar_lea.vmem %s13, 288
    %v3100 = vld [vmem:[%s3099] sm:$0xff]
    %v3101 = vld [vmem:[%s3099 + $0x8] sm:$0xff]
    %v3102 = vld [vmem:[%s3099 + $0x10] sm:$0xff]
    %v3103 = vld [vmem:[%s3099 + $0x18] sm:$0xff]
    %v3104 = vld [vmem:[%s3099 + $0x20] sm:$0xff]
    %v3105 = vld [vmem:[%s3099 + $0x28] sm:$0xff]
    %v3106 = vld [vmem:[%s3099 + $0x30] sm:$0xff]
    %v3107 = vld [vmem:[%s3099 + $0x38] sm:$0xff]
    %v3108 = vld [vmem:[%s3099 + $0x40] sm:$0xff]
    %v3109 = vld [vmem:[%s3099 + $0x48] sm:$0xff]
    %v3110 = vld [vmem:[%s3099 + $0x50] sm:$0xff]
    %v3111 = vld [vmem:[%s3099 + $0x58] sm:$0xff]
    %v3112 = vld [vmem:[#allocation4 + $0x1] sm:$0xff]
    %v3113 = vld [vmem:[#allocation4 + $0x9] sm:$0x3]
    %s3114 = scalar_lea.vmem %s13, 384
    %v3115 = vld [vmem:[%s3114] sm:$0xff]
    %v3116 = vld [vmem:[%s3114 + $0x8] sm:$0xff]
    %v3117 = vld [vmem:[%s3114 + $0x10] sm:$0xff]
    %v3118 = vld [vmem:[%s3114 + $0x18] sm:$0xff]
    %v3119 = vld [vmem:[%s3114 + $0x20] sm:$0xff]
    %v3120 = vld [vmem:[%s3114 + $0x28] sm:$0xff]
    %v3121 = vld [vmem:[%s3114 + $0x30] sm:$0xff]
    %v3122 = vld [vmem:[%s3114 + $0x38] sm:$0xff]
    %v3123 = vld [vmem:[%s3114 + $0x40] sm:$0xff]
    %v3124 = vld [vmem:[%s3114 + $0x48] sm:$0xff]
    %v3125 = vld [vmem:[%s3114 + $0x50] sm:$0xff]
    %v3126 = vld [vmem:[%s3114 + $0x58] sm:$0xff]
    %v3128 = vsel %vm103, %v3112, 0
    %v3131 = vsel %vm103, %v3113, 0
    %3133 = vmatprep.subr.mxu0 0.0
    %3134 = vmatpush1.msra.mxu0 0.0
    %3135 = vmatprep.subr.mxu0 0.0
    %3136 = vmatpush1.msra.mxu0 0.0
    %3137 = vmatprep.subr.mxu0 0.0
    %3138 = vmatpush1.msra.mxu0 0.0
    %3139 = vmatprep.subr.mxu0 0.0
    %3140 = vmatpush1.msra.mxu0 0.0
    %3141 = vmatprep.subr.mxu0 0.0
    %3142 = vmatpush1.msra.mxu0 %v3126
    %3143 = vmatprep.subr.mxu0 0.0
    %3144 = vmatpush1.msra.mxu0 %v3125
    %3145 = vmatprep.subr.mxu0 0.0
    %3146 = vmatpush1.msra.mxu0 %v3124
    %3147 = vmatprep.subr.mxu0 0.0
    %3148 = vmatpush1.msra.mxu0 %v3123
    %3149 = vmatprep.subr.mxu0 0.0
    %3150 = vmatpush1.msra.mxu0 %v3122
    %3151 = vmatprep.subr.mxu0 0.0
    %3152 = vmatpush1.msra.mxu0 %v3121
    %3153 = vmatprep.subr.mxu0 0.0
    %3154 = vmatpush1.msra.mxu0 %v3120
    %3155 = vmatprep.subr.mxu0 0.0
    %3156 = vmatpush1.msra.mxu0 %v3119
    %3157 = vmatprep.subr.mxu0 0.0
    %3158 = vmatpush1.msra.mxu0 %v3118
    %3159 = vmatprep.subr.mxu0 0.0
    %3160 = vmatpush1.msra.mxu0 %v3117
    %3161 = vmatprep.subr.mxu0 0.0
    %3162 = vmatpush1.msra.mxu0 %v3116
    %3163 = vmatprep.subr.mxu0 0.0
    %3164 = vmatpush1.msra.mxu0 %v3115
    %3165 = vmatprep.subr.mxu0 0.0
    %3166 = vmatpush2.msra.mxu0 0.0
    %3167 = vmatprep.subr.mxu0 0.0
    %3168 = vmatpush2.msra.mxu0 0.0
    %3169 = vmatprep.subr.mxu0 0.0
    %3170 = vmatpush2.msra.mxu0 0.0
    %3171 = vmatprep.subr.mxu0 0.0
    %3172 = vmatpush2.msra.mxu0 0.0
    %3173 = vmatprep.subr.mxu0 0.0
    %3174 = vmatpush2.msra.mxu0 0.0
    %3175 = vmatprep.subr.mxu0 0.0
    %3176 = vmatpush2.msra.mxu0 0.0
    %3177 = vmatprep.subr.mxu0 0.0
    %3178 = vmatpush2.msra.mxu0 0.0
    %3179 = vmatprep.subr.mxu0 0.0
    %3180 = vmatpush2.msra.mxu0 0.0
    %3181 = vmatprep.subr.mxu0 0.0
    %3182 = vmatpush2.msra.mxu0 0.0
    %3183 = vmatprep.subr.mxu0 0.0
    %3184 = vmatpush2.msra.mxu0 0.0
    %3185 = vmatprep.subr.mxu0 0.0
    %3186 = vmatpush2.msra.mxu0 0.0
    %3187 = vmatprep.subr.mxu0 0.0
    %3188 = vmatpush2.msra.mxu0 0.0
    %3189 = vmatprep.subr.mxu0 0.0
    %3190 = vmatpush2.msra.mxu0 0.0
    %3191 = vmatprep.subr.mxu0 0.0
    %3192 = vmatpush2.msra.mxu0 0.0
    %3193 = vmatprep.subr.mxu0 0.0
    %3194 = vmatpush2.msra.mxu0 0.0
    %3195 = vmatprep.subr.mxu0 0.0
    %3196 = vmatpush2.msra.mxu0 0.0
    %3197 = vmatprep.mubr.f32.mxu0 0.0
    %3198 = vmatmul.mubr.f32.gmra.mxu0 %v3128
    %v3199 = vpop.f32.mrf.mxu0
    %v3200 = vadd.f32 0.0, %v3199
    %v3201 = vpop.f32.mrf.mxu0
    %3202 = vmatprep.mubr.f32.mxu0 0.0
    %3203 = vmatmul.mubr.f32.gmra.mxu0 %v3131
    %v3204 = vpop.f32.mrf.mxu0
    %v3205 = vadd.f32 0.0, %v3204
    %v3206 = vpop.f32.mrf.mxu0
    %3207 = vdwg.mxu0
    %v3209 = vsel %vm103, %v3097, 0
    %v3212 = vsel %vm103, %v3098, 0
    %3214 = vmatprep.subr.mxu0 0.0
    %3215 = vmatpush1.msra.mxu0 0.0
    %3216 = vmatprep.subr.mxu0 0.0
    %3217 = vmatpush1.msra.mxu0 0.0
    %3218 = vmatprep.subr.mxu0 0.0
    %3219 = vmatpush1.msra.mxu0 0.0
    %3220 = vmatprep.subr.mxu0 0.0
    %3221 = vmatpush1.msra.mxu0 0.0
    %3222 = vmatprep.subr.mxu0 0.0
    %3223 = vmatpush1.msra.mxu0 %v3111
    %3224 = vmatprep.subr.mxu0 0.0
    %3225 = vmatpush1.msra.mxu0 %v3110
    %3226 = vmatprep.subr.mxu0 0.0
    %3227 = vmatpush1.msra.mxu0 %v3109
    %3228 = vmatprep.subr.mxu0 0.0
    %3229 = vmatpush1.msra.mxu0 %v3108
    %3230 = vmatprep.subr.mxu0 0.0
    %3231 = vmatpush1.msra.mxu0 %v3107
    %3232 = vmatprep.subr.mxu0 0.0
    %3233 = vmatpush1.msra.mxu0 %v3106
    %3234 = vmatprep.subr.mxu0 0.0
    %3235 = vmatpush1.msra.mxu0 %v3105
    %3236 = vmatprep.subr.mxu0 0.0
    %3237 = vmatpush1.msra.mxu0 %v3104
    %3238 = vmatprep.subr.mxu0 0.0
    %3239 = vmatpush1.msra.mxu0 %v3103
    %3240 = vmatprep.subr.mxu0 0.0
    %3241 = vmatpush1.msra.mxu0 %v3102
    %3242 = vmatprep.subr.mxu0 0.0
    %3243 = vmatpush1.msra.mxu0 %v3101
    %3244 = vmatprep.subr.mxu0 0.0
    %3245 = vmatpush1.msra.mxu0 %v3100
    %3246 = vmatprep.subr.mxu0 0.0
    %3247 = vmatpush2.msra.mxu0 0.0
    %3248 = vmatprep.subr.mxu0 0.0
    %3249 = vmatpush2.msra.mxu0 0.0
    %3250 = vmatprep.subr.mxu0 0.0
    %3251 = vmatpush2.msra.mxu0 0.0
    %3252 = vmatprep.subr.mxu0 0.0
    %3253 = vmatpush2.msra.mxu0 0.0
    %3254 = vmatprep.subr.mxu0 0.0
    %3255 = vmatpush2.msra.mxu0 0.0
    %3256 = vmatprep.subr.mxu0 0.0
    %3257 = vmatpush2.msra.mxu0 0.0
    %3258 = vmatprep.subr.mxu0 0.0
    %3259 = vmatpush2.msra.mxu0 0.0
    %3260 = vmatprep.subr.mxu0 0.0
    %3261 = vmatpush2.msra.mxu0 0.0
    %3262 = vmatprep.subr.mxu0 0.0
    %3263 = vmatpush2.msra.mxu0 0.0
    %3264 = vmatprep.subr.mxu0 0.0
    %3265 = vmatpush2.msra.mxu0 0.0
    %3266 = vmatprep.subr.mxu0 0.0
    %3267 = vmatpush2.msra.mxu0 0.0
    %3268 = vmatprep.subr.mxu0 0.0
    %3269 = vmatpush2.msra.mxu0 0.0
    %3270 = vmatprep.subr.mxu0 0.0
    %3271 = vmatpush2.msra.mxu0 0.0
    %3272 = vmatprep.subr.mxu0 0.0
    %3273 = vmatpush2.msra.mxu0 0.0
    %3274 = vmatprep.subr.mxu0 0.0
    %3275 = vmatpush2.msra.mxu0 0.0
    %3276 = vmatprep.subr.mxu0 0.0
    %3277 = vmatpush2.msra.mxu0 0.0
    %3278 = vmatprep.mubr.f32.mxu0 0.0
    %3279 = vmatmul.mubr.f32.gmra.mxu0 %v3209
    %v3280 = vpop.f32.mrf.mxu0
    %v3281 = vadd.f32 %v3200, %v3280
    %v3282 = vpop.f32.mrf.mxu0
    %3283 = vmatprep.mubr.f32.mxu0 0.0
    %3284 = vmatmul.mubr.f32.gmra.mxu0 %v3212
    %v3285 = vpop.f32.mrf.mxu0
    %v3286 = vadd.f32 %v3205, %v3285
    %v3287 = vpop.f32.mrf.mxu0
    %3288 = vdwg.mxu0
    %v3289 = vld [vmem:[#allocation4 + $0x2] sm:$0xff]
    %v3290 = vld [vmem:[#allocation4 + $0xa] sm:$0x3]
    %s3291 = scalar_lea.vmem %s13, 480
    %v3292 = vld [vmem:[%s3291] sm:$0xff]
    %v3293 = vld [vmem:[%s3291 + $0x8] sm:$0xff]
    %v3294 = vld [vmem:[%s3291 + $0x10] sm:$0xff]
    %v3295 = vld [vmem:[%s3291 + $0x18] sm:$0xff]
    %v3296 = vld [vmem:[%s3291 + $0x20] sm:$0xff]
    %v3297 = vld [vmem:[%s3291 + $0x28] sm:$0xff]
    %v3298 = vld [vmem:[%s3291 + $0x30] sm:$0xff]
    %v3299 = vld [vmem:[%s3291 + $0x38] sm:$0xff]
    %v3300 = vld [vmem:[%s3291 + $0x40] sm:$0xff]
    %v3301 = vld [vmem:[%s3291 + $0x48] sm:$0xff]
    %v3302 = vld [vmem:[%s3291 + $0x50] sm:$0xff]
    %v3303 = vld [vmem:[%s3291 + $0x58] sm:$0xff]
    %v3305 = vsel %vm103, %v3289, 0
    %v3308 = vsel %vm103, %v3290, 0
    %3310 = vmatprep.subr.mxu0 0.0
    %3311 = vmatpush1.msra.mxu0 0.0
    %3312 = vmatprep.subr.mxu0 0.0
    %3313 = vmatpush1.msra.mxu0 0.0
    %3314 = vmatprep.subr.mxu0 0.0
    %3315 = vmatpush1.msra.mxu0 0.0
    %3316 = vmatprep.subr.mxu0 0.0
    %3317 = vmatpush1.msra.mxu0 0.0
    %3318 = vmatprep.subr.mxu0 0.0
    %3319 = vmatpush1.msra.mxu0 %v3303
    %3320 = vmatprep.subr.mxu0 0.0
    %3321 = vmatpush1.msra.mxu0 %v3302
    %3322 = vmatprep.subr.mxu0 0.0
    %3323 = vmatpush1.msra.mxu0 %v3301
    %3324 = vmatprep.subr.mxu0 0.0
    %3325 = vmatpush1.msra.mxu0 %v3300
    %3326 = vmatprep.subr.mxu0 0.0
    %3327 = vmatpush1.msra.mxu0 %v3299
    %3328 = vmatprep.subr.mxu0 0.0
    %3329 = vmatpush1.msra.mxu0 %v3298
    %3330 = vmatprep.subr.mxu0 0.0
    %3331 = vmatpush1.msra.mxu0 %v3297
    %3332 = vmatprep.subr.mxu0 0.0
    %3333 = vmatpush1.msra.mxu0 %v3296
    %3334 = vmatprep.subr.mxu0 0.0
    %3335 = vmatpush1.msra.mxu0 %v3295
    %3336 = vmatprep.subr.mxu0 0.0
    %3337 = vmatpush1.msra.mxu0 %v3294
    %3338 = vmatprep.subr.mxu0 0.0
    %3339 = vmatpush1.msra.mxu0 %v3293
    %3340 = vmatprep.subr.mxu0 0.0
    %3341 = vmatpush1.msra.mxu0 %v3292
    %3342 = vmatprep.subr.mxu0 0.0
    %3343 = vmatpush2.msra.mxu0 0.0
    %3344 = vmatprep.subr.mxu0 0.0
    %3345 = vmatpush2.msra.mxu0 0.0
    %3346 = vmatprep.subr.mxu0 0.0
    %3347 = vmatpush2.msra.mxu0 0.0
    %3348 = vmatprep.subr.mxu0 0.0
    %3349 = vmatpush2.msra.mxu0 0.0
    %3350 = vmatprep.subr.mxu0 0.0
    %3351 = vmatpush2.msra.mxu0 0.0
    %3352 = vmatprep.subr.mxu0 0.0
    %3353 = vmatpush2.msra.mxu0 0.0
    %3354 = vmatprep.subr.mxu0 0.0
    %3355 = vmatpush2.msra.mxu0 0.0
    %3356 = vmatprep.subr.mxu0 0.0
    %3357 = vmatpush2.msra.mxu0 0.0
    %3358 = vmatprep.subr.mxu0 0.0
    %3359 = vmatpush2.msra.mxu0 0.0
    %3360 = vmatprep.subr.mxu0 0.0
    %3361 = vmatpush2.msra.mxu0 0.0
    %3362 = vmatprep.subr.mxu0 0.0
    %3363 = vmatpush2.msra.mxu0 0.0
    %3364 = vmatprep.subr.mxu0 0.0
    %3365 = vmatpush2.msra.mxu0 0.0
    %3366 = vmatprep.subr.mxu0 0.0
    %3367 = vmatpush2.msra.mxu0 0.0
    %3368 = vmatprep.subr.mxu0 0.0
    %3369 = vmatpush2.msra.mxu0 0.0
    %3370 = vmatprep.subr.mxu0 0.0
    %3371 = vmatpush2.msra.mxu0 0.0
    %3372 = vmatprep.subr.mxu0 0.0
    %3373 = vmatpush2.msra.mxu0 0.0
    %3374 = vmatprep.mubr.f32.mxu0 0.0
    %3375 = vmatmul.mubr.f32.gmra.mxu0 %v3305
    %v3376 = vpop.f32.mrf.mxu0
    %v3377 = vadd.f32 0.0, %v3376
    %v3378 = vpop.f32.mrf.mxu0
    %3379 = vmatprep.mubr.f32.mxu0 0.0
    %3380 = vmatmul.mubr.f32.gmra.mxu0 %v3308
    %v3381 = vpop.f32.mrf.mxu0
    %v3382 = vadd.f32 0.0, %v3381
    %v3383 = vpop.f32.mrf.mxu0
    %3384 = vdwg.mxu0
    %v3385 = vadd.f32 %v3281, %v3377
    %v3386 = vadd.f32 %v3286, %v3382
    %s3387 = scalar_lea.vmem %s14, 1
    %v3388 = vld [vmem:[%s3387] sm:$0x1]
    %v3390 = vlaneseq
    %v3391 = vshrl.u32 %v3390, 7
    %v3392 = vsub.s32 0, %v3391
    %v3393 = vrot.slane %v3388, %v3392
    %v3395 = vmul.f32 %v3385, %v3393
    %v3396 = vmul.f32 %v3386, %v3393
    %s3397 = scalar_lea.vmem %s15, 1
    %v3398 = vld [vmem:[%s3397] sm:$0x1]
    %v3400 = vlaneseq
    %v3401 = vshrl.u32 %v3400, 7
    %v3402 = vsub.s32 0, %v3401
    %v3403 = vrot.slane %v3398, %v3402
    %v3405 = vadd.f32 %v3395, %v3403
    %v3406 = vadd.f32 %v3396, %v3403
    %v3407 = vstv %s3096
    %v3408 = vmul.f32 %v3407, %v3405
    %v3409 = vmul.f32 %v3407, %v3406
    %v3410 = vxor.u32 %v3408, 2147483648
    %v3411 = vxor.u32 %v3409, 2147483648
    %v3412 = vmul.f32 %v3410, 1.442695
    %v3413 = vpow.pop %v3412
    %v3414 = vmul.f32 %v3411, 1.442695
    %v3415 = vpow.pop %v3414
    %v3416 = vadd.f32 %v3413, 1.0
    %v3417 = vadd.f32 %v3415, 1.0
    %v3418 = vrcp.pop %v3416
    %v3419 = vmul.f32 1.0, %v3418
    %v3420 = vrcp.pop %v3417
    %v3421 = vmul.f32 1.0, %v3420
    %v3422 = vmul.f32 %v3405, %v3419
    %v3423 = vmul.f32 %v3406, %v3421
    %3426 = vrot.lane.b32.xlu0 %v3422, 64
    %v3427 = vpop.permute.xlu0 %3426
    %3428 = vrot.lane.b32.xlu0 %v3423, 64
    %v3429 = vpop.permute.xlu0 %3428
    %v3432 = vmax.f32 %v3422, %v3427
    %v3433 = vmax.f32 %v3423, %v3429
    %v3434 = vld [vmem:[%s6] sm:$0xff]
    %v3435 = vld [vmem:[%s6 + $0x8] sm:$0xff]
    %v3436 = vld [vmem:[%s6 + $0x10] sm:$0xff]
    %v3437 = vld [vmem:[%s6 + $0x18] sm:$0xff]
    %v3439 = vsel %vm1638, %v3434, 0
    %v3442 = vsel %vm1638, %v3435, 0
    %v3445 = vsel %vm1638, %v3436, 0
    %v3448 = vsel %vm1638, %v3437, 0
    %v3451 = vsel %vm274, %v3433, 0
    %3453 = vmatprep.subr.mxu0 0.0
    %3454 = vmatpush1.msra.mxu0 0.0
    %3455 = vmatprep.subr.mxu0 0.0
    %3456 = vmatpush1.msra.mxu0 0.0
    %3457 = vmatprep.subr.mxu0 0.0
    %3458 = vmatpush1.msra.mxu0 0.0
    %3459 = vmatprep.subr.mxu0 0.0
    %3460 = vmatpush1.msra.mxu0 0.0
    %3461 = vmatprep.subr.mxu0 0.0
    %3462 = vmatpush1.msra.mxu0 0.0
    %3463 = vmatprep.subr.mxu0 0.0
    %3464 = vmatpush1.msra.mxu0 0.0
    %3465 = vmatprep.subr.mxu0 0.0
    %3466 = vmatpush1.msra.mxu0 0.0
    %3467 = vmatprep.subr.mxu0 0.0
    %3468 = vmatpush1.msra.mxu0 0.0
    %3469 = vmatprep.subr.mxu0 0.0
    %3470 = vmatpush1.msra.mxu0 0.0
    %3471 = vmatprep.subr.mxu0 0.0
    %3472 = vmatpush1.msra.mxu0 0.0
    %3473 = vmatprep.subr.mxu0 0.0
    %3474 = vmatpush1.msra.mxu0 0.0
    %3475 = vmatprep.subr.mxu0 0.0
    %3476 = vmatpush1.msra.mxu0 0.0
    %3477 = vmatprep.subr.mxu0 0.0
    %3478 = vmatpush1.msra.mxu0 0.0
    %3479 = vmatprep.subr.mxu0 0.0
    %3480 = vmatpush1.msra.mxu0 0.0
    %3481 = vmatprep.subr.mxu0 0.0
    %3482 = vmatpush1.msra.mxu0 %v3451
    %3483 = vmatprep.subr.mxu0 0.0
    %3484 = vmatpush1.msra.mxu0 %v3432
    %3485 = vmatprep.subr.mxu0 0.0
    %3486 = vmatpush2.msra.mxu0 0.0
    %3487 = vmatprep.subr.mxu0 0.0
    %3488 = vmatpush2.msra.mxu0 0.0
    %3489 = vmatprep.subr.mxu0 0.0
    %3490 = vmatpush2.msra.mxu0 0.0
    %3491 = vmatprep.subr.mxu0 0.0
    %3492 = vmatpush2.msra.mxu0 0.0
    %3493 = vmatprep.subr.mxu0 0.0
    %3494 = vmatpush2.msra.mxu0 0.0
    %3495 = vmatprep.subr.mxu0 0.0
    %3496 = vmatpush2.msra.mxu0 0.0
    %3497 = vmatprep.subr.mxu0 0.0
    %3498 = vmatpush2.msra.mxu0 0.0
    %3499 = vmatprep.subr.mxu0 0.0
    %3500 = vmatpush2.msra.mxu0 0.0
    %3501 = vmatprep.subr.mxu0 0.0
    %3502 = vmatpush2.msra.mxu0 0.0
    %3503 = vmatprep.subr.mxu0 0.0
    %3504 = vmatpush2.msra.mxu0 0.0
    %3505 = vmatprep.subr.mxu0 0.0
    %3506 = vmatpush2.msra.mxu0 0.0
    %3507 = vmatprep.subr.mxu0 0.0
    %3508 = vmatpush2.msra.mxu0 0.0
    %3509 = vmatprep.subr.mxu0 0.0
    %3510 = vmatpush2.msra.mxu0 0.0
    %3511 = vmatprep.subr.mxu0 0.0
    %3512 = vmatpush2.msra.mxu0 0.0
    %3513 = vmatprep.subr.mxu0 0.0
    %3514 = vmatpush2.msra.mxu0 0.0
    %3515 = vmatprep.subr.mxu0 0.0
    %3516 = vmatpush2.msra.mxu0 0.0
    %3517 = vmatprep.mubr.f32.mxu0 0.0
    %3518 = vmatmul.mubr.f32.gmra.mxu0 %v3439
    %v3519 = vpop.f32.mrf.mxu0
    %v3520 = vadd.f32 0.0, %v3519
    %v3521 = vpop.f32.mrf.mxu0
    %3522 = vmatprep.mubr.f32.mxu0 0.0
    %3523 = vmatmul.mubr.f32.gmra.mxu0 %v3442
    %v3524 = vpop.f32.mrf.mxu0
    %v3525 = vadd.f32 0.0, %v3524
    %v3526 = vpop.f32.mrf.mxu0
    %3527 = vmatprep.mubr.f32.mxu0 0.0
    %3528 = vmatmul.mubr.f32.gmra.mxu0 %v3445
    %v3529 = vpop.f32.mrf.mxu0
    %v3530 = vadd.f32 0.0, %v3529
    %v3531 = vpop.f32.mrf.mxu0
    %3532 = vmatprep.mubr.f32.mxu0 0.0
    %3533 = vmatmul.mubr.f32.gmra.mxu0 %v3448
    %v3534 = vpop.f32.mrf.mxu0
    %v3535 = vadd.f32 0.0, %v3534
    %v3536 = vpop.f32.mrf.mxu0
    %3537 = vdwg.mxu0
    %v3538 = vmax.f32 %v3520, %v3530
    %v3539 = vmax.f32 %v3525, %v3535
    %s3540 = scalar_lea.vmem %s16, 128
    %v3541 = vld [vmem:[%s3540] sm:$0xff]
    %v3542 = vld [vmem:[%s3540 + $0x8] sm:$0xff]
    %v3543 = vld [vmem:[%s3540 + $0x10] sm:$0xff]
    %v3544 = vld [vmem:[%s3540 + $0x18] sm:$0xff]
    %v3545 = vld [vmem:[%s3540 + $0x20] sm:$0xff]
    %v3546 = vld [vmem:[%s3540 + $0x28] sm:$0xff]
    %v3547 = vld [vmem:[%s3540 + $0x30] sm:$0xff]
    %v3548 = vld [vmem:[%s3540 + $0x38] sm:$0xff]
    %v3550 = vsel %vm814, %v3538, 0
    %3552 = vmatprep.subr.mxu0 0.0
    %3553 = vmatpush1.msra.mxu0 0.0
    %3554 = vmatprep.subr.mxu0 0.0
    %3555 = vmatpush1.msra.mxu0 0.0
    %3556 = vmatprep.subr.mxu0 0.0
    %3557 = vmatpush1.msra.mxu0 0.0
    %3558 = vmatprep.subr.mxu0 0.0
    %3559 = vmatpush1.msra.mxu0 0.0
    %3560 = vmatprep.subr.mxu0 0.0
    %3561 = vmatpush1.msra.mxu0 0.0
    %3562 = vmatprep.subr.mxu0 0.0
    %3563 = vmatpush1.msra.mxu0 0.0
    %3564 = vmatprep.subr.mxu0 0.0
    %3565 = vmatpush1.msra.mxu0 0.0
    %3566 = vmatprep.subr.mxu0 0.0
    %3567 = vmatpush1.msra.mxu0 0.0
    %3568 = vmatprep.subr.mxu0 0.0
    %3569 = vmatpush1.msra.mxu0 %v3548
    %3570 = vmatprep.subr.mxu0 0.0
    %3571 = vmatpush1.msra.mxu0 %v3547
    %3572 = vmatprep.subr.mxu0 0.0
    %3573 = vmatpush1.msra.mxu0 %v3546
    %3574 = vmatprep.subr.mxu0 0.0
    %3575 = vmatpush1.msra.mxu0 %v3545
    %3576 = vmatprep.subr.mxu0 0.0
    %3577 = vmatpush1.msra.mxu0 %v3544
    %3578 = vmatprep.subr.mxu0 0.0
    %3579 = vmatpush1.msra.mxu0 %v3543
    %3580 = vmatprep.subr.mxu0 0.0
    %3581 = vmatpush1.msra.mxu0 %v3542
    %3582 = vmatprep.subr.mxu0 0.0
    %3583 = vmatpush1.msra.mxu0 %v3541
    %3584 = vmatprep.subr.mxu0 0.0
    %3585 = vmatpush2.msra.mxu0 0.0
    %3586 = vmatprep.subr.mxu0 0.0
    %3587 = vmatpush2.msra.mxu0 0.0
    %3588 = vmatprep.subr.mxu0 0.0
    %3589 = vmatpush2.msra.mxu0 0.0
    %3590 = vmatprep.subr.mxu0 0.0
    %3591 = vmatpush2.msra.mxu0 0.0
    %3592 = vmatprep.subr.mxu0 0.0
    %3593 = vmatpush2.msra.mxu0 0.0
    %3594 = vmatprep.subr.mxu0 0.0
    %3595 = vmatpush2.msra.mxu0 0.0
    %3596 = vmatprep.subr.mxu0 0.0
    %3597 = vmatpush2.msra.mxu0 0.0
    %3598 = vmatprep.subr.mxu0 0.0
    %3599 = vmatpush2.msra.mxu0 0.0
    %3600 = vmatprep.subr.mxu0 0.0
    %3601 = vmatpush2.msra.mxu0 0.0
    %3602 = vmatprep.subr.mxu0 0.0
    %3603 = vmatpush2.msra.mxu0 0.0
    %3604 = vmatprep.subr.mxu0 0.0
    %3605 = vmatpush2.msra.mxu0 0.0
    %3606 = vmatprep.subr.mxu0 0.0
    %3607 = vmatpush2.msra.mxu0 0.0
    %3608 = vmatprep.subr.mxu0 0.0
    %3609 = vmatpush2.msra.mxu0 0.0
    %3610 = vmatprep.subr.mxu0 0.0
    %3611 = vmatpush2.msra.mxu0 0.0
    %3612 = vmatprep.subr.mxu0 0.0
    %3613 = vmatpush2.msra.mxu0 0.0
    %3614 = vmatprep.subr.mxu0 0.0
    %3615 = vmatpush2.msra.mxu0 0.0
    %3616 = vmatprep.mubr.f32.mxu0 0.0
    %3617 = vmatmul.mubr.f32.gmra.mxu0 %v3550
    %v3618 = vpop.f32.mrf.mxu0
    %v3619 = vadd.f32 0.0, %v3618
    %v3620 = vpop.f32.mrf.mxu0
    %3621 = vdwg.mxu0
    %v3622 = vadd.f32 %v1901, %v3619
    %s3623 = scalar_lea.vmem %s16, 192
    %v3624 = vld [vmem:[%s3623] sm:$0xff]
    %v3625 = vld [vmem:[%s3623 + $0x8] sm:$0xff]
    %v3626 = vld [vmem:[%s3623 + $0x10] sm:$0xff]
    %v3627 = vld [vmem:[%s3623 + $0x18] sm:$0xff]
    %v3628 = vld [vmem:[%s3623 + $0x20] sm:$0xff]
    %v3629 = vld [vmem:[%s3623 + $0x28] sm:$0xff]
    %v3630 = vld [vmem:[%s3623 + $0x30] sm:$0xff]
    %v3631 = vld [vmem:[%s3623 + $0x38] sm:$0xff]
    %v3633 = vsel %vm814, %v3539, 0
    %3635 = vmatprep.subr.mxu0 0.0
    %3636 = vmatpush1.msra.mxu0 0.0
    %3637 = vmatprep.subr.mxu0 0.0
    %3638 = vmatpush1.msra.mxu0 0.0
    %3639 = vmatprep.subr.mxu0 0.0
    %3640 = vmatpush1.msra.mxu0 0.0
    %3641 = vmatprep.subr.mxu0 0.0
    %3642 = vmatpush1.msra.mxu0 0.0
    %3643 = vmatprep.subr.mxu0 0.0
    %3644 = vmatpush1.msra.mxu0 0.0
    %3645 = vmatprep.subr.mxu0 0.0
    %3646 = vmatpush1.msra.mxu0 0.0
    %3647 = vmatprep.subr.mxu0 0.0
    %3648 = vmatpush1.msra.mxu0 0.0
    %3649 = vmatprep.subr.mxu0 0.0
    %3650 = vmatpush1.msra.mxu0 0.0
    %3651 = vmatprep.subr.mxu0 0.0
    %3652 = vmatpush1.msra.mxu0 %v3631
    %3653 = vmatprep.subr.mxu0 0.0
    %3654 = vmatpush1.msra.mxu0 %v3630
    %3655 = vmatprep.subr.mxu0 0.0
    %3656 = vmatpush1.msra.mxu0 %v3629
    %3657 = vmatprep.subr.mxu0 0.0
    %3658 = vmatpush1.msra.mxu0 %v3628
    %3659 = vmatprep.subr.mxu0 0.0
    %3660 = vmatpush1.msra.mxu0 %v3627
    %3661 = vmatprep.subr.mxu0 0.0
    %3662 = vmatpush1.msra.mxu0 %v3626
    %3663 = vmatprep.subr.mxu0 0.0
    %3664 = vmatpush1.msra.mxu0 %v3625
    %3665 = vmatprep.subr.mxu0 0.0
    %3666 = vmatpush1.msra.mxu0 %v3624
    %3667 = vmatprep.subr.mxu0 0.0
    %3668 = vmatpush2.msra.mxu0 0.0
    %3669 = vmatprep.subr.mxu0 0.0
    %3670 = vmatpush2.msra.mxu0 0.0
    %3671 = vmatprep.subr.mxu0 0.0
    %3672 = vmatpush2.msra.mxu0 0.0
    %3673 = vmatprep.subr.mxu0 0.0
    %3674 = vmatpush2.msra.mxu0 0.0
    %3675 = vmatprep.subr.mxu0 0.0
    %3676 = vmatpush2.msra.mxu0 0.0
    %3677 = vmatprep.subr.mxu0 0.0
    %3678 = vmatpush2.msra.mxu0 0.0
    %3679 = vmatprep.subr.mxu0 0.0
    %3680 = vmatpush2.msra.mxu0 0.0
    %3681 = vmatprep.subr.mxu0 0.0
    %3682 = vmatpush2.msra.mxu0 0.0
    %3683 = vmatprep.subr.mxu0 0.0
    %3684 = vmatpush2.msra.mxu0 0.0
    %3685 = vmatprep.subr.mxu0 0.0
    %3686 = vmatpush2.msra.mxu0 0.0
    %3687 = vmatprep.subr.mxu0 0.0
    %3688 = vmatpush2.msra.mxu0 0.0
    %3689 = vmatprep.subr.mxu0 0.0
    %3690 = vmatpush2.msra.mxu0 0.0
    %3691 = vmatprep.subr.mxu0 0.0
    %3692 = vmatpush2.msra.mxu0 0.0
    %3693 = vmatprep.subr.mxu0 0.0
    %3694 = vmatpush2.msra.mxu0 0.0
    %3695 = vmatprep.subr.mxu0 0.0
    %3696 = vmatpush2.msra.mxu0 0.0
    %3697 = vmatprep.subr.mxu0 0.0
    %3698 = vmatpush2.msra.mxu0 0.0
    %3699 = vmatprep.mubr.f32.mxu0 0.0
    %3700 = vmatmul.mubr.f32.gmra.mxu0 %v3633
    %v3701 = vpop.f32.mrf.mxu0
    %v3702 = vadd.f32 0.0, %v3701
    %v3703 = vpop.f32.mrf.mxu0
    %3704 = vdwg.mxu0
    %v3705 = vadd.f32 %v3622, %v3702
    %v3706 = vld [vmem:[%s17] sm:$0x1]
    %v3708 = vlaneseq
    %v3709 = vshrl.u32 %v3708, 7
    %v3710 = vsub.s32 0, %v3709
    %v3711 = vrot.slane %v3706, %v3710
    %v3713 = vadd.f32 %v3705, %v3711
    %s3714 = sld [smem:[#allocation8 + $0x6]]
    %v3715 = vstv %s3714
    %v3716 = vmul.f32 %v3715, %v3713
    %v3717 = vxor.u32 %v3716, 2147483648
    %v3718 = vmul.f32 %v3717, 1.442695
    %v3719 = vpow.pop %v3718
    %v3720 = vadd.f32 %v3719, 1.0
    %v3721 = vrcp.pop %v3720
    %v3722 = vmul.f32 1.0, %v3721
    %v3723 = vmul.f32 %v3713, %v3722
    %v3724 = vld [vmem:[%s18] sm:$0xff]
    %v3725 = vld [vmem:[%s18 + $0x8] sm:$0xff]
    %v3726 = vld [vmem:[%s18 + $0x10] sm:$0xff]
    %v3727 = vld [vmem:[%s18 + $0x18] sm:$0xff]
    %v3728 = vld [vmem:[%s18 + $0x20] sm:$0xff]
    %v3729 = vld [vmem:[%s18 + $0x28] sm:$0xff]
    %v3730 = vld [vmem:[%s18 + $0x30] sm:$0xff]
    %v3731 = vld [vmem:[%s18 + $0x38] sm:$0xff]
    %v3732 = vld [vmem:[%s18 + $0x40] sm:$0xff]
    %v3733 = vld [vmem:[%s18 + $0x48] sm:$0xff]
    %v3734 = vld [vmem:[%s18 + $0x50] sm:$0xff]
    %v3735 = vld [vmem:[%s18 + $0x58] sm:$0xff]
    %v3736 = vld [vmem:[%s18 + $0x60] sm:$0xff]
    %v3737 = vld [vmem:[%s18 + $0x68] sm:$0xff]
    %v3738 = vld [vmem:[%s18 + $0x70] sm:$0xff]
    %v3739 = vld [vmem:[%s18 + $0x78] sm:$0xff]
    %v3740 = vld [vmem:[%s19] sm:$0x1]
    %v3742 = vlaneseq
    %v3743 = vshrl.u32 %v3742, 7
    %v3744 = vsub.s32 0, %v3743
    %v3745 = vrot.slane %v3740, %v3744
    %3747 = vmatprep.subr.mxu0 0.0
    %3748 = vmatpush1.msra.mxu0 %v3739
    %3749 = vmatprep.subr.mxu0 0.0
    %3750 = vmatpush1.msra.mxu0 %v3738
    %3751 = vmatprep.subr.mxu0 0.0
    %3752 = vmatpush1.msra.mxu0 %v3737
    %3753 = vmatprep.subr.mxu0 0.0
    %3754 = vmatpush1.msra.mxu0 %v3736
    %3755 = vmatprep.subr.mxu0 0.0
    %3756 = vmatpush1.msra.mxu0 %v3735
    %3757 = vmatprep.subr.mxu0 0.0
    %3758 = vmatpush1.msra.mxu0 %v3734
    %3759 = vmatprep.subr.mxu0 0.0
    %3760 = vmatpush1.msra.mxu0 %v3733
    %3761 = vmatprep.subr.mxu0 0.0
    %3762 = vmatpush1.msra.mxu0 %v3732
    %3763 = vmatprep.subr.mxu0 0.0
    %3764 = vmatpush1.msra.mxu0 %v3731
    %3765 = vmatprep.subr.mxu0 0.0
    %3766 = vmatpush1.msra.mxu0 %v3730
    %3767 = vmatprep.subr.mxu0 0.0
    %3768 = vmatpush1.msra.mxu0 %v3729
    %3769 = vmatprep.subr.mxu0 0.0
    %3770 = vmatpush1.msra.mxu0 %v3728
    %3771 = vmatprep.subr.mxu0 0.0
    %3772 = vmatpush1.msra.mxu0 %v3727
    %3773 = vmatprep.subr.mxu0 0.0
    %3774 = vmatpush1.msra.mxu0 %v3726
    %3775 = vmatprep.subr.mxu0 0.0
    %3776 = vmatpush1.msra.mxu0 %v3725
    %3777 = vmatprep.subr.mxu0 0.0
    %3778 = vmatpush1.msra.mxu0 %v3724
    %3779 = vmatprep.subr.mxu0 0.0
    %3780 = vmatpush2.msra.mxu0 0.0
    %3781 = vmatprep.subr.mxu0 0.0
    %3782 = vmatpush2.msra.mxu0 0.0
    %3783 = vmatprep.subr.mxu0 0.0
    %3784 = vmatpush2.msra.mxu0 0.0
    %3785 = vmatprep.subr.mxu0 0.0
    %3786 = vmatpush2.msra.mxu0 0.0
    %3787 = vmatprep.subr.mxu0 0.0
    %3788 = vmatpush2.msra.mxu0 0.0
    %3789 = vmatprep.subr.mxu0 0.0
    %3790 = vmatpush2.msra.mxu0 0.0
    %3791 = vmatprep.subr.mxu0 0.0
    %3792 = vmatpush2.msra.mxu0 0.0
    %3793 = vmatprep.subr.mxu0 0.0
    %3794 = vmatpush2.msra.mxu0 0.0
    %3795 = vmatprep.subr.mxu0 0.0
    %3796 = vmatpush2.msra.mxu0 0.0
    %3797 = vmatprep.subr.mxu0 0.0
    %3798 = vmatpush2.msra.mxu0 0.0
    %3799 = vmatprep.subr.mxu0 0.0
    %3800 = vmatpush2.msra.mxu0 0.0
    %3801 = vmatprep.subr.mxu0 0.0
    %3802 = vmatpush2.msra.mxu0 0.0
    %3803 = vmatprep.subr.mxu0 0.0
    %3804 = vmatpush2.msra.mxu0 0.0
    %3805 = vmatprep.subr.mxu0 0.0
    %3806 = vmatpush2.msra.mxu0 0.0
    %3807 = vmatprep.subr.mxu0 0.0
    %3808 = vmatpush2.msra.mxu0 0.0
    %3809 = vmatprep.subr.mxu0 0.0
    %3810 = vmatpush2.msra.mxu0 0.0
    %3811 = vmatprep.mubr.f32.mxu0 0.0
    %3812 = vmatmul.mubr.f32.gmra.mxu0 %v3723
    %v3813 = vpop.f32.mrf.mxu0
    %v3814 = vadd.f32 %v3745, %v3813
    %v3815 = vpop.f32.mrf.mxu0
    %3816 = vdwg.mxu0
    %vm3817 = vcmask 254976
    %3818 = vst.msk [vmem:[#allocation10] sm:$0x3] %vm3817, %v3814
    // Predicated region
    $region90: #{trunk_net_forward.1} parent=1 // pred_check
      _
    $region91: #{trunk_net_forward.1} parent=1 // pred_check_branch
      %3820 = sbr.rel (0) target = $region93
    $region92: #{trunk_net_forward.1} parent=1 // pred_region
      %s3822 = ssub.s32 32, 32
      %3823 = vsyncadd [#allocation6], %s3822
      %s3825 = sshll.u32 [#allocation10], 4
      %s3826 = int_to_ptr.vmem [resolvable:$true] %s3825
      %3828 = dma.vmem_to_hbm [thread:$0]  %s3826, 32, %s20, [#allocation6]
    $region93: #{trunk_net_forward.1} parent=1 // pred_fallthru
      _
    // Predicated region
    $region94: #{trunk_net_forward.1} parent=1 // pred_check
      _
    $region95: #{trunk_net_forward.1} parent=1 // pred_check_branch
      %3830 = sbr.rel (0) target = $region97
    $region96: #{trunk_net_forward.1} parent=1 // pred_region
      %3831 = dma.done [#allocation6], 32
    $region97: #{trunk_net_forward.1} parent=1 // pred_fallthru
      _
    %3832 = vsyncpa [#allocation6], 1
    %3833 = vsyncpa [#allocation7], 1
    %3834 = vsyncpa [#allocation9], 1

</llo_original>
